<compile_context>
chip_gen: v5e
topology: v5e:2x2
jax: 0.10.0
libtpu: 0.0.40
codegen_flags: <defaults>
</compile_context>

<pallas_src>
import functools
import math

import jax
import jax.numpy as jnp
import numpy as np
from jax import lax
from jax.experimental import pallas as pl
from jax.experimental.pallas import tpu as pltpu


def _round_up(n, m):
    return ((n + m - 1) // m) * m


_VMEM_LIMIT_BYTES = 48 * 1024 * 1024   # safe ceiling on v5e/v6e (128 MiB) and v7x (64 MiB)
_VMEM_TILE_BUDGET = 36 * 1024 * 1024   # budget used when picking the P tile


def _choose_tile_p(P, L, K, Cin_p, Cout_p, H, Wp):
    """Largest lane-dense P tile (multiple of 128, <= 1024) whose working set fits."""
    K3_p = _round_up(3 * K, 8)
    per_col = (6 * L                    # f32 outer-product temp + bf16 wxy (one tap live at a time)
               + 4 * (H + Wp)           # wy / wx f32 temps
               + 2 * K * Cin_p          # bf16 im2col scratch
               + 2 * 4 * Cout_p         # double-buffered f32 output tile
               + 2 * 4 * K3_p)          # double-buffered f32 coords tile
    tp = 1024
    while tp > 128 and tp * per_col > _VMEM_TILE_BUDGET:
        tp //= 2
    return min(tp, _round_up(P, 128))


# ----------------------------------------------------------------------------
# Pallas kernel: one (batch, output-position tile) per grid step.
# ----------------------------------------------------------------------------
def _mdcn_kernel(x_ref, coords_ref, w_ref, o_ref, cols_ref, *, K, Cin, H, Wp):
    # x_ref     : (1, Cin, L)      bf16, column index = h*Wp + w  (L = H*Wp)
    # coords_ref: (1, 3K_p, TP)    f32;  rows [0:K]=ys, [K:2K]=xs, [2K:3K]=mask
    # w_ref     : (Cout_p, K*Cin)  bf16, column index = k*Cin + c
    # o_ref     : (1, Cout_p, TP)  f32 output tile
    # cols_ref  : (K*Cin, TP)      bf16 VMEM scratch (modulated im2col columns)
    TP = o_ref.shape[-1]
    L = H * Wp
    x2d = x_ref[0]                                                   # (Cin, L) bf16
    h_idx = lax.broadcasted_iota(jnp.int32, (H, 1), 0).astype(jnp.float32)
    w_idx = lax.broadcasted_iota(jnp.int32, (Wp, 1), 0).astype(jnp.float32)

    # Static loop over taps; every iteration ends with a store into the scratch, so
    # temporaries' live ranges stay bounded to a single tap.
    for k in range(K):
        ys_k = coords_ref[0, k:k + 1, :]                             # (1, TP)
        xs_k = coords_ref[0, K + k:K + k + 1, :]                     # (1, TP)
        m_k = coords_ref[0, 2 * K + k:2 * K + k + 1, :]              # (1, TP)
        # Separable zero-padded bilinear weights; modulation mask folded into wy.
        wy = jnp.maximum(1.0 - jnp.abs(ys_k - h_idx), 0.0) * m_k     # (H, TP)
        wx = jnp.maximum(1.0 - jnp.abs(xs_k - w_idx), 0.0)           # (Wp, TP)
        # Fused bilinear weight map: the whole gather + modulation + spatial reduction
        # becomes ONE MXU contraction of depth H*Wp (no VPU H-reduce, no (Cin*H,TP) temp).
        wxy = (wy[:, None, :] * wx[None, :, :]).reshape(L, TP)       # (L, TP) f32
        cols = jnp.dot(x2d, wxy.astype(jnp.bfloat16),
                       preferred_element_type=jnp.float32)           # (Cin, TP) f32
        cols_ref[k * Cin:(k + 1) * Cin, :] = cols.astype(jnp.bfloat16)

    # Single fused output contraction over all taps and channels (depth K*Cin).
    o_ref[0] = jnp.dot(w_ref[...], cols_ref[...],
                       preferred_element_type=jnp.float32).astype(o_ref.dtype)


# ----------------------------------------------------------------------------
# Modulated deformable conv (v2) wrapper: coordinate precompute + padding + call.
# ----------------------------------------------------------------------------
def modulated_deform_conv2d(x, offset, mask, weight, *, stride=1, padding=0, dilation=1):
    """x: (B,Cin,H,W); offset: (B,2K,Ho,Wo) with channel 2k=dy_k, 2k+1=dx_k;
       mask: (B,K,Ho,Wo); weight: (Cout,Cin,kh,kw)."""
    B, Cin, H, W = x.shape
    Cout, Cin_w, kh, kw = weight.shape
    assert Cin_w == Cin, "only groups == 1 supported"
    K = kh * kw
    s, p, d = stride, padding, dilation
    Ho = (H + 2 * p - d * (kh - 1) - 1) // s + 1
    Wo = (W + 2 * p - d * (kw - 1) - 1) // s + 1
    P = Ho * Wo
    assert offset.shape == (B, 2 * K, Ho, Wo), "only deformable_groups == 1 supported"
    assert mask.shape == (B, K, Ho, Wo)

    # Absolute fractional sampling coordinates per (batch, tap, output position).
    off = offset.reshape(B, K, 2, Ho, Wo).astype(jnp.float32)
    dy, dx = off[:, :, 0], off[:, :, 1]
    k_idx = jnp.arange(K)
    base_y = (jnp.arange(Ho)[None, :, None] * s - p
              + (k_idx // kw)[:, None, None] * d).astype(jnp.float32)   # (K, Ho, 1)
    base_x = (jnp.arange(Wo)[None, None, :] * s - p
              + (k_idx % kw)[:, None, None] * d).astype(jnp.float32)    # (K, 1, Wo)
    ys = (base_y[None] + dy).reshape(B, K, P)
    xs = (base_x[None] + dx).reshape(B, K, P)
    m = mask.reshape(B, K, P).astype(jnp.float32)

    # TPU-friendly padding / layout.
    Cin_p = _round_up(Cin, 16)              # bf16 sublane packing
    Cout_p = _round_up(Cout, 8)             # f32 output sublane tile
    Wp = _round_up(W, 8)                    # layout-trivial (H, Wp, TP) -> (L, TP) reshape
    L = H * Wp
    TP = _choose_tile_p(P, L, K, Cin_p, Cout_p, H, Wp)
    P_p = _round_up(P, TP)
    K3_p = _round_up(3 * K, 8)

    # x as (B, Cin_p, H*Wp) in bf16: spatial dims folded into the lane axis so the
    # per-tap MXU contraction depth is H*Wp and x HBM/VMEM traffic is halved vs f32.
    xp = jnp.pad(x, ((0, 0), (0, Cin_p - Cin), (0, 0), (0, Wp - W))).astype(jnp.bfloat16)
    x_rows = xp.reshape(B, Cin_p, L)

    # ys/xs/mask merged into one (B, 3K_p, P_p) tensor: single small DMA per grid step.
    pad_p = ((0, 0), (0, 0), (0, P_p - P))
    ys = jnp.pad(ys, pad_p, constant_values=-2.0)   # out of range -> zero bilinear weight
    xs = jnp.pad(xs, pad_p, constant_values=-2.0)
    m = jnp.pad(m, pad_p)
    coords = jnp.concatenate([ys, xs, m], axis=1)                       # (B, 3K, P_p)
    coords = jnp.pad(coords, ((0, 0), (0, K3_p - 3 * K), (0, 0)))

    wp = jnp.pad(weight.astype(jnp.float32),
                 ((0, Cout_p - Cout), (0, Cin_p - Cin), (0, 0), (0, 0)))
    # (Cout_p, K*Cin_p) with column index = k*Cin_p + c; resident bf16 MXU operand.
    w_mat = jnp.transpose(wp.reshape(Cout_p, Cin_p, K), (0, 2, 1)).reshape(Cout_p, K * Cin_p)
    w_mat = w_mat.astype(jnp.bfloat16)

    kernel = functools.partial(_mdcn_kernel, K=K, Cin=Cin_p, H=H, Wp=Wp)
    grid = (B, P_p // TP)
    out = pl.pallas_call(
        kernel,
        out_shape=jax.ShapeDtypeStruct((B, Cout_p, P_p), jnp.float32),
        grid=grid,
        in_specs=[
            pl.BlockSpec((1, Cin_p, L), lambda b, t: (b, 0, 0)),   # revisited: DMA'd once per b
            pl.BlockSpec((1, K3_p, TP), lambda b, t: (b, 0, t)),
            pl.BlockSpec((Cout_p, K * Cin_p), lambda b, t: (0, 0)),
        ],
        out_specs=pl.BlockSpec((1, Cout_p, TP), lambda b, t: (b, 0, t)),
        scratch_shapes=[pltpu.VMEM((K * Cin_p, TP), jnp.bfloat16)],
        compiler_params=pltpu.CompilerParams(
            dimension_semantics=("parallel", "parallel"),
            vmem_limit_bytes=_VMEM_LIMIT_BYTES),
    )(x_rows, coords, w_mat)

    return out[:, :Cout, :P].reshape(B, Cout, Ho, Wo)


# ----------------------------------------------------------------------------
# ModulatedDeformConvPack.forward
# ----------------------------------------------------------------------------
def modulated_deform_conv_pack_forward(x, params, *, kernel_size, stride=1, padding=1,
                                       dilation=1):
    """conv_offset(x) -> chunk -> offset=cat(o1,o2), mask=sigmoid -> MDCN with weight.
    (forward() does not pass self.bias to deform_conv2d, matching the PyTorch module.)"""
    # conv_offset is an ordinary dense Conv2d: run it on the MXU via XLA's conv
    # (per perf review; far cheaper than the zero-offset deformable path).
    co = lax.conv_general_dilated(
        x.astype(jnp.float32), params["conv_offset_w"].astype(jnp.float32),
        window_strides=(stride, stride),
        padding=[(padding, padding), (padding, padding)],
        rhs_dilation=(dilation, dilation),
        dimension_numbers=("NCHW", "OIHW", "NCHW"))
    co = co + params["conv_offset_b"][None, :, None, None]

    o1, o2, m_raw = jnp.split(co, 3, axis=1)
    offset = jnp.concatenate([o1, o2], axis=1)
    mask = jax.nn.sigmoid(m_raw)
    return modulated_deform_conv2d(x, offset, mask, params["weight"],
                                   stride=stride, padding=padding, dilation=dilation)


def init_mdcn_pack_params(key, in_channels, out_channels, kernel_size,
                          deformable_groups=1, offset_init_scale=0.0):
    """Matches ModulatedDeformConvPack init (weight uniform(-stdv,stdv), conv_offset
    zeroed).  offset_init_scale>0 gives conv_offset small random weights so the
    deformable path is actually exercised in tests."""
    kh, kw = kernel_size
    n = in_channels * kh * kw
    stdv = 1.0 / math.sqrt(n)
    k_w, k_co = jax.random.split(key)
    weight = jax.random.uniform(k_w, (out_channels, in_channels, kh, kw),
                                jnp.float32, minval=-stdv, maxval=stdv)
    co_shape = (deformable_groups * 3 * kh * kw, in_channels, kh, kw)
    if offset_init_scale == 0.0:
        conv_offset_w = jnp.zeros(co_shape, jnp.float32)
    else:
        conv_offset_w = offset_init_scale * jax.random.normal(k_co, co_shape, jnp.float32)
    conv_offset_b = jnp.zeros((co_shape[0],), jnp.float32)
    bias = jnp.zeros((out_channels,), jnp.float32)          # unused by forward
    return {"weight": weight, "bias": bias,
            "conv_offset_w": conv_offset_w, "conv_offset_b": conv_offset_b}


# ----------------------------------------------------------------------------
# Pure numpy reference (modulated deform conv v2 semantics) for validation.
# ----------------------------------------------------------------------------
def _mdcn_ref(x, offset, mask, weight, stride, padding, dilation):
    x = np.asarray(x, np.float64)
    offset = np.asarray(offset, np.float64)
    mask = np.asarray(mask, np.float64)
    weight = np.asarray(weight, np.float64)
    B, Cin, H, W = x.shape
    Cout, _, kh, kw = weight.shape
    K = kh * kw
    Ho = (H + 2 * padding - dilation * (kh - 1) - 1) // stride + 1
    Wo = (W + 2 * padding - dilation * (kw - 1) - 1) // stride + 1
    off = offset.reshape(B, K, 2, Ho, Wo)
    w2 = weight.reshape(Cout, Cin * K)
    out = np.zeros((B, Cout, Ho, Wo), np.float64)
    for b in range(B):
        for ho in range(Ho):
            for wo in range(Wo):
                col = np.zeros((Cin, K), np.float64)
                for k in range(K):
                    ki, kj = k // kw, k % kw
                    y = ho * stride - padding + ki * dilation + off[b, k, 0, ho, wo]
                    xx = wo * stride - padding + kj * dilation + off[b, k, 1, ho, wo]
                    if y <= -1 or y >= H or xx <= -1 or xx >= W:
                        continue
                    y0, x0 = int(np.floor(y)), int(np.floor(xx))
                    ly, lx = y - y0, xx - x0
                    v = np.zeros((Cin,), np.float64)
                    for dyy, dxx, wgt in ((0, 0, (1 - ly) * (1 - lx)),
                                          (0, 1, (1 - ly) * lx),
                                          (1, 0, ly * (1 - lx)),
                                          (1, 1, ly * lx)):
                        yy, xq = y0 + dyy, x0 + dxx
                        if 0 <= yy < H and 0 <= xq < W:
                            v += wgt * x[b, :, yy, xq]
                    col[:, k] = v * mask[b, k, ho, wo]
                out[b, :, ho, wo] = w2 @ col.reshape(Cin * K)
    return out


def _pack_forward_ref(x, params, kernel_size, stride, padding, dilation):
    kh, kw = kernel_size
    K = kh * kw
    x = np.asarray(x, np.float64)
    B, _, H, W = x.shape
    Ho = (H + 2 * padding - dilation * (kh - 1) - 1) // stride + 1
    Wo = (W + 2 * padding - dilation * (kw - 1) - 1) // stride + 1
    zero_off = np.zeros((B, 2 * K, Ho, Wo), np.float64)
    unit_mask = np.ones((B, K, Ho, Wo), np.float64)
    co = _mdcn_ref(x, zero_off, unit_mask, params["conv_offset_w"], stride, padding, dilation)
    co = co + np.asarray(params["conv_offset_b"], np.float64)[None, :, None, None]
    o1, o2, m_raw = np.split(co, 3, axis=1)
    offset = np.concatenate([o1, o2], axis=1)
    mask = 1.0 / (1.0 + np.exp(-m_raw))
    return _mdcn_ref(x, offset, mask, params["weight"], stride, padding, dilation)


if __name__ == "__main__":
    key = jax.random.PRNGKey(0)
    k_x, k_p = jax.random.split(key)

    # ModulatedDeformConvPack(in_channels=4, out_channels=8, kernel_size=3,
    #                         stride=1, padding=1)
    B, Cin, H, W = 2, 4, 16, 16
    Cout, ksize, stride, padding, dilation = 8, (3, 3), 1, 1, 1

    x = jax.random.normal(k_x, (B, Cin, H, W), jnp.float32)
    # Module init zeroes conv_offset (degenerate: offsets=0, mask=0.5).  Use small
    # random conv_offset weights so the deformable sampling path is exercised.
    params = init_mdcn_pack_params(k_p, Cin, Cout, ksize, offset_init_scale=0.1)

    fwd = jax.jit(functools.partial(modulated_deform_conv_pack_forward,
                                    kernel_size=ksize, stride=stride,
                                    padding=padding, dilation=dilation))
    out = jax.block_until_ready(fwd(x, params))

    np_params = {k: np.asarray(v) for k, v in params.items()}
    ref = _pack_forward_ref(np.asarray(x), np_params, ksize, stride, padding, dilation)

    assert out.shape == ref.shape, (out.shape, ref.shape)
    assert np.isfinite(np.asarray(out)).all()
    err = float(np.max(np.abs(np.asarray(out, np.float64) - ref)))
    scale = float(np.max(np.abs(ref)) + 1e-6)
    assert err / scale < 5e-2, f"max abs err {err} (scale {scale})"

    print("KERNEL_OK")
</pallas_src>

<mosaic_0001>
module attributes {stable_mosaic.version = 11 : i64} {
  func.func @_mdcn_kernel(%arg0: i32, %arg1: i32, %arg2: memref<1x16x256xbf16, #tpu.memory_space<vmem>>, %arg3: memref<1x32x256xf32, #tpu.memory_space<vmem>>, %arg4: memref<8x144xbf16, #tpu.memory_space<vmem>>, %arg5: memref<1x8x256xf32, #tpu.memory_space<vmem>>, %arg6: memref<144x256xbf16, #tpu.memory_space<vmem>>) attributes {dimension_semantics = [#tpu.dimension_semantics<parallel>, #tpu.dimension_semantics<parallel>], iteration_bounds = array<i64: 2, 1>, scalar_prefetch = 0 : i64, scratch_operands = 1 : i64, tpu.core_type = #tpu.core_type<tc>, window_params = [{transform_indices = @transform_0, window_bounds = array<i64: 1, 16, 256>}, {transform_indices = @transform_1, window_bounds = array<i64: 1, 32, 256>}, {pipeline_mode = #tpu.pipeline_mode<synchronous>, transform_indices = @transform_2, window_bounds = array<i64: 8, 144>}, {transform_indices = @transform_3, window_bounds = array<i64: 1, 8, 256>}]} {
    %c0 = arith.constant 0 : index
    %c0_0 = arith.constant 0 : index
    %c0_1 = arith.constant 0 : index
    %0 = vector.load %arg2[%c0, %c0_0, %c0_1] : memref<1x16x256xbf16, #tpu.memory_space<vmem>>, vector<1x16x256xbf16>
    %1 = vector.shape_cast %0 : vector<1x16x256xbf16> to vector<16x256xbf16>
    %2 = tpu.iota {dimensions = array<i32: 0>} : vector<16x1xi32>
    %3 = arith.sitofp %2 : vector<16x1xi32> to vector<16x1xf32>
    %4 = tpu.iota {dimensions = array<i32: 0>} : vector<16x1xi32>
    %5 = arith.sitofp %4 : vector<16x1xi32> to vector<16x1xf32>
    %c0_2 = arith.constant 0 : index
    %c0_3 = arith.constant 0 : index
    %c0_4 = arith.constant 0 : index
    %6 = vector.load %arg3[%c0_2, %c0_3, %c0_4] : memref<1x32x256xf32, #tpu.memory_space<vmem>>, vector<1x1x256xf32>
    %7 = vector.shape_cast %6 : vector<1x1x256xf32> to vector<1x256xf32>
    %c0_5 = arith.constant 0 : index
    %c9 = arith.constant 9 : index
    %c0_6 = arith.constant 0 : index
    %8 = vector.load %arg3[%c0_5, %c9, %c0_6] : memref<1x32x256xf32, #tpu.memory_space<vmem>>, vector<1x1x256xf32>
    %9 = vector.shape_cast %8 : vector<1x1x256xf32> to vector<1x256xf32>
    %c0_7 = arith.constant 0 : index
    %c18 = arith.constant 18 : index
    %c0_8 = arith.constant 0 : index
    %10 = vector.load %arg3[%c0_7, %c18, %c0_8] : memref<1x32x256xf32, #tpu.memory_space<vmem>>, vector<1x1x256xf32>
    %11 = vector.shape_cast %10 : vector<1x1x256xf32> to vector<1x256xf32>
    %12 = vector.broadcast %7 : vector<1x256xf32> to vector<16x256xf32>
    %13 = vector.broadcast %3 : vector<16x1xf32> to vector<16x256xf32>
    %14 = arith.subf %12, %13 : vector<16x256xf32>
    %15 = math.absf %14 : vector<16x256xf32>
    %cst = arith.constant 1.000000e+00 : f32
    %16 = vector.broadcast %cst : f32 to vector<16x256xf32>
    %17 = arith.subf %16, %15 : vector<16x256xf32>
    %cst_9 = arith.constant 0.000000e+00 : f32
    %18 = vector.broadcast %cst_9 : f32 to vector<16x256xf32>
    %19 = arith.maximumf %17, %18 : vector<16x256xf32>
    %20 = vector.broadcast %11 : vector<1x256xf32> to vector<16x256xf32>
    %21 = arith.mulf %19, %20 : vector<16x256xf32>
    %22 = vector.broadcast %9 : vector<1x256xf32> to vector<16x256xf32>
    %23 = vector.broadcast %5 : vector<16x1xf32> to vector<16x256xf32>
    %24 = arith.subf %22, %23 : vector<16x256xf32>
    %25 = math.absf %24 : vector<16x256xf32>
    %cst_10 = arith.constant 1.000000e+00 : f32
    %26 = vector.broadcast %cst_10 : f32 to vector<16x256xf32>
    %27 = arith.subf %26, %25 : vector<16x256xf32>
    %cst_11 = arith.constant 0.000000e+00 : f32
    %28 = vector.broadcast %cst_11 : f32 to vector<16x256xf32>
    %29 = arith.maximumf %27, %28 : vector<16x256xf32>
    %30 = vector.shape_cast %21 : vector<16x256xf32> to vector<16x1x256xf32>
    %31 = vector.shape_cast %29 : vector<16x256xf32> to vector<1x16x256xf32>
    %32 = vector.broadcast %30 : vector<16x1x256xf32> to vector<16x16x256xf32>
    %33 = vector.broadcast %31 : vector<1x16x256xf32> to vector<16x16x256xf32>
    %34 = arith.mulf %32, %33 : vector<16x16x256xf32>
    %35 = vector.shape_cast %34 : vector<16x16x256xf32> to vector<256x256xf32>
    %36 = arith.truncf %35 : vector<256x256xf32> to vector<256x256xbf16>
    %cst_12 = arith.constant dense<0.000000e+00> : vector<16x256xf32>
    %37 = tpu.matmul %1, %36, %cst_12 {dimension_numbers = #tpu.dot_dimension_numbers<[1], [0], [0], [1], [0, 0, 1, 1], [], []>} : vector<16x256xbf16>, vector<256x256xbf16>, vector<16x256xf32> -> vector<16x256xf32>
    %38 = arith.truncf %37 : vector<16x256xf32> to vector<16x256xbf16>
    %c0_13 = arith.constant 0 : index
    %c0_14 = arith.constant 0 : index
    %39 = vector.load %arg6[%c0_13, %c0_14] : memref<144x256xbf16, #tpu.memory_space<vmem>>, vector<16x256xbf16>
    tpu.vector_store %arg6[%c0_13, %c0_14], %38 {strides = array<i32>} : memref<144x256xbf16, #tpu.memory_space<vmem>>, vector<16x256xbf16>,
    %c0_15 = arith.constant 0 : index
    %c1 = arith.constant 1 : index
    %c0_16 = arith.constant 0 : index
    %40 = vector.load %arg3[%c0_15, %c1, %c0_16] : memref<1x32x256xf32, #tpu.memory_space<vmem>>, vector<1x1x256xf32>
    %41 = vector.shape_cast %40 : vector<1x1x256xf32> to vector<1x256xf32>
    %c0_17 = arith.constant 0 : index
    %c10 = arith.constant 10 : index
    %c0_18 = arith.constant 0 : index
    %42 = vector.load %arg3[%c0_17, %c10, %c0_18] : memref<1x32x256xf32, #tpu.memory_space<vmem>>, vector<1x1x256xf32>
    %43 = vector.shape_cast %42 : vector<1x1x256xf32> to vector<1x256xf32>
    %c0_19 = arith.constant 0 : index
    %c19 = arith.constant 19 : index
    %c0_20 = arith.constant 0 : index
    %44 = vector.load %arg3[%c0_19, %c19, %c0_20] : memref<1x32x256xf32, #tpu.memory_space<vmem>>, vector<1x1x256xf32>
    %45 = vector.shape_cast %44 : vector<1x1x256xf32> to vector<1x256xf32>
    %46 = vector.broadcast %41 : vector<1x256xf32> to vector<16x256xf32>
    %47 = vector.broadcast %3 : vector<16x1xf32> to vector<16x256xf32>
    %48 = arith.subf %46, %47 : vector<16x256xf32>
    %49 = math.absf %48 : vector<16x256xf32>
    %cst_21 = arith.constant 1.000000e+00 : f32
    %50 = vector.broadcast %cst_21 : f32 to vector<16x256xf32>
    %51 = arith.subf %50, %49 : vector<16x256xf32>
    %cst_22 = arith.constant 0.000000e+00 : f32
    %52 = vector.broadcast %cst_22 : f32 to vector<16x256xf32>
    %53 = arith.maximumf %51, %52 : vector<16x256xf32>
    %54 = vector.broadcast %45 : vector<1x256xf32> to vector<16x256xf32>
    %55 = arith.mulf %53, %54 : vector<16x256xf32>
    %56 = vector.broadcast %43 : vector<1x256xf32> to vector<16x256xf32>
    %57 = vector.broadcast %5 : vector<16x1xf32> to vector<16x256xf32>
    %58 = arith.subf %56, %57 : vector<16x256xf32>
    %59 = math.absf %58 : vector<16x256xf32>
    %cst_23 = arith.constant 1.000000e+00 : f32
    %60 = vector.broadcast %cst_23 : f32 to vector<16x256xf32>
    %61 = arith.subf %60, %59 : vector<16x256xf32>
    %cst_24 = arith.constant 0.000000e+00 : f32
    %62 = vector.broadcast %cst_24 : f32 to vector<16x256xf32>
    %63 = arith.maximumf %61, %62 : vector<16x256xf32>
    %64 = vector.shape_cast %55 : vector<16x256xf32> to vector<16x1x256xf32>
    %65 = vector.shape_cast %63 : vector<16x256xf32> to vector<1x16x256xf32>
    %66 = vector.broadcast %64 : vector<16x1x256xf32> to vector<16x16x256xf32>
    %67 = vector.broadcast %65 : vector<1x16x256xf32> to vector<16x16x256xf32>
    %68 = arith.mulf %66, %67 : vector<16x16x256xf32>
    %69 = vector.shape_cast %68 : vector<16x16x256xf32> to vector<256x256xf32>
    %70 = arith.truncf %69 : vector<256x256xf32> to vector<256x256xbf16>
    %cst_25 = arith.constant dense<0.000000e+00> : vector<16x256xf32>
    %71 = tpu.matmul %1, %70, %cst_25 {dimension_numbers = #tpu.dot_dimension_numbers<[1], [0], [0], [1], [0, 0, 1, 1], [], []>} : vector<16x256xbf16>, vector<256x256xbf16>, vector<16x256xf32> -> vector<16x256xf32>
    %72 = arith.truncf %71 : vector<16x256xf32> to vector<16x256xbf16>
    %c16 = arith.constant 16 : index
    %c0_26 = arith.constant 0 : index
    %73 = vector.load %arg6[%c16, %c0_26] : memref<144x256xbf16, #tpu.memory_space<vmem>>, vector<16x256xbf16>
    tpu.vector_store %arg6[%c16, %c0_26], %72 {strides = array<i32>} : memref<144x256xbf16, #tpu.memory_space<vmem>>, vector<16x256xbf16>,
    %c0_27 = arith.constant 0 : index
    %c2 = arith.constant 2 : index
    %c0_28 = arith.constant 0 : index
    %74 = vector.load %arg3[%c0_27, %c2, %c0_28] : memref<1x32x256xf32, #tpu.memory_space<vmem>>, vector<1x1x256xf32>
    %75 = vector.shape_cast %74 : vector<1x1x256xf32> to vector<1x256xf32>
    %c0_29 = arith.constant 0 : index
    %c11 = arith.constant 11 : index
    %c0_30 = arith.constant 0 : index
    %76 = vector.load %arg3[%c0_29, %c11, %c0_30] : memref<1x32x256xf32, #tpu.memory_space<vmem>>, vector<1x1x256xf32>
    %77 = vector.shape_cast %76 : vector<1x1x256xf32> to vector<1x256xf32>
    %c0_31 = arith.constant 0 : index
    %c20 = arith.constant 20 : index
    %c0_32 = arith.constant 0 : index
    %78 = vector.load %arg3[%c0_31, %c20, %c0_32] : memref<1x32x256xf32, #tpu.memory_space<vmem>>, vector<1x1x256xf32>
    %79 = vector.shape_cast %78 : vector<1x1x256xf32> to vector<1x256xf32>
    %80 = vector.broadcast %75 : vector<1x256xf32> to vector<16x256xf32>
    %81 = vector.broadcast %3 : vector<16x1xf32> to vector<16x256xf32>
    %82 = arith.subf %80, %81 : vector<16x256xf32>
    %83 = math.absf %82 : vector<16x256xf32>
    %cst_33 = arith.constant 1.000000e+00 : f32
    %84 = vector.broadcast %cst_33 : f32 to vector<16x256xf32>
    %85 = arith.subf %84, %83 : vector<16x256xf32>
    %cst_34 = arith.constant 0.000000e+00 : f32
    %86 = vector.broadcast %cst_34 : f32 to vector<16x256xf32>
    %87 = arith.maximumf %85, %86 : vector<16x256xf32>
    %88 = vector.broadcast %79 : vector<1x256xf32> to vector<16x256xf32>
    %89 = arith.mulf %87, %88 : vector<16x256xf32>
    %90 = vector.broadcast %77 : vector<1x256xf32> to vector<16x256xf32>
    %91 = vector.broadcast %5 : vector<16x1xf32> to vector<16x256xf32>
    %92 = arith.subf %90, %91 : vector<16x256xf32>
    %93 = math.absf %92 : vector<16x256xf32>
    %cst_35 = arith.constant 1.000000e+00 : f32
    %94 = vector.broadcast %cst_35 : f32 to vector<16x256xf32>
    %95 = arith.subf %94, %93 : vector<16x256xf32>
    %cst_36 = arith.constant 0.000000e+00 : f32
    %96 = vector.broadcast %cst_36 : f32 to vector<16x256xf32>
    %97 = arith.maximumf %95, %96 : vector<16x256xf32>
    %98 = vector.shape_cast %89 : vector<16x256xf32> to vector<16x1x256xf32>
    %99 = vector.shape_cast %97 : vector<16x256xf32> to vector<1x16x256xf32>
    %100 = vector.broadcast %98 : vector<16x1x256xf32> to vector<16x16x256xf32>
    %101 = vector.broadcast %99 : vector<1x16x256xf32> to vector<16x16x256xf32>
    %102 = arith.mulf %100, %101 : vector<16x16x256xf32>
    %103 = vector.shape_cast %102 : vector<16x16x256xf32> to vector<256x256xf32>
    %104 = arith.truncf %103 : vector<256x256xf32> to vector<256x256xbf16>
    %cst_37 = arith.constant dense<0.000000e+00> : vector<16x256xf32>
    %105 = tpu.matmul %1, %104, %cst_37 {dimension_numbers = #tpu.dot_dimension_numbers<[1], [0], [0], [1], [0, 0, 1, 1], [], []>} : vector<16x256xbf16>, vector<256x256xbf16>, vector<16x256xf32> -> vector<16x256xf32>
    %106 = arith.truncf %105 : vector<16x256xf32> to vector<16x256xbf16>
    %c32 = arith.constant 32 : index
    %c0_38 = arith.constant 0 : index
    %107 = vector.load %arg6[%c32, %c0_38] : memref<144x256xbf16, #tpu.memory_space<vmem>>, vector<16x256xbf16>
    tpu.vector_store %arg6[%c32, %c0_38], %106 {strides = array<i32>} : memref<144x256xbf16, #tpu.memory_space<vmem>>, vector<16x256xbf16>,
    %c0_39 = arith.constant 0 : index
    %c3 = arith.constant 3 : index
    %c0_40 = arith.constant 0 : index
    %108 = vector.load %arg3[%c0_39, %c3, %c0_40] : memref<1x32x256xf32, #tpu.memory_space<vmem>>, vector<1x1x256xf32>
    %109 = vector.shape_cast %108 : vector<1x1x256xf32> to vector<1x256xf32>
    %c0_41 = arith.constant 0 : index
    %c12 = arith.constant 12 : index
    %c0_42 = arith.constant 0 : index
    %110 = vector.load %arg3[%c0_41, %c12, %c0_42] : memref<1x32x256xf32, #tpu.memory_space<vmem>>, vector<1x1x256xf32>
    %111 = vector.shape_cast %110 : vector<1x1x256xf32> to vector<1x256xf32>
    %c0_43 = arith.constant 0 : index
    %c21 = arith.constant 21 : index
    %c0_44 = arith.constant 0 : index
    %112 = vector.load %arg3[%c0_43, %c21, %c0_44] : memref<1x32x256xf32, #tpu.memory_space<vmem>>, vector<1x1x256xf32>
    %113 = vector.shape_cast %112 : vector<1x1x256xf32> to vector<1x256xf32>
    %114 = vector.broadcast %109 : vector<1x256xf32> to vector<16x256xf32>
    %115 = vector.broadcast %3 : vector<16x1xf32> to vector<16x256xf32>
    %116 = arith.subf %114, %115 : vector<16x256xf32>
    %117 = math.absf %116 : vector<16x256xf32>
    %cst_45 = arith.constant 1.000000e+00 : f32
    %118 = vector.broadcast %cst_45 : f32 to vector<16x256xf32>
    %119 = arith.subf %118, %117 : vector<16x256xf32>
    %cst_46 = arith.constant 0.000000e+00 : f32
    %120 = vector.broadcast %cst_46 : f32 to vector<16x256xf32>
    %121 = arith.maximumf %119, %120 : vector<16x256xf32>
    %122 = vector.broadcast %113 : vector<1x256xf32> to vector<16x256xf32>
    %123 = arith.mulf %121, %122 : vector<16x256xf32>
    %124 = vector.broadcast %111 : vector<1x256xf32> to vector<16x256xf32>
    %125 = vector.broadcast %5 : vector<16x1xf32> to vector<16x256xf32>
    %126 = arith.subf %124, %125 : vector<16x256xf32>
    %127 = math.absf %126 : vector<16x256xf32>
    %cst_47 = arith.constant 1.000000e+00 : f32
    %128 = vector.broadcast %cst_47 : f32 to vector<16x256xf32>
    %129 = arith.subf %128, %127 : vector<16x256xf32>
    %cst_48 = arith.constant 0.000000e+00 : f32
    %130 = vector.broadcast %cst_48 : f32 to vector<16x256xf32>
    %131 = arith.maximumf %129, %130 : vector<16x256xf32>
    %132 = vector.shape_cast %123 : vector<16x256xf32> to vector<16x1x256xf32>
    %133 = vector.shape_cast %131 : vector<16x256xf32> to vector<1x16x256xf32>
    %134 = vector.broadcast %132 : vector<16x1x256xf32> to vector<16x16x256xf32>
    %135 = vector.broadcast %133 : vector<1x16x256xf32> to vector<16x16x256xf32>
    %136 = arith.mulf %134, %135 : vector<16x16x256xf32>
    %137 = vector.shape_cast %136 : vector<16x16x256xf32> to vector<256x256xf32>
    %138 = arith.truncf %137 : vector<256x256xf32> to vector<256x256xbf16>
    %cst_49 = arith.constant dense<0.000000e+00> : vector<16x256xf32>
    %139 = tpu.matmul %1, %138, %cst_49 {dimension_numbers = #tpu.dot_dimension_numbers<[1], [0], [0], [1], [0, 0, 1, 1], [], []>} : vector<16x256xbf16>, vector<256x256xbf16>, vector<16x256xf32> -> vector<16x256xf32>
    %140 = arith.truncf %139 : vector<16x256xf32> to vector<16x256xbf16>
    %c48 = arith.constant 48 : index
    %c0_50 = arith.constant 0 : index
    %141 = vector.load %arg6[%c48, %c0_50] : memref<144x256xbf16, #tpu.memory_space<vmem>>, vector<16x256xbf16>
    tpu.vector_store %arg6[%c48, %c0_50], %140 {strides = array<i32>} : memref<144x256xbf16, #tpu.memory_space<vmem>>, vector<16x256xbf16>,
    %c0_51 = arith.constant 0 : index
    %c4 = arith.constant 4 : index
    %c0_52 = arith.constant 0 : index
    %142 = vector.load %arg3[%c0_51, %c4, %c0_52] : memref<1x32x256xf32, #tpu.memory_space<vmem>>, vector<1x1x256xf32>
    %143 = vector.shape_cast %142 : vector<1x1x256xf32> to vector<1x256xf32>
    %c0_53 = arith.constant 0 : index
    %c13 = arith.constant 13 : index
    %c0_54 = arith.constant 0 : index
    %144 = vector.load %arg3[%c0_53, %c13, %c0_54] : memref<1x32x256xf32, #tpu.memory_space<vmem>>, vector<1x1x256xf32>
    %145 = vector.shape_cast %144 : vector<1x1x256xf32> to vector<1x256xf32>
    %c0_55 = arith.constant 0 : index
    %c22 = arith.constant 22 : index
    %c0_56 = arith.constant 0 : index
    %146 = vector.load %arg3[%c0_55, %c22, %c0_56] : memref<1x32x256xf32, #tpu.memory_space<vmem>>, vector<1x1x256xf32>
    %147 = vector.shape_cast %146 : vector<1x1x256xf32> to vector<1x256xf32>
    %148 = vector.broadcast %143 : vector<1x256xf32> to vector<16x256xf32>
    %149 = vector.broadcast %3 : vector<16x1xf32> to vector<16x256xf32>
    %150 = arith.subf %148, %149 : vector<16x256xf32>
    %151 = math.absf %150 : vector<16x256xf32>
    %cst_57 = arith.constant 1.000000e+00 : f32
    %152 = vector.broadcast %cst_57 : f32 to vector<16x256xf32>
    %153 = arith.subf %152, %151 : vector<16x256xf32>
    %cst_58 = arith.constant 0.000000e+00 : f32
    %154 = vector.broadcast %cst_58 : f32 to vector<16x256xf32>
    %155 = arith.maximumf %153, %154 : vector<16x256xf32>
    %156 = vector.broadcast %147 : vector<1x256xf32> to vector<16x256xf32>
    %157 = arith.mulf %155, %156 : vector<16x256xf32>
    %158 = vector.broadcast %145 : vector<1x256xf32> to vector<16x256xf32>
    %159 = vector.broadcast %5 : vector<16x1xf32> to vector<16x256xf32>
    %160 = arith.subf %158, %159 : vector<16x256xf32>
    %161 = math.absf %160 : vector<16x256xf32>
    %cst_59 = arith.constant 1.000000e+00 : f32
    %162 = vector.broadcast %cst_59 : f32 to vector<16x256xf32>
    %163 = arith.subf %162, %161 : vector<16x256xf32>
    %cst_60 = arith.constant 0.000000e+00 : f32
    %164 = vector.broadcast %cst_60 : f32 to vector<16x256xf32>
    %165 = arith.maximumf %163, %164 : vector<16x256xf32>
    %166 = vector.shape_cast %157 : vector<16x256xf32> to vector<16x1x256xf32>
    %167 = vector.shape_cast %165 : vector<16x256xf32> to vector<1x16x256xf32>
    %168 = vector.broadcast %166 : vector<16x1x256xf32> to vector<16x16x256xf32>
    %169 = vector.broadcast %167 : vector<1x16x256xf32> to vector<16x16x256xf32>
    %170 = arith.mulf %168, %169 : vector<16x16x256xf32>
    %171 = vector.shape_cast %170 : vector<16x16x256xf32> to vector<256x256xf32>
    %172 = arith.truncf %171 : vector<256x256xf32> to vector<256x256xbf16>
    %cst_61 = arith.constant dense<0.000000e+00> : vector<16x256xf32>
    %173 = tpu.matmul %1, %172, %cst_61 {dimension_numbers = #tpu.dot_dimension_numbers<[1], [0], [0], [1], [0, 0, 1, 1], [], []>} : vector<16x256xbf16>, vector<256x256xbf16>, vector<16x256xf32> -> vector<16x256xf32>
    %174 = arith.truncf %173 : vector<16x256xf32> to vector<16x256xbf16>
    %c64 = arith.constant 64 : index
    %c0_62 = arith.constant 0 : index
    %175 = vector.load %arg6[%c64, %c0_62] : memref<144x256xbf16, #tpu.memory_space<vmem>>, vector<16x256xbf16>
    tpu.vector_store %arg6[%c64, %c0_62], %174 {strides = array<i32>} : memref<144x256xbf16, #tpu.memory_space<vmem>>, vector<16x256xbf16>,
    %c0_63 = arith.constant 0 : index
    %c5 = arith.constant 5 : index
    %c0_64 = arith.constant 0 : index
    %176 = vector.load %arg3[%c0_63, %c5, %c0_64] : memref<1x32x256xf32, #tpu.memory_space<vmem>>, vector<1x1x256xf32>
    %177 = vector.shape_cast %176 : vector<1x1x256xf32> to vector<1x256xf32>
    %c0_65 = arith.constant 0 : index
    %c14 = arith.constant 14 : index
    %c0_66 = arith.constant 0 : index
    %178 = vector.load %arg3[%c0_65, %c14, %c0_66] : memref<1x32x256xf32, #tpu.memory_space<vmem>>, vector<1x1x256xf32>
    %179 = vector.shape_cast %178 : vector<1x1x256xf32> to vector<1x256xf32>
    %c0_67 = arith.constant 0 : index
    %c23 = arith.constant 23 : index
    %c0_68 = arith.constant 0 : index
    %180 = vector.load %arg3[%c0_67, %c23, %c0_68] : memref<1x32x256xf32, #tpu.memory_space<vmem>>, vector<1x1x256xf32>
    %181 = vector.shape_cast %180 : vector<1x1x256xf32> to vector<1x256xf32>
    %182 = vector.broadcast %177 : vector<1x256xf32> to vector<16x256xf32>
    %183 = vector.broadcast %3 : vector<16x1xf32> to vector<16x256xf32>
    %184 = arith.subf %182, %183 : vector<16x256xf32>
    %185 = math.absf %184 : vector<16x256xf32>
    %cst_69 = arith.constant 1.000000e+00 : f32
    %186 = vector.broadcast %cst_69 : f32 to vector<16x256xf32>
    %187 = arith.subf %186, %185 : vector<16x256xf32>
    %cst_70 = arith.constant 0.000000e+00 : f32
    %188 = vector.broadcast %cst_70 : f32 to vector<16x256xf32>
    %189 = arith.maximumf %187, %188 : vector<16x256xf32>
    %190 = vector.broadcast %181 : vector<1x256xf32> to vector<16x256xf32>
    %191 = arith.mulf %189, %190 : vector<16x256xf32>
    %192 = vector.broadcast %179 : vector<1x256xf32> to vector<16x256xf32>
    %193 = vector.broadcast %5 : vector<16x1xf32> to vector<16x256xf32>
    %194 = arith.subf %192, %193 : vector<16x256xf32>
    %195 = math.absf %194 : vector<16x256xf32>
    %cst_71 = arith.constant 1.000000e+00 : f32
    %196 = vector.broadcast %cst_71 : f32 to vector<16x256xf32>
    %197 = arith.subf %196, %195 : vector<16x256xf32>
    %cst_72 = arith.constant 0.000000e+00 : f32
    %198 = vector.broadcast %cst_72 : f32 to vector<16x256xf32>
    %199 = arith.maximumf %197, %198 : vector<16x256xf32>
    %200 = vector.shape_cast %191 : vector<16x256xf32> to vector<16x1x256xf32>
    %201 = vector.shape_cast %199 : vector<16x256xf32> to vector<1x16x256xf32>
    %202 = vector.broadcast %200 : vector<16x1x256xf32> to vector<16x16x256xf32>
    %203 = vector.broadcast %201 : vector<1x16x256xf32> to vector<16x16x256xf32>
    %204 = arith.mulf %202, %203 : vector<16x16x256xf32>
    %205 = vector.shape_cast %204 : vector<16x16x256xf32> to vector<256x256xf32>
    %206 = arith.truncf %205 : vector<256x256xf32> to vector<256x256xbf16>
    %cst_73 = arith.constant dense<0.000000e+00> : vector<16x256xf32>
    %207 = tpu.matmul %1, %206, %cst_73 {dimension_numbers = #tpu.dot_dimension_numbers<[1], [0], [0], [1], [0, 0, 1, 1], [], []>} : vector<16x256xbf16>, vector<256x256xbf16>, vector<16x256xf32> -> vector<16x256xf32>
    %208 = arith.truncf %207 : vector<16x256xf32> to vector<16x256xbf16>
    %c80 = arith.constant 80 : index
    %c0_74 = arith.constant 0 : index
    %209 = vector.load %arg6[%c80, %c0_74] : memref<144x256xbf16, #tpu.memory_space<vmem>>, vector<16x256xbf16>
    tpu.vector_store %arg6[%c80, %c0_74], %208 {strides = array<i32>} : memref<144x256xbf16, #tpu.memory_space<vmem>>, vector<16x256xbf16>,
    %c0_75 = arith.constant 0 : index
    %c6 = arith.constant 6 : index
    %c0_76 = arith.constant 0 : index
    %210 = vector.load %arg3[%c0_75, %c6, %c0_76] : memref<1x32x256xf32, #tpu.memory_space<vmem>>, vector<1x1x256xf32>
    %211 = vector.shape_cast %210 : vector<1x1x256xf32> to vector<1x256xf32>
    %c0_77 = arith.constant 0 : index
    %c15 = arith.constant 15 : index
    %c0_78 = arith.constant 0 : index
    %212 = vector.load %arg3[%c0_77, %c15, %c0_78] : memref<1x32x256xf32, #tpu.memory_space<vmem>>, vector<1x1x256xf32>
    %213 = vector.shape_cast %212 : vector<1x1x256xf32> to vector<1x256xf32>
    %c0_79 = arith.constant 0 : index
    %c24 = arith.constant 24 : index
    %c0_80 = arith.constant 0 : index
    %214 = vector.load %arg3[%c0_79, %c24, %c0_80] : memref<1x32x256xf32, #tpu.memory_space<vmem>>, vector<1x1x256xf32>
    %215 = vector.shape_cast %214 : vector<1x1x256xf32> to vector<1x256xf32>
    %216 = vector.broadcast %211 : vector<1x256xf32> to vector<16x256xf32>
    %217 = vector.broadcast %3 : vector<16x1xf32> to vector<16x256xf32>
    %218 = arith.subf %216, %217 : vector<16x256xf32>
    %219 = math.absf %218 : vector<16x256xf32>
    %cst_81 = arith.constant 1.000000e+00 : f32
    %220 = vector.broadcast %cst_81 : f32 to vector<16x256xf32>
    %221 = arith.subf %220, %219 : vector<16x256xf32>
    %cst_82 = arith.constant 0.000000e+00 : f32
    %222 = vector.broadcast %cst_82 : f32 to vector<16x256xf32>
    %223 = arith.maximumf %221, %222 : vector<16x256xf32>
    %224 = vector.broadcast %215 : vector<1x256xf32> to vector<16x256xf32>
    %225 = arith.mulf %223, %224 : vector<16x256xf32>
    %226 = vector.broadcast %213 : vector<1x256xf32> to vector<16x256xf32>
    %227 = vector.broadcast %5 : vector<16x1xf32> to vector<16x256xf32>
    %228 = arith.subf %226, %227 : vector<16x256xf32>
    %229 = math.absf %228 : vector<16x256xf32>
    %cst_83 = arith.constant 1.000000e+00 : f32
    %230 = vector.broadcast %cst_83 : f32 to vector<16x256xf32>
    %231 = arith.subf %230, %229 : vector<16x256xf32>
    %cst_84 = arith.constant 0.000000e+00 : f32
    %232 = vector.broadcast %cst_84 : f32 to vector<16x256xf32>
    %233 = arith.maximumf %231, %232 : vector<16x256xf32>
    %234 = vector.shape_cast %225 : vector<16x256xf32> to vector<16x1x256xf32>
    %235 = vector.shape_cast %233 : vector<16x256xf32> to vector<1x16x256xf32>
    %236 = vector.broadcast %234 : vector<16x1x256xf32> to vector<16x16x256xf32>
    %237 = vector.broadcast %235 : vector<1x16x256xf32> to vector<16x16x256xf32>
    %238 = arith.mulf %236, %237 : vector<16x16x256xf32>
    %239 = vector.shape_cast %238 : vector<16x16x256xf32> to vector<256x256xf32>
    %240 = arith.truncf %239 : vector<256x256xf32> to vector<256x256xbf16>
    %cst_85 = arith.constant dense<0.000000e+00> : vector<16x256xf32>
    %241 = tpu.matmul %1, %240, %cst_85 {dimension_numbers = #tpu.dot_dimension_numbers<[1], [0], [0], [1], [0, 0, 1, 1], [], []>} : vector<16x256xbf16>, vector<256x256xbf16>, vector<16x256xf32> -> vector<16x256xf32>
    %242 = arith.truncf %241 : vector<16x256xf32> to vector<16x256xbf16>
    %c96 = arith.constant 96 : index
    %c0_86 = arith.constant 0 : index
    %243 = vector.load %arg6[%c96, %c0_86] : memref<144x256xbf16, #tpu.memory_space<vmem>>, vector<16x256xbf16>
    tpu.vector_store %arg6[%c96, %c0_86], %242 {strides = array<i32>} : memref<144x256xbf16, #tpu.memory_space<vmem>>, vector<16x256xbf16>,
    %c0_87 = arith.constant 0 : index
    %c7 = arith.constant 7 : index
    %c0_88 = arith.constant 0 : index
    %244 = vector.load %arg3[%c0_87, %c7, %c0_88] : memref<1x32x256xf32, #tpu.memory_space<vmem>>, vector<1x1x256xf32>
    %245 = vector.shape_cast %244 : vector<1x1x256xf32> to vector<1x256xf32>
    %c0_89 = arith.constant 0 : index
    %c16_90 = arith.constant 16 : index
    %c0_91 = arith.constant 0 : index
    %246 = vector.load %arg3[%c0_89, %c16_90, %c0_91] : memref<1x32x256xf32, #tpu.memory_space<vmem>>, vector<1x1x256xf32>
    %247 = vector.shape_cast %246 : vector<1x1x256xf32> to vector<1x256xf32>
    %c0_92 = arith.constant 0 : index
    %c25 = arith.constant 25 : index
    %c0_93 = arith.constant 0 : index
    %248 = vector.load %arg3[%c0_92, %c25, %c0_93] : memref<1x32x256xf32, #tpu.memory_space<vmem>>, vector<1x1x256xf32>
    %249 = vector.shape_cast %248 : vector<1x1x256xf32> to vector<1x256xf32>
    %250 = vector.broadcast %245 : vector<1x256xf32> to vector<16x256xf32>
    %251 = vector.broadcast %3 : vector<16x1xf32> to vector<16x256xf32>
    %252 = arith.subf %250, %251 : vector<16x256xf32>
    %253 = math.absf %252 : vector<16x256xf32>
    %cst_94 = arith.constant 1.000000e+00 : f32
    %254 = vector.broadcast %cst_94 : f32 to vector<16x256xf32>
    %255 = arith.subf %254, %253 : vector<16x256xf32>
    %cst_95 = arith.constant 0.000000e+00 : f32
    %256 = vector.broadcast %cst_95 : f32 to vector<16x256xf32>
    %257 = arith.maximumf %255, %256 : vector<16x256xf32>
    %258 = vector.broadcast %249 : vector<1x256xf32> to vector<16x256xf32>
    %259 = arith.mulf %257, %258 : vector<16x256xf32>
    %260 = vector.broadcast %247 : vector<1x256xf32> to vector<16x256xf32>
    %261 = vector.broadcast %5 : vector<16x1xf32> to vector<16x256xf32>
    %262 = arith.subf %260, %261 : vector<16x256xf32>
    %263 = math.absf %262 : vector<16x256xf32>
    %cst_96 = arith.constant 1.000000e+00 : f32
    %264 = vector.broadcast %cst_96 : f32 to vector<16x256xf32>
    %265 = arith.subf %264, %263 : vector<16x256xf32>
    %cst_97 = arith.constant 0.000000e+00 : f32
    %266 = vector.broadcast %cst_97 : f32 to vector<16x256xf32>
    %267 = arith.maximumf %265, %266 : vector<16x256xf32>
    %268 = vector.shape_cast %259 : vector<16x256xf32> to vector<16x1x256xf32>
    %269 = vector.shape_cast %267 : vector<16x256xf32> to vector<1x16x256xf32>
    %270 = vector.broadcast %268 : vector<16x1x256xf32> to vector<16x16x256xf32>
    %271 = vector.broadcast %269 : vector<1x16x256xf32> to vector<16x16x256xf32>
    %272 = arith.mulf %270, %271 : vector<16x16x256xf32>
    %273 = vector.shape_cast %272 : vector<16x16x256xf32> to vector<256x256xf32>
    %274 = arith.truncf %273 : vector<256x256xf32> to vector<256x256xbf16>
    %cst_98 = arith.constant dense<0.000000e+00> : vector<16x256xf32>
    %275 = tpu.matmul %1, %274, %cst_98 {dimension_numbers = #tpu.dot_dimension_numbers<[1], [0], [0], [1], [0, 0, 1, 1], [], []>} : vector<16x256xbf16>, vector<256x256xbf16>, vector<16x256xf32> -> vector<16x256xf32>
    %276 = arith.truncf %275 : vector<16x256xf32> to vector<16x256xbf16>
    %c112 = arith.constant 112 : index
    %c0_99 = arith.constant 0 : index
    %277 = vector.load %arg6[%c112, %c0_99] : memref<144x256xbf16, #tpu.memory_space<vmem>>, vector<16x256xbf16>
    tpu.vector_store %arg6[%c112, %c0_99], %276 {strides = array<i32>} : memref<144x256xbf16, #tpu.memory_space<vmem>>, vector<16x256xbf16>,
    %c0_100 = arith.constant 0 : index
    %c8 = arith.constant 8 : index
    %c0_101 = arith.constant 0 : index
    %278 = vector.load %arg3[%c0_100, %c8, %c0_101] : memref<1x32x256xf32, #tpu.memory_space<vmem>>, vector<1x1x256xf32>
    %279 = vector.shape_cast %278 : vector<1x1x256xf32> to vector<1x256xf32>
    %c0_102 = arith.constant 0 : index
    %c17 = arith.constant 17 : index
    %c0_103 = arith.constant 0 : index
    %280 = vector.load %arg3[%c0_102, %c17, %c0_103] : memref<1x32x256xf32, #tpu.memory_space<vmem>>, vector<1x1x256xf32>
    %281 = vector.shape_cast %280 : vector<1x1x256xf32> to vector<1x256xf32>
    %c0_104 = arith.constant 0 : index
    %c26 = arith.constant 26 : index
    %c0_105 = arith.constant 0 : index
    %282 = vector.load %arg3[%c0_104, %c26, %c0_105] : memref<1x32x256xf32, #tpu.memory_space<vmem>>, vector<1x1x256xf32>
    %283 = vector.shape_cast %282 : vector<1x1x256xf32> to vector<1x256xf32>
    %284 = vector.broadcast %279 : vector<1x256xf32> to vector<16x256xf32>
    %285 = vector.broadcast %3 : vector<16x1xf32> to vector<16x256xf32>
    %286 = arith.subf %284, %285 : vector<16x256xf32>
    %287 = math.absf %286 : vector<16x256xf32>
    %cst_106 = arith.constant 1.000000e+00 : f32
    %288 = vector.broadcast %cst_106 : f32 to vector<16x256xf32>
    %289 = arith.subf %288, %287 : vector<16x256xf32>
    %cst_107 = arith.constant 0.000000e+00 : f32
    %290 = vector.broadcast %cst_107 : f32 to vector<16x256xf32>
    %291 = arith.maximumf %289, %290 : vector<16x256xf32>
    %292 = vector.broadcast %283 : vector<1x256xf32> to vector<16x256xf32>
    %293 = arith.mulf %291, %292 : vector<16x256xf32>
    %294 = vector.broadcast %281 : vector<1x256xf32> to vector<16x256xf32>
    %295 = vector.broadcast %5 : vector<16x1xf32> to vector<16x256xf32>
    %296 = arith.subf %294, %295 : vector<16x256xf32>
    %297 = math.absf %296 : vector<16x256xf32>
    %cst_108 = arith.constant 1.000000e+00 : f32
    %298 = vector.broadcast %cst_108 : f32 to vector<16x256xf32>
    %299 = arith.subf %298, %297 : vector<16x256xf32>
    %cst_109 = arith.constant 0.000000e+00 : f32
    %300 = vector.broadcast %cst_109 : f32 to vector<16x256xf32>
    %301 = arith.maximumf %299, %300 : vector<16x256xf32>
    %302 = vector.shape_cast %293 : vector<16x256xf32> to vector<16x1x256xf32>
    %303 = vector.shape_cast %301 : vector<16x256xf32> to vector<1x16x256xf32>
    %304 = vector.broadcast %302 : vector<16x1x256xf32> to vector<16x16x256xf32>
    %305 = vector.broadcast %303 : vector<1x16x256xf32> to vector<16x16x256xf32>
    %306 = arith.mulf %304, %305 : vector<16x16x256xf32>
    %307 = vector.shape_cast %306 : vector<16x16x256xf32> to vector<256x256xf32>
    %308 = arith.truncf %307 : vector<256x256xf32> to vector<256x256xbf16>
    %cst_110 = arith.constant dense<0.000000e+00> : vector<16x256xf32>
    %309 = tpu.matmul %1, %308, %cst_110 {dimension_numbers = #tpu.dot_dimension_numbers<[1], [0], [0], [1], [0, 0, 1, 1], [], []>} : vector<16x256xbf16>, vector<256x256xbf16>, vector<16x256xf32> -> vector<16x256xf32>
    %310 = arith.truncf %309 : vector<16x256xf32> to vector<16x256xbf16>
    %c128 = arith.constant 128 : index
    %c0_111 = arith.constant 0 : index
    %311 = vector.load %arg6[%c128, %c0_111] : memref<144x256xbf16, #tpu.memory_space<vmem>>, vector<16x256xbf16>
    tpu.vector_store %arg6[%c128, %c0_111], %310 {strides = array<i32>} : memref<144x256xbf16, #tpu.memory_space<vmem>>, vector<16x256xbf16>,
    %c0_112 = arith.constant 0 : index
    %c0_113 = arith.constant 0 : index
    %312 = vector.load %arg4[%c0_112, %c0_113] : memref<8x144xbf16, #tpu.memory_space<vmem>>, vector<8x144xbf16>
    %c0_114 = arith.constant 0 : index
    %c0_115 = arith.constant 0 : index
    %313 = vector.load %arg6[%c0_114, %c0_115] : memref<144x256xbf16, #tpu.memory_space<vmem>>, vector<144x256xbf16>
    %cst_116 = arith.constant dense<0.000000e+00> : vector<8x256xf32>
    %314 = tpu.matmul %312, %313, %cst_116 {dimension_numbers = #tpu.dot_dimension_numbers<[1], [0], [0], [1], [0, 0, 1, 1], [], []>} : vector<8x144xbf16>, vector<144x256xbf16>, vector<8x256xf32> -> vector<8x256xf32>
    %c0_117 = arith.constant 0 : index
    %c0_118 = arith.constant 0 : index
    %c0_119 = arith.constant 0 : index
    %315 = vector.load %arg5[%c0_117, %c0_118, %c0_119] : memref<1x8x256xf32, #tpu.memory_space<vmem>>, vector<1x8x256xf32>
    %316 = vector.shape_cast %315 : vector<1x8x256xf32> to vector<8x256xf32>
    %317 = vector.shape_cast %314 : vector<8x256xf32> to vector<1x8x256xf32>
    tpu.vector_store %arg5[%c0_117, %c0_118, %c0_119], %317 {strides = array<i32>} : memref<1x8x256xf32, #tpu.memory_space<vmem>>, vector<1x8x256xf32>,
    return
  }
  func.func @transform_0(%arg0: i32, %arg1: i32) -> (i32, i32, i32) {
    %c0_i32 = arith.constant 0 : i32
    %c0_i32_0 = arith.constant 0 : i32
    %c0_i32_1 = arith.constant 0 : i32
    return %arg0, %c0_i32, %c0_i32_0 : i32, i32, i32
  }
  func.func @transform_1(%arg0: i32, %arg1: i32) -> (i32, i32, i32) {
    %c0_i32 = arith.constant 0 : i32
    %c0_i32_0 = arith.constant 0 : i32
    return %arg0, %c0_i32, %arg1 : i32, i32, i32
  }
  func.func @transform_2(%arg0: i32, %arg1: i32) -> (i32, i32) {
    %c0_i32 = arith.constant 0 : i32
    %c0_i32_0 = arith.constant 0 : i32
    %c0_i32_1 = arith.constant 0 : i32
    return %c0_i32, %c0_i32_0 : i32, i32
  }
  func.func @transform_3(%arg0: i32, %arg1: i32) -> (i32, i32, i32) {
    %c0_i32 = arith.constant 0 : i32
    %c0_i32_0 = arith.constant 0 : i32
    return %arg0, %c0_i32, %arg1 : i32, i32, i32
  }
}

</mosaic_0001>

<llo_original>
// kernel: modulated_deform_conv_pack_forward.1
$region0: #{modulated_deform_conv_pack_forward.1}
  #allocation0 [shape = 'u32[]', space=smem, size = 0x4, offset = 0x4, fixed_abs, tag = 'smem constant byte address 0x4 - core index']
  #allocation1 [shape = 'u32[72,128]{1,0:T(1,128)}', space=vmem, size = 0x9000, scoped, tag = 'internal scratch']
  #allocation2 [shape = 'bf16[144,256]{1,0:T(8,128)(2,1)}', space=vmem, size = 0x12000, scoped, tag = 'scratch operand']
  %s0 = inlined_call_operand.vmem [shape: bf16[2,16,256], index: 0, kind: input, shape index: {}]
  %s1 = inlined_call_operand.vmem [shape: f32[2,32,256], index: 1, kind: input, shape index: {}]
  %s2 = inlined_call_operand.vmem [shape: bf16[8,144], index: 2, kind: input, shape index: {}]
  %s3 = inlined_call_operand.vmem [shape: f32[2,8,256], index: 3, kind: output, shape index: {}]
  %s4 = sld [smem:[#allocation0]]
  $region45: #{modulated_deform_conv_pack_forward.1} parent=0
    _
  %s6 = ssub.s32 1, %s4
  %s7 = scalar_select 0, %s6, %s4
  loop: start=0, step=1, limit=4
  $region2: #{modulated_deform_conv_pack_forward.1} parent=0 // loop_pre_header
    _
  $region3: #{modulated_deform_conv_pack_forward.1} parent=0 // loop_header
    %s9 = sphi 0, %s13
    %p10 = scmp.ge.s32.totalorder %s9, 4
    %s16 = sphi 0, %s28
    %s17 = sphi 0, %s24
    %s18 = sphi 0, %s16
    %s19 = sphi 0, %s17
    %s20 = sphi 0, %s18
    %s21 = sphi 0, %s19
    %s31 = sphi 0, %s33
    %s34 = sphi 0, %s31
    %s35 = sphi 0, %s34
    %s51 = sphi 0, %s35
    %s59 = sphi 0, %s61
    %s62 = sphi 0, %s59
    %s63 = sphi 0, %s62
    %s79 = sphi 0, %s63
    %s83 = sphi 0, %s83
    %s85 = sphi 0, %s83
    %s86 = sphi 0, %s85
    %s100 = sphi 0, %s86
    %s108 = sphi 0, %s110
    %s111 = sphi 0, %s108
    %s112 = sphi 0, %s111
    %s128 = sphi 0, %s112
  $region4: #{modulated_deform_conv_pack_forward.1} parent=0 // loop_header_branch
    %12 = sbr.rel (%p10) target = $region8
  $region5: #{modulated_deform_conv_pack_forward.1} parent=0 // loop_body
    %s14 = ssub.s32 %s9, 1
    %s15 = ssub.s32 %s9, 2
    %s22 = sadd.s32 1, %s17
    %p23 = scmp.ge.s32.totalorder %s22, 1
    %s24 = scalar_select %p23, 0, %s22
    %s25 = sadd.s32 1, %s16
    %s26 = scalar_select %p23, %s25, %s16
    %p27 = scmp.ge.s32.totalorder %s26, 2
    %s28 = scalar_select %p27, 0, %s26
    %s29 = ssub.s32 %s16, %s28
    %p30 = scmp.eq.s32.totalorder %s29, 0
    %s32 = sadd.s32 %s31, 1
    %s33 = scalar_select %p30, %s31, %s32
    %p36 = pneg %p30
    %p37 = scmp.eq.s32.totalorder %s9, 1
    %p38 = por %p36, %p37
    %p39 = scmp.ne.s32.totalorder %s31, %s34
    %p40 = scmp.eq.s32.totalorder %s9, 0
    %p41 = por %p39, %p40
    %p42 = scmp.ne.s32.totalorder %s31, %s34
    %p43 = scmp.eq.s32.totalorder %s14, 1
    %p44 = por %p42, %p43
    %p45 = scmp.ne.s32.totalorder %s34, %s35
    %p46 = scmp.eq.s32.totalorder %s14, 0
    %p47 = por %p45, %p46
    %p48 = scmp.ne.s32.totalorder %s34, %s35
    %p49 = scmp.eq.s32.totalorder %s15, 1
    %p50 = por %p48, %p49
    %p52 = scmp.ne.s32.totalorder %s35, %s51
    %p53 = scmp.eq.s32.totalorder %s15, 0
    %p54 = por %p52, %p53
    %s55 = ssub.s32 %s16, %s28
    %s56 = ssub.s32 %s17, %s24
    %s57 = sor.u32 %s55, %s56
    %p58 = scmp.eq.s32.totalorder %s57, 0
    %s60 = sadd.s32 %s59, 1
    %s61 = scalar_select %p58, %s59, %s60
    %p64 = pneg %p58
    %p65 = scmp.eq.s32.totalorder %s9, 1
    %p66 = por %p64, %p65
    %p67 = scmp.ne.s32.totalorder %s59, %s62
    %p68 = scmp.eq.s32.totalorder %s9, 0
    %p69 = por %p67, %p68
    %p70 = scmp.ne.s32.totalorder %s59, %s62
    %p71 = scmp.eq.s32.totalorder %s14, 1
    %p72 = por %p70, %p71
    %p73 = scmp.ne.s32.totalorder %s62, %s63
    %p74 = scmp.eq.s32.totalorder %s14, 0
    %p75 = por %p73, %p74
    %p76 = scmp.ne.s32.totalorder %s62, %s63
    %p77 = scmp.eq.s32.totalorder %s15, 1
    %p78 = por %p76, %p77
    %p80 = scmp.ne.s32.totalorder %s63, %s79
    %p81 = scmp.eq.s32.totalorder %s15, 0
    %p82 = por %p80, %p81
    %s84 = sadd.s32 %s83, 1
    %p87 = scmp.eq.s32.totalorder %s9, 1
    %p88 = scmp.ne.s32.totalorder %s83, %s85
    %p89 = scmp.eq.s32.totalorder %s9, 0
    %p90 = por %p88, %p89
    %p91 = scmp.ne.s32.totalorder %s83, %s85
    %p92 = scmp.eq.s32.totalorder %s14, 1
    %p93 = por %p91, %p92
    %p94 = scmp.ne.s32.totalorder %s85, %s86
    %p95 = scmp.eq.s32.totalorder %s14, 0
    %p96 = por %p94, %p95
    %p97 = scmp.ne.s32.totalorder %s85, %s86
    %p98 = scmp.eq.s32.totalorder %s15, 1
    %p99 = por %p97, %p98
    %p101 = scmp.ne.s32.totalorder %s86, %s100
    %p102 = scmp.eq.s32.totalorder %s15, 0
    %p103 = por %p101, %p102
    %s104 = ssub.s32 %s16, %s28
    %s105 = ssub.s32 %s17, %s24
    %s106 = sor.u32 %s104, %s105
    %p107 = scmp.eq.s32.totalorder %s106, 0
    %s109 = sadd.s32 %s108, 1
    %s110 = scalar_select %p107, %s108, %s109
    %p113 = pneg %p107
    %p114 = scmp.eq.s32.totalorder %s9, 1
    %p115 = por %p113, %p114
    %p116 = scmp.ne.s32.totalorder %s108, %s111
    %p117 = scmp.eq.s32.totalorder %s9, 0
    %p118 = por %p116, %p117
    %p119 = scmp.ne.s32.totalorder %s108, %s111
    %p120 = scmp.eq.s32.totalorder %s14, 1
    %p121 = por %p119, %p120
    %p122 = scmp.ne.s32.totalorder %s111, %s112
    %p123 = scmp.eq.s32.totalorder %s14, 0
    %p124 = por %p122, %p123
    %p125 = scmp.ne.s32.totalorder %s111, %s112
    %p126 = scmp.eq.s32.totalorder %s15, 1
    %p127 = por %p125, %p126
    %p129 = scmp.ne.s32.totalorder %s112, %s128
    %p130 = scmp.eq.s32.totalorder %s15, 0
    %p131 = por %p129, %p130
    %p132 = scmp.le.s32.totalorder 1, %s9
    %p133 = scmp.lt.s32.totalorder %s9, 3
    %p134 = pnand %p132, %p133
    %p135 = pneg %p134
    // Predicated region
    $region9: #{modulated_deform_conv_pack_forward.1} parent=5 // pred_check
      _
    $region10: #{modulated_deform_conv_pack_forward.1} parent=5 // pred_check_branch
      %137 = sbr.rel (%p134) target = $region12
    $region11: #{modulated_deform_conv_pack_forward.1} parent=5 // pred_region
      %s138 = ssub.s32 %s9, 1
      // Predicated region
      $region13: #{modulated_deform_conv_pack_forward.1} parent=11 // pred_check
        %p139 = pneg %p96
      $region14: #{modulated_deform_conv_pack_forward.1} parent=11 // pred_check_branch
        %141 = sbr.rel (%p139) target = $region16
      $region15: #{modulated_deform_conv_pack_forward.1} parent=11 // pred_region
        _
      $region16: #{modulated_deform_conv_pack_forward.1} parent=11 // pred_fallthru
        _
    $region12: #{modulated_deform_conv_pack_forward.1} parent=5 // pred_fallthru
      _
    %p142 = scmp.lt.s32.totalorder %s9, 2
    // Predicated region
    $region17: #{modulated_deform_conv_pack_forward.1} parent=5 // pred_check
      %p143 = pneg %p142
    $region18: #{modulated_deform_conv_pack_forward.1} parent=5 // pred_check_branch
      %145 = sbr.rel (%p143) target = $region20
    $region19: #{modulated_deform_conv_pack_forward.1} parent=5 // pred_region
      // Predicated region
      $region21: #{modulated_deform_conv_pack_forward.1} parent=19 // pred_check
        %p146 = pneg %p41
      $region22: #{modulated_deform_conv_pack_forward.1} parent=19 // pred_check_branch
        %148 = sbr.rel (%p146) target = $region24
      $region23: #{modulated_deform_conv_pack_forward.1} parent=19 // pred_region
        %p149 = scmp.lt.s32.totalorder %s16, 1
        %s150 = scalar_select %p149, %s16, 1
        %s151 = smul.addr %s150, 4
        %s152 = smul.addr %s151, 4
        %s153 = scalar_lea.vmem %s0, %s152
      $region24: #{modulated_deform_conv_pack_forward.1} parent=19 // pred_fallthru
        _
      // Predicated region
      $region25: #{modulated_deform_conv_pack_forward.1} parent=19 // pred_check
        %p154 = pneg %p69
      $region26: #{modulated_deform_conv_pack_forward.1} parent=19 // pred_check_branch
        %156 = sbr.rel (%p154) target = $region28
      $region27: #{modulated_deform_conv_pack_forward.1} parent=19 // pred_region
        %s157 = smul.u32 2, %s17
        %p158 = scmp.lt.s32.totalorder %s16, 1
        %s159 = scalar_select %p158, %s16, 1
        %p160 = scmp.lt.s32.totalorder %s157, 1
        %s161 = scalar_select %p160, %s157, 1
        %s162 = smul.addr %s159, 8
        %s163 = sadd.s32 %s161, %s162
        %s164 = smul.addr %s163, 8
        %s165 = scalar_lea.vmem %s1, %s164
        %s166 = smul.u32 2, %s17
      $region28: #{modulated_deform_conv_pack_forward.1} parent=19 // pred_fallthru
        _
    $region20: #{modulated_deform_conv_pack_forward.1} parent=5 // pred_fallthru
      _
    %p167 = scmp.le.s32.totalorder 1, %s9
    %p168 = scmp.lt.s32.totalorder %s9, 3
    %p169 = pnand %p167, %p168
    %p170 = pneg %p169
    // Predicated region
    $region29: #{modulated_deform_conv_pack_forward.1} parent=5 // pred_check
      _
    $region30: #{modulated_deform_conv_pack_forward.1} parent=5 // pred_check_branch
      %172 = sbr.rel (%p169) target = $region32
    $region31: #{modulated_deform_conv_pack_forward.1} parent=5 // pred_region
      %s173 = ssub.s32 %s9, 1
      %p174 = scmp.lt.s32.totalorder %s18, 1
      %s175 = scalar_select %p174, %s18, 1
      %s176 = smul.addr %s175, 4
      %s177 = smul.addr %s176, 4
      %s178 = scalar_lea.vmem %s0, %s177
      %p179 = pneg %p47
      %p180 = pneg %p44
      %s181 = smul.u32 2, %s19
      %p182 = scmp.lt.s32.totalorder %s18, 1
      %s183 = scalar_select %p182, %s18, 1
      %p184 = scmp.lt.s32.totalorder %s181, 1
      %s185 = scalar_select %p184, %s181, 1
      %s186 = smul.addr %s183, 8
      %s187 = sadd.s32 %s185, %s186
      %s188 = smul.addr %s187, 8
      %s189 = scalar_lea.vmem %s1, %s188
      %p190 = pneg %p75
      %p191 = pneg %p72
      %p192 = pneg %p96
      %p193 = pneg %p93
      %p194 = pneg %p124
      %p195 = pneg %p121
      %s196 = smul.u32 2, %s19
      %p197 = scmp.lt.s32.totalorder %s18, 1
      %s198 = scalar_select %p197, %s18, 1
      %p199 = scmp.lt.s32.totalorder %s196, 1
      %s200 = scalar_select %p199, %s196, 1
      %s201 = smul.addr %s198, 2
      %s202 = sadd.s32 %s200, %s201
      %s203 = smul.addr %s202, 8
      %s204 = scalar_lea.vmem %s3, %s203
      %p205 = scmp.lt.s32.totalorder %s18, 1
      %s206 = scalar_select %p205, %s18, 1
      %s207 = smul.addr %s206, 4
      %s208 = smul.addr %s207, 4
      %s209 = scalar_lea.vmem %s0, %s208
      %s210 = smul.u32 2, %s19
      %p211 = scmp.lt.s32.totalorder %s18, 1
      %s212 = scalar_select %p211, %s18, 1
      %p213 = scmp.lt.s32.totalorder %s210, 1
      %s214 = scalar_select %p213, %s210, 1
      %s215 = smul.addr %s212, 8
      %s216 = sadd.s32 %s214, %s215
      %s217 = smul.addr %s216, 8
      %s218 = scalar_lea.vmem %s1, %s217
      %s219 = smul.u32 2, %s19
      %s220 = smul.u32 2, %s19
      %p221 = scmp.lt.s32.totalorder %s18, 1
      %s222 = scalar_select %p221, %s18, 1
      %p223 = scmp.lt.s32.totalorder %s220, 1
      %s224 = scalar_select %p223, %s220, 1
      %s225 = smul.addr %s222, 2
      %s226 = sadd.s32 %s224, %s225
      %s227 = smul.addr %s226, 8
      %s228 = scalar_lea.vmem %s3, %s227
      %s229 = smul.u32 2, %s19
      %v231 = vld [vmem:[%s209] sm:$0xff]
      %v232 = vld [vmem:[%s209 + $0x8] sm:$0xff]
      %v233 = vlaneseq
      %v234 = vshrl.u32 %v233, 7
      %v235 = vadd.s32 %v234, 8
      %v236 = vcvt.s32.f32 %v234
      %v237 = vcvt.s32.f32 %v235
      %v238 = vld [vmem:[%s218] ss:$8 sm:$0x3]
      %s239 = scalar_lea.vmem %s218, 17
      %v240 = vld [vmem:[%s239] ss:$8 sm:$0x3]
      %s241 = scalar_lea.vmem %s218, 34
      %v242 = vld [vmem:[%s241] ss:$8 sm:$0x3]
      %v244 = vperm.slane %v238, 0
      %v245 = vperm.slane %v238, 1
      %v248 = vsub.f32 %v244, %v236
      %v249 = vsub.f32 %v245, %v236
      %v250 = vsub.f32 %v244, %v237
      %v251 = vsub.f32 %v245, %v237
      %v252 = vand.u32 2147483647, %v248
      %v253 = vand.u32 2147483647, %v249
      %v254 = vand.u32 2147483647, %v250
      %v255 = vand.u32 2147483647, %v251
      %v256 = vsub.f32 1.0, %v252
      %v257 = vsub.f32 1.0, %v253
      %v258 = vsub.f32 1.0, %v254
      %v259 = vsub.f32 1.0, %v255
      %v260 = vmax.f32 %v256, 0.0
      %v261 = vmax.f32 %v257, 0.0
      %v262 = vmax.f32 %v258, 0.0
      %v263 = vmax.f32 %v259, 0.0
      %v265 = vperm.slane %v242, 0
      %v266 = vperm.slane %v242, 1
      %v269 = vmul.f32 %v260, %v265
      %v270 = vmul.f32 %v261, %v266
      %v271 = vmul.f32 %v262, %v265
      %v272 = vmul.f32 %v263, %v266
      %v274 = vperm.slane %v240, 0
      %v275 = vperm.slane %v240, 1
      %v278 = vsub.f32 %v274, %v236
      %v279 = vsub.f32 %v275, %v236
      %v280 = vsub.f32 %v274, %v237
      %v281 = vsub.f32 %v275, %v237
      %v282 = vand.u32 2147483647, %v278
      %v283 = vand.u32 2147483647, %v279
      %v284 = vand.u32 2147483647, %v280
      %v285 = vand.u32 2147483647, %v281
      %v286 = vsub.f32 1.0, %v282
      %v287 = vsub.f32 1.0, %v283
      %v288 = vsub.f32 1.0, %v284
      %v289 = vsub.f32 1.0, %v285
      %v290 = vmax.f32 %v286, 0.0
      %v291 = vmax.f32 %v287, 0.0
      %v292 = vmax.f32 %v288, 0.0
      %v293 = vmax.f32 %v289, 0.0
      %v298 = vrot.slane %v270, 7
      %v299 = vrot.slane %v272, 7
      %vm300 = vcmask 1040384
      %v301 = vsel %vm300, %v269, %v298
      %vm302 = vcmask 1041409
      %v303 = vsel %vm302, %v269, %v298
      %v304 = vrot.slane %v303, 1
      %vm305 = vcmask 1042434
      %v306 = vsel %vm305, %v269, %v298
      %v307 = vrot.slane %v306, 2
      %vm308 = vcmask 1043459
      %v309 = vsel %vm308, %v269, %v298
      %v310 = vrot.slane %v309, 3
      %vm311 = vcmask 1044484
      %v312 = vsel %vm311, %v269, %v298
      %v313 = vrot.slane %v312, 4
      %vm314 = vcmask 1045509
      %v315 = vsel %vm314, %v269, %v298
      %v316 = vrot.slane %v315, 5
      %vm317 = vcmask 1046534
      %v318 = vsel %vm317, %v269, %v298
      %v319 = vrot.slane %v318, 6
      %vm320 = vcmask 1046528
      %v321 = vsel %vm320, %v298, %v269
      %v322 = vrot.slane %v321, 7
      %v323 = vsel %vm300, %v271, %v299
      %v324 = vsel %vm302, %v271, %v299
      %v325 = vrot.slane %v324, 1
      %v326 = vsel %vm305, %v271, %v299
      %v327 = vrot.slane %v326, 2
      %v328 = vsel %vm308, %v271, %v299
      %v329 = vrot.slane %v328, 3
      %v330 = vsel %vm311, %v271, %v299
      %v331 = vrot.slane %v330, 4
      %v332 = vsel %vm314, %v271, %v299
      %v333 = vrot.slane %v332, 5
      %v334 = vsel %vm317, %v271, %v299
      %v335 = vrot.slane %v334, 6
      %v336 = vsel %vm320, %v299, %v271
      %v337 = vrot.slane %v336, 7
      %v338 = vperm.slane %v301, 0
      %v339 = vperm.slane %v301, 1
      %v340 = vperm.slane %v304, 0
      %v341 = vperm.slane %v304, 1
      %v342 = vperm.slane %v307, 0
      %v343 = vperm.slane %v307, 1
      %v344 = vperm.slane %v310, 0
      %v345 = vperm.slane %v310, 1
      %v346 = vperm.slane %v313, 0
      %v347 = vperm.slane %v313, 1
      %v348 = vperm.slane %v316, 0
      %v349 = vperm.slane %v316, 1
      %v350 = vperm.slane %v319, 0
      %v351 = vperm.slane %v319, 1
      %v352 = vperm.slane %v322, 0
      %v353 = vperm.slane %v322, 1
      %v354 = vperm.slane %v323, 0
      %v355 = vperm.slane %v323, 1
      %v356 = vperm.slane %v325, 0
      %v357 = vperm.slane %v325, 1
      %v358 = vperm.slane %v327, 0
      %v359 = vperm.slane %v327, 1
      %v360 = vperm.slane %v329, 0
      %v361 = vperm.slane %v329, 1
      %v362 = vperm.slane %v331, 0
      %v363 = vperm.slane %v331, 1
      %v364 = vperm.slane %v333, 0
      %v365 = vperm.slane %v333, 1
      %v366 = vperm.slane %v335, 0
      %v367 = vperm.slane %v335, 1
      %v368 = vperm.slane %v337, 0
      %v369 = vperm.slane %v337, 1
      %v402 = vmul.f32 %v338, %v290
      %v403 = vmul.f32 %v339, %v291
      %v404 = vmul.f32 %v338, %v292
      %v405 = vmul.f32 %v339, %v293
      %v406 = vmul.f32 %v340, %v290
      %v407 = vmul.f32 %v341, %v291
      %v408 = vmul.f32 %v340, %v292
      %v409 = vmul.f32 %v341, %v293
      %v410 = vmul.f32 %v342, %v290
      %v411 = vmul.f32 %v343, %v291
      %v412 = vmul.f32 %v342, %v292
      %v413 = vmul.f32 %v343, %v293
      %v414 = vmul.f32 %v344, %v290
      %v415 = vmul.f32 %v345, %v291
      %v416 = vmul.f32 %v344, %v292
      %v417 = vmul.f32 %v345, %v293
      %v418 = vmul.f32 %v346, %v290
      %v419 = vmul.f32 %v347, %v291
      %v420 = vmul.f32 %v346, %v292
      %v421 = vmul.f32 %v347, %v293
      %v422 = vmul.f32 %v348, %v290
      %v423 = vmul.f32 %v349, %v291
      %v424 = vmul.f32 %v348, %v292
      %v425 = vmul.f32 %v349, %v293
      %v426 = vmul.f32 %v350, %v290
      %v427 = vmul.f32 %v351, %v291
      %v428 = vmul.f32 %v350, %v292
      %v429 = vmul.f32 %v351, %v293
      %v430 = vmul.f32 %v352, %v290
      %v431 = vmul.f32 %v353, %v291
      %v432 = vmul.f32 %v352, %v292
      %v433 = vmul.f32 %v353, %v293
      %v434 = vmul.f32 %v354, %v290
      %v435 = vmul.f32 %v355, %v291
      %v436 = vmul.f32 %v354, %v292
      %v437 = vmul.f32 %v355, %v293
      %v438 = vmul.f32 %v356, %v290
      %v439 = vmul.f32 %v357, %v291
      %v440 = vmul.f32 %v356, %v292
      %v441 = vmul.f32 %v357, %v293
      %v442 = vmul.f32 %v358, %v290
      %v443 = vmul.f32 %v359, %v291
      %v444 = vmul.f32 %v358, %v292
      %v445 = vmul.f32 %v359, %v293
      %v446 = vmul.f32 %v360, %v290
      %v447 = vmul.f32 %v361, %v291
      %v448 = vmul.f32 %v360, %v292
      %v449 = vmul.f32 %v361, %v293
      %v450 = vmul.f32 %v362, %v290
      %v451 = vmul.f32 %v363, %v291
      %v452 = vmul.f32 %v362, %v292
      %v453 = vmul.f32 %v363, %v293
      %v454 = vmul.f32 %v364, %v290
      %v455 = vmul.f32 %v365, %v291
      %v456 = vmul.f32 %v364, %v292
      %v457 = vmul.f32 %v365, %v293
      %v458 = vmul.f32 %v366, %v290
      %v459 = vmul.f32 %v367, %v291
      %v460 = vmul.f32 %v366, %v292
      %v461 = vmul.f32 %v367, %v293
      %v462 = vmul.f32 %v368, %v290
      %v463 = vmul.f32 %v369, %v291
      %v464 = vmul.f32 %v368, %v292
      %v465 = vmul.f32 %v369, %v293
      %v466 = vpack.c.bf16 %v404, %v402
      %v467 = vpack.c.bf16 %v405, %v403
      %v468 = vpack.c.bf16 %v408, %v406
      %v469 = vpack.c.bf16 %v409, %v407
      %v470 = vpack.c.bf16 %v412, %v410
      %v471 = vpack.c.bf16 %v413, %v411
      %v472 = vpack.c.bf16 %v416, %v414
      %v473 = vpack.c.bf16 %v417, %v415
      %v474 = vpack.c.bf16 %v420, %v418
      %v475 = vpack.c.bf16 %v421, %v419
      %v476 = vpack.c.bf16 %v424, %v422
      %v477 = vpack.c.bf16 %v425, %v423
      %v478 = vpack.c.bf16 %v428, %v426
      %v479 = vpack.c.bf16 %v429, %v427
      %v480 = vpack.c.bf16 %v432, %v430
      %v481 = vpack.c.bf16 %v433, %v431
      %v482 = vpack.c.bf16 %v436, %v434
      %v483 = vpack.c.bf16 %v437, %v435
      %v484 = vpack.c.bf16 %v440, %v438
      %v485 = vpack.c.bf16 %v441, %v439
      %v486 = vpack.c.bf16 %v444, %v442
      %v487 = vpack.c.bf16 %v445, %v443
      %v488 = vpack.c.bf16 %v448, %v446
      %v489 = vpack.c.bf16 %v449, %v447
      %v490 = vpack.c.bf16 %v452, %v450
      %v491 = vpack.c.bf16 %v453, %v451
      %v492 = vpack.c.bf16 %v456, %v454
      %v493 = vpack.c.bf16 %v457, %v455
      %v494 = vpack.c.bf16 %v460, %v458
      %v495 = vpack.c.bf16 %v461, %v459
      %v496 = vpack.c.bf16 %v464, %v462
      %v497 = vpack.c.bf16 %v465, %v463
      %v500 = vunpack.c.l.b16 %v231
      %v501 = vunpack.c.h.b16 %v231
      %v502 = vunpack.c.l.b16 %v232
      %v503 = vunpack.c.h.b16 %v232
      %v504 = vpack.c.b16 %v502, %v500
      %v505 = vpack.c.b16 %v503, %v501
      %508 = vmatpush.bf16.msra.mxu0 %v480
      %509 = vmatpush.bf16.msra.mxu0 %v478
      %510 = vmatpush.bf16.msra.mxu0 %v476
      %511 = vmatpush.bf16.msra.mxu0 %v474
      %512 = vmatpush.bf16.msra.mxu0 %v472
      %513 = vmatpush.bf16.msra.mxu0 %v470
      %514 = vmatpush.bf16.msra.mxu0 %v468
      %515 = vmatpush.bf16.msra.mxu0 %v466
      %516 = vmatmul.bf16.gmra.mxu0 %v504
      %v517 = vpop.f32.mrf.mxu0
      %v518 = vadd.f32 0.0, %v517
      %v519 = vpop.f32.mrf.mxu0
      %v520 = vadd.f32 0.0, %v519
      %521 = vdwg.mxu0
      %522 = vmatpush.bf16.msra.mxu0 %v496
      %523 = vmatpush.bf16.msra.mxu0 %v494
      %524 = vmatpush.bf16.msra.mxu0 %v492
      %525 = vmatpush.bf16.msra.mxu0 %v490
      %526 = vmatpush.bf16.msra.mxu0 %v488
      %527 = vmatpush.bf16.msra.mxu0 %v486
      %528 = vmatpush.bf16.msra.mxu0 %v484
      %529 = vmatpush.bf16.msra.mxu0 %v482
      %530 = vmatmul.bf16.gmra.mxu0 %v505
      %v531 = vpop.f32.mrf.mxu0
      %v532 = vadd.f32 %v518, %v531
      %v533 = vpop.f32.mrf.mxu0
      %v534 = vadd.f32 %v520, %v533
      %535 = vdwg.mxu0
      %536 = vmatpush.bf16.msra.mxu0 %v481
      %537 = vmatpush.bf16.msra.mxu0 %v479
      %538 = vmatpush.bf16.msra.mxu0 %v477
      %539 = vmatpush.bf16.msra.mxu0 %v475
      %540 = vmatpush.bf16.msra.mxu0 %v473
      %541 = vmatpush.bf16.msra.mxu0 %v471
      %542 = vmatpush.bf16.msra.mxu0 %v469
      %543 = vmatpush.bf16.msra.mxu0 %v467
      %544 = vmatmul.bf16.gmra.mxu0 %v504
      %v545 = vpop.f32.mrf.mxu0
      %v546 = vadd.f32 0.0, %v545
      %v547 = vpop.f32.mrf.mxu0
      %v548 = vadd.f32 0.0, %v547
      %549 = vdwg.mxu0
      %550 = vmatpush.bf16.msra.mxu0 %v497
      %551 = vmatpush.bf16.msra.mxu0 %v495
      %552 = vmatpush.bf16.msra.mxu0 %v493
      %553 = vmatpush.bf16.msra.mxu0 %v491
      %554 = vmatpush.bf16.msra.mxu0 %v489
      %555 = vmatpush.bf16.msra.mxu0 %v487
      %556 = vmatpush.bf16.msra.mxu0 %v485
      %557 = vmatpush.bf16.msra.mxu0 %v483
      %558 = vmatmul.bf16.gmra.mxu0 %v505
      %v559 = vpop.f32.mrf.mxu0
      %v560 = vadd.f32 %v546, %v559
      %v561 = vpop.f32.mrf.mxu0
      %v562 = vadd.f32 %v548, %v561
      %563 = vdwg.mxu0
      %v564 = vpack.c.bf16 %v560, %v532
      %v565 = vpack.c.bf16 %v562, %v534
      %566 = vst [vmem:[#allocation2] sm:$0xff] %v564
      %567 = vst [vmem:[#allocation2 + $0x8] sm:$0xff] %v565
      %s568 = scalar_lea.vmem %s218, 1
      %v569 = vld [vmem:[%s568] ss:$8 sm:$0x3]
      %s570 = scalar_lea.vmem %s218, 18
      %v571 = vld [vmem:[%s570] ss:$8 sm:$0x3]
      %s572 = scalar_lea.vmem %s218, 35
      %v573 = vld [vmem:[%s572] ss:$8 sm:$0x3]
      %v575 = vperm.slane %v569, 0
      %v576 = vperm.slane %v569, 1
      %v579 = vsub.f32 %v575, %v236
      %v580 = vsub.f32 %v576, %v236
      %v581 = vsub.f32 %v575, %v237
      %v582 = vsub.f32 %v576, %v237
      %v583 = vand.u32 2147483647, %v579
      %v584 = vand.u32 2147483647, %v580
      %v585 = vand.u32 2147483647, %v581
      %v586 = vand.u32 2147483647, %v582
      %v587 = vsub.f32 1.0, %v583
      %v588 = vsub.f32 1.0, %v584
      %v589 = vsub.f32 1.0, %v585
      %v590 = vsub.f32 1.0, %v586
      %v591 = vmax.f32 %v587, 0.0
      %v592 = vmax.f32 %v588, 0.0
      %v593 = vmax.f32 %v589, 0.0
      %v594 = vmax.f32 %v590, 0.0
      %v596 = vperm.slane %v573, 0
      %v597 = vperm.slane %v573, 1
      %v600 = vmul.f32 %v591, %v596
      %v601 = vmul.f32 %v592, %v597
      %v602 = vmul.f32 %v593, %v596
      %v603 = vmul.f32 %v594, %v597
      %v605 = vperm.slane %v571, 0
      %v606 = vperm.slane %v571, 1
      %v609 = vsub.f32 %v605, %v236
      %v610 = vsub.f32 %v606, %v236
      %v611 = vsub.f32 %v605, %v237
      %v612 = vsub.f32 %v606, %v237
      %v613 = vand.u32 2147483647, %v609
      %v614 = vand.u32 2147483647, %v610
      %v615 = vand.u32 2147483647, %v611
      %v616 = vand.u32 2147483647, %v612
      %v617 = vsub.f32 1.0, %v613
      %v618 = vsub.f32 1.0, %v614
      %v619 = vsub.f32 1.0, %v615
      %v620 = vsub.f32 1.0, %v616
      %v621 = vmax.f32 %v617, 0.0
      %v622 = vmax.f32 %v618, 0.0
      %v623 = vmax.f32 %v619, 0.0
      %v624 = vmax.f32 %v620, 0.0
      %v629 = vrot.slane %v601, 7
      %v630 = vrot.slane %v603, 7
      %v631 = vsel %vm300, %v600, %v629
      %v632 = vsel %vm302, %v600, %v629
      %v633 = vrot.slane %v632, 1
      %v634 = vsel %vm305, %v600, %v629
      %v635 = vrot.slane %v634, 2
      %v636 = vsel %vm308, %v600, %v629
      %v637 = vrot.slane %v636, 3
      %v638 = vsel %vm311, %v600, %v629
      %v639 = vrot.slane %v638, 4
      %v640 = vsel %vm314, %v600, %v629
      %v641 = vrot.slane %v640, 5
      %v642 = vsel %vm317, %v600, %v629
      %v643 = vrot.slane %v642, 6
      %v644 = vsel %vm320, %v629, %v600
      %v645 = vrot.slane %v644, 7
      %v646 = vsel %vm300, %v602, %v630
      %v647 = vsel %vm302, %v602, %v630
      %v648 = vrot.slane %v647, 1
      %v649 = vsel %vm305, %v602, %v630
      %v650 = vrot.slane %v649, 2
      %v651 = vsel %vm308, %v602, %v630
      %v652 = vrot.slane %v651, 3
      %v653 = vsel %vm311, %v602, %v630
      %v654 = vrot.slane %v653, 4
      %v655 = vsel %vm314, %v602, %v630
      %v656 = vrot.slane %v655, 5
      %v657 = vsel %vm317, %v602, %v630
      %v658 = vrot.slane %v657, 6
      %v659 = vsel %vm320, %v630, %v602
      %v660 = vrot.slane %v659, 7
      %v661 = vperm.slane %v631, 0
      %v662 = vperm.slane %v631, 1
      %v663 = vperm.slane %v633, 0
      %v664 = vperm.slane %v633, 1
      %v665 = vperm.slane %v635, 0
      %v666 = vperm.slane %v635, 1
      %v667 = vperm.slane %v637, 0
      %v668 = vperm.slane %v637, 1
      %v669 = vperm.slane %v639, 0
      %v670 = vperm.slane %v639, 1
      %v671 = vperm.slane %v641, 0
      %v672 = vperm.slane %v641, 1
      %v673 = vperm.slane %v643, 0
      %v674 = vperm.slane %v643, 1
      %v675 = vperm.slane %v645, 0
      %v676 = vperm.slane %v645, 1
      %v677 = vperm.slane %v646, 0
      %v678 = vperm.slane %v646, 1
      %v679 = vperm.slane %v648, 0
      %v680 = vperm.slane %v648, 1
      %v681 = vperm.slane %v650, 0
      %v682 = vperm.slane %v650, 1
      %v683 = vperm.slane %v652, 0
      %v684 = vperm.slane %v652, 1
      %v685 = vperm.slane %v654, 0
      %v686 = vperm.slane %v654, 1
      %v687 = vperm.slane %v656, 0
      %v688 = vperm.slane %v656, 1
      %v689 = vperm.slane %v658, 0
      %v690 = vperm.slane %v658, 1
      %v691 = vperm.slane %v660, 0
      %v692 = vperm.slane %v660, 1
      %v725 = vmul.f32 %v661, %v621
      %v726 = vmul.f32 %v662, %v622
      %v727 = vmul.f32 %v661, %v623
      %v728 = vmul.f32 %v662, %v624
      %v729 = vmul.f32 %v663, %v621
      %v730 = vmul.f32 %v664, %v622
      %v731 = vmul.f32 %v663, %v623
      %v732 = vmul.f32 %v664, %v624
      %v733 = vmul.f32 %v665, %v621
      %v734 = vmul.f32 %v666, %v622
      %v735 = vmul.f32 %v665, %v623
      %v736 = vmul.f32 %v666, %v624
      %v737 = vmul.f32 %v667, %v621
      %v738 = vmul.f32 %v668, %v622
      %v739 = vmul.f32 %v667, %v623
      %v740 = vmul.f32 %v668, %v624
      %v741 = vmul.f32 %v669, %v621
      %v742 = vmul.f32 %v670, %v622
      %v743 = vmul.f32 %v669, %v623
      %v744 = vmul.f32 %v670, %v624
      %v745 = vmul.f32 %v671, %v621
      %v746 = vmul.f32 %v672, %v622
      %v747 = vmul.f32 %v671, %v623
      %v748 = vmul.f32 %v672, %v624
      %v749 = vmul.f32 %v673, %v621
      %v750 = vmul.f32 %v674, %v622
      %v751 = vmul.f32 %v673, %v623
      %v752 = vmul.f32 %v674, %v624
      %v753 = vmul.f32 %v675, %v621
      %v754 = vmul.f32 %v676, %v622
      %v755 = vmul.f32 %v675, %v623
      %v756 = vmul.f32 %v676, %v624
      %v757 = vmul.f32 %v677, %v621
      %v758 = vmul.f32 %v678, %v622
      %v759 = vmul.f32 %v677, %v623
      %v760 = vmul.f32 %v678, %v624
      %v761 = vmul.f32 %v679, %v621
      %v762 = vmul.f32 %v680, %v622
      %v763 = vmul.f32 %v679, %v623
      %v764 = vmul.f32 %v680, %v624
      %v765 = vmul.f32 %v681, %v621
      %v766 = vmul.f32 %v682, %v622
      %v767 = vmul.f32 %v681, %v623
      %v768 = vmul.f32 %v682, %v624
      %v769 = vmul.f32 %v683, %v621
      %v770 = vmul.f32 %v684, %v622
      %v771 = vmul.f32 %v683, %v623
      %v772 = vmul.f32 %v684, %v624
      %v773 = vmul.f32 %v685, %v621
      %v774 = vmul.f32 %v686, %v622
      %v775 = vmul.f32 %v685, %v623
      %v776 = vmul.f32 %v686, %v624
      %v777 = vmul.f32 %v687, %v621
      %v778 = vmul.f32 %v688, %v622
      %v779 = vmul.f32 %v687, %v623
      %v780 = vmul.f32 %v688, %v624
      %v781 = vmul.f32 %v689, %v621
      %v782 = vmul.f32 %v690, %v622
      %v783 = vmul.f32 %v689, %v623
      %v784 = vmul.f32 %v690, %v624
      %v785 = vmul.f32 %v691, %v621
      %v786 = vmul.f32 %v692, %v622
      %v787 = vmul.f32 %v691, %v623
      %v788 = vmul.f32 %v692, %v624
      %v789 = vpack.c.bf16 %v727, %v725
      %v790 = vpack.c.bf16 %v728, %v726
      %v791 = vpack.c.bf16 %v731, %v729
      %v792 = vpack.c.bf16 %v732, %v730
      %v793 = vpack.c.bf16 %v735, %v733
      %v794 = vpack.c.bf16 %v736, %v734
      %v795 = vpack.c.bf16 %v739, %v737
      %v796 = vpack.c.bf16 %v740, %v738
      %v797 = vpack.c.bf16 %v743, %v741
      %v798 = vpack.c.bf16 %v744, %v742
      %v799 = vpack.c.bf16 %v747, %v745
      %v800 = vpack.c.bf16 %v748, %v746
      %v801 = vpack.c.bf16 %v751, %v749
      %v802 = vpack.c.bf16 %v752, %v750
      %v803 = vpack.c.bf16 %v755, %v753
      %v804 = vpack.c.bf16 %v756, %v754
      %v805 = vpack.c.bf16 %v759, %v757
      %v806 = vpack.c.bf16 %v760, %v758
      %v807 = vpack.c.bf16 %v763, %v761
      %v808 = vpack.c.bf16 %v764, %v762
      %v809 = vpack.c.bf16 %v767, %v765
      %v810 = vpack.c.bf16 %v768, %v766
      %v811 = vpack.c.bf16 %v771, %v769
      %v812 = vpack.c.bf16 %v772, %v770
      %v813 = vpack.c.bf16 %v775, %v773
      %v814 = vpack.c.bf16 %v776, %v774
      %v815 = vpack.c.bf16 %v779, %v777
      %v816 = vpack.c.bf16 %v780, %v778
      %v817 = vpack.c.bf16 %v783, %v781
      %v818 = vpack.c.bf16 %v784, %v782
      %v819 = vpack.c.bf16 %v787, %v785
      %v820 = vpack.c.bf16 %v788, %v786
      %821 = vmatpush.bf16.msra.mxu0 %v803
      %822 = vmatpush.bf16.msra.mxu0 %v801
      %823 = vmatpush.bf16.msra.mxu0 %v799
      %824 = vmatpush.bf16.msra.mxu0 %v797
      %825 = vmatpush.bf16.msra.mxu0 %v795
      %826 = vmatpush.bf16.msra.mxu0 %v793
      %827 = vmatpush.bf16.msra.mxu0 %v791
      %828 = vmatpush.bf16.msra.mxu0 %v789
      %829 = vmatmul.bf16.gmra.mxu0 %v504
      %v830 = vpop.f32.mrf.mxu0
      %v831 = vadd.f32 0.0, %v830
      %v832 = vpop.f32.mrf.mxu0
      %v833 = vadd.f32 0.0, %v832
      %834 = vdwg.mxu0
      %835 = vmatpush.bf16.msra.mxu0 %v819
      %836 = vmatpush.bf16.msra.mxu0 %v817
      %837 = vmatpush.bf16.msra.mxu0 %v815
      %838 = vmatpush.bf16.msra.mxu0 %v813
      %839 = vmatpush.bf16.msra.mxu0 %v811
      %840 = vmatpush.bf16.msra.mxu0 %v809
      %841 = vmatpush.bf16.msra.mxu0 %v807
      %842 = vmatpush.bf16.msra.mxu0 %v805
      %843 = vmatmul.bf16.gmra.mxu0 %v505
      %v844 = vpop.f32.mrf.mxu0
      %v845 = vadd.f32 %v831, %v844
      %v846 = vpop.f32.mrf.mxu0
      %v847 = vadd.f32 %v833, %v846
      %848 = vdwg.mxu0
      %849 = vmatpush.bf16.msra.mxu0 %v804
      %850 = vmatpush.bf16.msra.mxu0 %v802
      %851 = vmatpush.bf16.msra.mxu0 %v800
      %852 = vmatpush.bf16.msra.mxu0 %v798
      %853 = vmatpush.bf16.msra.mxu0 %v796
      %854 = vmatpush.bf16.msra.mxu0 %v794
      %855 = vmatpush.bf16.msra.mxu0 %v792
      %856 = vmatpush.bf16.msra.mxu0 %v790
      %857 = vmatmul.bf16.gmra.mxu0 %v504
      %v858 = vpop.f32.mrf.mxu0
      %v859 = vadd.f32 0.0, %v858
      %v860 = vpop.f32.mrf.mxu0
      %v861 = vadd.f32 0.0, %v860
      %862 = vdwg.mxu0
      %863 = vmatpush.bf16.msra.mxu0 %v820
      %864 = vmatpush.bf16.msra.mxu0 %v818
      %865 = vmatpush.bf16.msra.mxu0 %v816
      %866 = vmatpush.bf16.msra.mxu0 %v814
      %867 = vmatpush.bf16.msra.mxu0 %v812
      %868 = vmatpush.bf16.msra.mxu0 %v810
      %869 = vmatpush.bf16.msra.mxu0 %v808
      %870 = vmatpush.bf16.msra.mxu0 %v806
      %871 = vmatmul.bf16.gmra.mxu0 %v505
      %v872 = vpop.f32.mrf.mxu0
      %v873 = vadd.f32 %v859, %v872
      %v874 = vpop.f32.mrf.mxu0
      %v875 = vadd.f32 %v861, %v874
      %876 = vdwg.mxu0
      %v877 = vpack.c.bf16 %v873, %v845
      %v878 = vpack.c.bf16 %v875, %v847
      %879 = vst [vmem:[#allocation2 + $0x10] sm:$0xff] %v877
      %880 = vst [vmem:[#allocation2 + $0x18] sm:$0xff] %v878
      %s881 = scalar_lea.vmem %s218, 2
      %v882 = vld [vmem:[%s881] ss:$8 sm:$0x3]
      %s883 = scalar_lea.vmem %s218, 19
      %v884 = vld [vmem:[%s883] ss:$8 sm:$0x3]
      %s885 = scalar_lea.vmem %s218, 36
      %v886 = vld [vmem:[%s885] ss:$8 sm:$0x3]
      %v888 = vperm.slane %v882, 0
      %v889 = vperm.slane %v882, 1
      %v892 = vsub.f32 %v888, %v236
      %v893 = vsub.f32 %v889, %v236
      %v894 = vsub.f32 %v888, %v237
      %v895 = vsub.f32 %v889, %v237
      %v896 = vand.u32 2147483647, %v892
      %v897 = vand.u32 2147483647, %v893
      %v898 = vand.u32 2147483647, %v894
      %v899 = vand.u32 2147483647, %v895
      %v900 = vsub.f32 1.0, %v896
      %v901 = vsub.f32 1.0, %v897
      %v902 = vsub.f32 1.0, %v898
      %v903 = vsub.f32 1.0, %v899
      %v904 = vmax.f32 %v900, 0.0
      %v905 = vmax.f32 %v901, 0.0
      %v906 = vmax.f32 %v902, 0.0
      %v907 = vmax.f32 %v903, 0.0
      %v909 = vperm.slane %v886, 0
      %v910 = vperm.slane %v886, 1
      %v913 = vmul.f32 %v904, %v909
      %v914 = vmul.f32 %v905, %v910
      %v915 = vmul.f32 %v906, %v909
      %v916 = vmul.f32 %v907, %v910
      %v918 = vperm.slane %v884, 0
      %v919 = vperm.slane %v884, 1
      %v922 = vsub.f32 %v918, %v236
      %v923 = vsub.f32 %v919, %v236
      %v924 = vsub.f32 %v918, %v237
      %v925 = vsub.f32 %v919, %v237
      %v926 = vand.u32 2147483647, %v922
      %v927 = vand.u32 2147483647, %v923
      %v928 = vand.u32 2147483647, %v924
      %v929 = vand.u32 2147483647, %v925
      %v930 = vsub.f32 1.0, %v926
      %v931 = vsub.f32 1.0, %v927
      %v932 = vsub.f32 1.0, %v928
      %v933 = vsub.f32 1.0, %v929
      %v934 = vmax.f32 %v930, 0.0
      %v935 = vmax.f32 %v931, 0.0
      %v936 = vmax.f32 %v932, 0.0
      %v937 = vmax.f32 %v933, 0.0
      %v942 = vrot.slane %v914, 7
      %v943 = vrot.slane %v916, 7
      %v944 = vsel %vm300, %v913, %v942
      %v945 = vsel %vm302, %v913, %v942
      %v946 = vrot.slane %v945, 1
      %v947 = vsel %vm305, %v913, %v942
      %v948 = vrot.slane %v947, 2
      %v949 = vsel %vm308, %v913, %v942
      %v950 = vrot.slane %v949, 3
      %v951 = vsel %vm311, %v913, %v942
      %v952 = vrot.slane %v951, 4
      %v953 = vsel %vm314, %v913, %v942
      %v954 = vrot.slane %v953, 5
      %v955 = vsel %vm317, %v913, %v942
      %v956 = vrot.slane %v955, 6
      %v957 = vsel %vm320, %v942, %v913
      %v958 = vrot.slane %v957, 7
      %v959 = vsel %vm300, %v915, %v943
      %v960 = vsel %vm302, %v915, %v943
      %v961 = vrot.slane %v960, 1
      %v962 = vsel %vm305, %v915, %v943
      %v963 = vrot.slane %v962, 2
      %v964 = vsel %vm308, %v915, %v943
      %v965 = vrot.slane %v964, 3
      %v966 = vsel %vm311, %v915, %v943
      %v967 = vrot.slane %v966, 4
      %v968 = vsel %vm314, %v915, %v943
      %v969 = vrot.slane %v968, 5
      %v970 = vsel %vm317, %v915, %v943
      %v971 = vrot.slane %v970, 6
      %v972 = vsel %vm320, %v943, %v915
      %v973 = vrot.slane %v972, 7
      %v974 = vperm.slane %v944, 0
      %v975 = vperm.slane %v944, 1
      %v976 = vperm.slane %v946, 0
      %v977 = vperm.slane %v946, 1
      %v978 = vperm.slane %v948, 0
      %v979 = vperm.slane %v948, 1
      %v980 = vperm.slane %v950, 0
      %v981 = vperm.slane %v950, 1
      %v982 = vperm.slane %v952, 0
      %v983 = vperm.slane %v952, 1
      %v984 = vperm.slane %v954, 0
      %v985 = vperm.slane %v954, 1
      %v986 = vperm.slane %v956, 0
      %v987 = vperm.slane %v956, 1
      %v988 = vperm.slane %v958, 0
      %v989 = vperm.slane %v958, 1
      %v990 = vperm.slane %v959, 0
      %v991 = vperm.slane %v959, 1
      %v992 = vperm.slane %v961, 0
      %v993 = vperm.slane %v961, 1
      %v994 = vperm.slane %v963, 0
      %v995 = vperm.slane %v963, 1
      %v996 = vperm.slane %v965, 0
      %v997 = vperm.slane %v965, 1
      %v998 = vperm.slane %v967, 0
      %v999 = vperm.slane %v967, 1
      %v1000 = vperm.slane %v969, 0
      %v1001 = vperm.slane %v969, 1
      %v1002 = vperm.slane %v971, 0
      %v1003 = vperm.slane %v971, 1
      %v1004 = vperm.slane %v973, 0
      %v1005 = vperm.slane %v973, 1
      %v1038 = vmul.f32 %v974, %v934
      %v1039 = vmul.f32 %v975, %v935
      %v1040 = vmul.f32 %v974, %v936
      %v1041 = vmul.f32 %v975, %v937
      %v1042 = vmul.f32 %v976, %v934
      %v1043 = vmul.f32 %v977, %v935
      %v1044 = vmul.f32 %v976, %v936
      %v1045 = vmul.f32 %v977, %v937
      %v1046 = vmul.f32 %v978, %v934
      %v1047 = vmul.f32 %v979, %v935
      %v1048 = vmul.f32 %v978, %v936
      %v1049 = vmul.f32 %v979, %v937
      %v1050 = vmul.f32 %v980, %v934
      %v1051 = vmul.f32 %v981, %v935
      %v1052 = vmul.f32 %v980, %v936
      %v1053 = vmul.f32 %v981, %v937
      %v1054 = vmul.f32 %v982, %v934
      %v1055 = vmul.f32 %v983, %v935
      %v1056 = vmul.f32 %v982, %v936
      %v1057 = vmul.f32 %v983, %v937
      %v1058 = vmul.f32 %v984, %v934
      %v1059 = vmul.f32 %v985, %v935
      %v1060 = vmul.f32 %v984, %v936
      %v1061 = vmul.f32 %v985, %v937
      %v1062 = vmul.f32 %v986, %v934
      %v1063 = vmul.f32 %v987, %v935
      %v1064 = vmul.f32 %v986, %v936
      %v1065 = vmul.f32 %v987, %v937
      %v1066 = vmul.f32 %v988, %v934
      %v1067 = vmul.f32 %v989, %v935
      %v1068 = vmul.f32 %v988, %v936
      %v1069 = vmul.f32 %v989, %v937
      %v1070 = vmul.f32 %v990, %v934
      %v1071 = vmul.f32 %v991, %v935
      %v1072 = vmul.f32 %v990, %v936
      %v1073 = vmul.f32 %v991, %v937
      %v1074 = vmul.f32 %v992, %v934
      %v1075 = vmul.f32 %v993, %v935
      %v1076 = vmul.f32 %v992, %v936
      %v1077 = vmul.f32 %v993, %v937
      %v1078 = vmul.f32 %v994, %v934
      %v1079 = vmul.f32 %v995, %v935
      %v1080 = vmul.f32 %v994, %v936
      %v1081 = vmul.f32 %v995, %v937
      %v1082 = vmul.f32 %v996, %v934
      %v1083 = vmul.f32 %v997, %v935
      %v1084 = vmul.f32 %v996, %v936
      %v1085 = vmul.f32 %v997, %v937
      %v1086 = vmul.f32 %v998, %v934
      %v1087 = vmul.f32 %v999, %v935
      %v1088 = vmul.f32 %v998, %v936
      %v1089 = vmul.f32 %v999, %v937
      %v1090 = vmul.f32 %v1000, %v934
      %v1091 = vmul.f32 %v1001, %v935
      %v1092 = vmul.f32 %v1000, %v936
      %v1093 = vmul.f32 %v1001, %v937
      %v1094 = vmul.f32 %v1002, %v934
      %v1095 = vmul.f32 %v1003, %v935
      %v1096 = vmul.f32 %v1002, %v936
      %v1097 = vmul.f32 %v1003, %v937
      %v1098 = vmul.f32 %v1004, %v934
      %v1099 = vmul.f32 %v1005, %v935
      %v1100 = vmul.f32 %v1004, %v936
      %v1101 = vmul.f32 %v1005, %v937
      %v1102 = vpack.c.bf16 %v1040, %v1038
      %v1103 = vpack.c.bf16 %v1041, %v1039
      %v1104 = vpack.c.bf16 %v1044, %v1042
      %v1105 = vpack.c.bf16 %v1045, %v1043
      %v1106 = vpack.c.bf16 %v1048, %v1046
      %v1107 = vpack.c.bf16 %v1049, %v1047
      %v1108 = vpack.c.bf16 %v1052, %v1050
      %v1109 = vpack.c.bf16 %v1053, %v1051
      %v1110 = vpack.c.bf16 %v1056, %v1054
      %v1111 = vpack.c.bf16 %v1057, %v1055
      %v1112 = vpack.c.bf16 %v1060, %v1058
      %v1113 = vpack.c.bf16 %v1061, %v1059
      %v1114 = vpack.c.bf16 %v1064, %v1062
      %v1115 = vpack.c.bf16 %v1065, %v1063
      %v1116 = vpack.c.bf16 %v1068, %v1066
      %v1117 = vpack.c.bf16 %v1069, %v1067
      %v1118 = vpack.c.bf16 %v1072, %v1070
      %v1119 = vpack.c.bf16 %v1073, %v1071
      %v1120 = vpack.c.bf16 %v1076, %v1074
      %v1121 = vpack.c.bf16 %v1077, %v1075
      %v1122 = vpack.c.bf16 %v1080, %v1078
      %v1123 = vpack.c.bf16 %v1081, %v1079
      %v1124 = vpack.c.bf16 %v1084, %v1082
      %v1125 = vpack.c.bf16 %v1085, %v1083
      %v1126 = vpack.c.bf16 %v1088, %v1086
      %v1127 = vpack.c.bf16 %v1089, %v1087
      %v1128 = vpack.c.bf16 %v1092, %v1090
      %v1129 = vpack.c.bf16 %v1093, %v1091
      %v1130 = vpack.c.bf16 %v1096, %v1094
      %v1131 = vpack.c.bf16 %v1097, %v1095
      %v1132 = vpack.c.bf16 %v1100, %v1098
      %v1133 = vpack.c.bf16 %v1101, %v1099
      %1134 = vmatpush.bf16.msra.mxu0 %v1116
      %1135 = vmatpush.bf16.msra.mxu0 %v1114
      %1136 = vmatpush.bf16.msra.mxu0 %v1112
      %1137 = vmatpush.bf16.msra.mxu0 %v1110
      %1138 = vmatpush.bf16.msra.mxu0 %v1108
      %1139 = vmatpush.bf16.msra.mxu0 %v1106
      %1140 = vmatpush.bf16.msra.mxu0 %v1104
      %1141 = vmatpush.bf16.msra.mxu0 %v1102
      %1142 = vmatmul.bf16.gmra.mxu0 %v504
      %v1143 = vpop.f32.mrf.mxu0
      %v1144 = vadd.f32 0.0, %v1143
      %v1145 = vpop.f32.mrf.mxu0
      %v1146 = vadd.f32 0.0, %v1145
      %1147 = vdwg.mxu0
      %1148 = vmatpush.bf16.msra.mxu0 %v1132
      %1149 = vmatpush.bf16.msra.mxu0 %v1130
      %1150 = vmatpush.bf16.msra.mxu0 %v1128
      %1151 = vmatpush.bf16.msra.mxu0 %v1126
      %1152 = vmatpush.bf16.msra.mxu0 %v1124
      %1153 = vmatpush.bf16.msra.mxu0 %v1122
      %1154 = vmatpush.bf16.msra.mxu0 %v1120
      %1155 = vmatpush.bf16.msra.mxu0 %v1118
      %1156 = vmatmul.bf16.gmra.mxu0 %v505
      %v1157 = vpop.f32.mrf.mxu0
      %v1158 = vadd.f32 %v1144, %v1157
      %v1159 = vpop.f32.mrf.mxu0
      %v1160 = vadd.f32 %v1146, %v1159
      %1161 = vdwg.mxu0
      %1162 = vmatpush.bf16.msra.mxu0 %v1117
      %1163 = vmatpush.bf16.msra.mxu0 %v1115
      %1164 = vmatpush.bf16.msra.mxu0 %v1113
      %1165 = vmatpush.bf16.msra.mxu0 %v1111
      %1166 = vmatpush.bf16.msra.mxu0 %v1109
      %1167 = vmatpush.bf16.msra.mxu0 %v1107
      %1168 = vmatpush.bf16.msra.mxu0 %v1105
      %1169 = vmatpush.bf16.msra.mxu0 %v1103
      %1170 = vmatmul.bf16.gmra.mxu0 %v504
      %v1171 = vpop.f32.mrf.mxu0
      %v1172 = vadd.f32 0.0, %v1171
      %v1173 = vpop.f32.mrf.mxu0
      %v1174 = vadd.f32 0.0, %v1173
      %1175 = vdwg.mxu0
      %1176 = vmatpush.bf16.msra.mxu0 %v1133
      %1177 = vmatpush.bf16.msra.mxu0 %v1131
      %1178 = vmatpush.bf16.msra.mxu0 %v1129
      %1179 = vmatpush.bf16.msra.mxu0 %v1127
      %1180 = vmatpush.bf16.msra.mxu0 %v1125
      %1181 = vmatpush.bf16.msra.mxu0 %v1123
      %1182 = vmatpush.bf16.msra.mxu0 %v1121
      %1183 = vmatpush.bf16.msra.mxu0 %v1119
      %1184 = vmatmul.bf16.gmra.mxu0 %v505
      %v1185 = vpop.f32.mrf.mxu0
      %v1186 = vadd.f32 %v1172, %v1185
      %v1187 = vpop.f32.mrf.mxu0
      %v1188 = vadd.f32 %v1174, %v1187
      %1189 = vdwg.mxu0
      %v1190 = vpack.c.bf16 %v1186, %v1158
      %v1191 = vpack.c.bf16 %v1188, %v1160
      %1192 = vst [vmem:[#allocation2 + $0x20] sm:$0xff] %v1190
      %1193 = vst [vmem:[#allocation2 + $0x28] sm:$0xff] %v1191
      %s1194 = scalar_lea.vmem %s218, 3
      %v1195 = vld [vmem:[%s1194] ss:$8 sm:$0x3]
      %s1196 = scalar_lea.vmem %s218, 20
      %v1197 = vld [vmem:[%s1196] ss:$8 sm:$0x3]
      %s1198 = scalar_lea.vmem %s218, 37
      %v1199 = vld [vmem:[%s1198] ss:$8 sm:$0x3]
      %v1201 = vperm.slane %v1195, 0
      %v1202 = vperm.slane %v1195, 1
      %v1205 = vsub.f32 %v1201, %v236
      %v1206 = vsub.f32 %v1202, %v236
      %v1207 = vsub.f32 %v1201, %v237
      %v1208 = vsub.f32 %v1202, %v237
      %v1209 = vand.u32 2147483647, %v1205
      %v1210 = vand.u32 2147483647, %v1206
      %v1211 = vand.u32 2147483647, %v1207
      %v1212 = vand.u32 2147483647, %v1208
      %v1213 = vsub.f32 1.0, %v1209
      %v1214 = vsub.f32 1.0, %v1210
      %v1215 = vsub.f32 1.0, %v1211
      %v1216 = vsub.f32 1.0, %v1212
      %v1217 = vmax.f32 %v1213, 0.0
      %v1218 = vmax.f32 %v1214, 0.0
      %v1219 = vmax.f32 %v1215, 0.0
      %v1220 = vmax.f32 %v1216, 0.0
      %v1222 = vperm.slane %v1199, 0
      %v1223 = vperm.slane %v1199, 1
      %v1226 = vmul.f32 %v1217, %v1222
      %v1227 = vmul.f32 %v1218, %v1223
      %v1228 = vmul.f32 %v1219, %v1222
      %v1229 = vmul.f32 %v1220, %v1223
      %v1231 = vperm.slane %v1197, 0
      %v1232 = vperm.slane %v1197, 1
      %v1235 = vsub.f32 %v1231, %v236
      %v1236 = vsub.f32 %v1232, %v236
      %v1237 = vsub.f32 %v1231, %v237
      %v1238 = vsub.f32 %v1232, %v237
      %v1239 = vand.u32 2147483647, %v1235
      %v1240 = vand.u32 2147483647, %v1236
      %v1241 = vand.u32 2147483647, %v1237
      %v1242 = vand.u32 2147483647, %v1238
      %v1243 = vsub.f32 1.0, %v1239
      %v1244 = vsub.f32 1.0, %v1240
      %v1245 = vsub.f32 1.0, %v1241
      %v1246 = vsub.f32 1.0, %v1242
      %v1247 = vmax.f32 %v1243, 0.0
      %v1248 = vmax.f32 %v1244, 0.0
      %v1249 = vmax.f32 %v1245, 0.0
      %v1250 = vmax.f32 %v1246, 0.0
      %v1255 = vrot.slane %v1227, 7
      %v1256 = vrot.slane %v1229, 7
      %v1257 = vsel %vm300, %v1226, %v1255
      %v1258 = vsel %vm302, %v1226, %v1255
      %v1259 = vrot.slane %v1258, 1
      %v1260 = vsel %vm305, %v1226, %v1255
      %v1261 = vrot.slane %v1260, 2
      %v1262 = vsel %vm308, %v1226, %v1255
      %v1263 = vrot.slane %v1262, 3
      %v1264 = vsel %vm311, %v1226, %v1255
      %v1265 = vrot.slane %v1264, 4
      %v1266 = vsel %vm314, %v1226, %v1255
      %v1267 = vrot.slane %v1266, 5
      %v1268 = vsel %vm317, %v1226, %v1255
      %v1269 = vrot.slane %v1268, 6
      %v1270 = vsel %vm320, %v1255, %v1226
      %v1271 = vrot.slane %v1270, 7
      %v1272 = vsel %vm300, %v1228, %v1256
      %v1273 = vsel %vm302, %v1228, %v1256
      %v1274 = vrot.slane %v1273, 1
      %v1275 = vsel %vm305, %v1228, %v1256
      %v1276 = vrot.slane %v1275, 2
      %v1277 = vsel %vm308, %v1228, %v1256
      %v1278 = vrot.slane %v1277, 3
      %v1279 = vsel %vm311, %v1228, %v1256
      %v1280 = vrot.slane %v1279, 4
      %v1281 = vsel %vm314, %v1228, %v1256
      %v1282 = vrot.slane %v1281, 5
      %v1283 = vsel %vm317, %v1228, %v1256
      %v1284 = vrot.slane %v1283, 6
      %v1285 = vsel %vm320, %v1256, %v1228
      %v1286 = vrot.slane %v1285, 7
      %v1287 = vperm.slane %v1257, 0
      %v1288 = vperm.slane %v1257, 1
      %v1289 = vperm.slane %v1259, 0
      %v1290 = vperm.slane %v1259, 1
      %v1291 = vperm.slane %v1261, 0
      %v1292 = vperm.slane %v1261, 1
      %v1293 = vperm.slane %v1263, 0
      %v1294 = vperm.slane %v1263, 1
      %v1295 = vperm.slane %v1265, 0
      %v1296 = vperm.slane %v1265, 1
      %v1297 = vperm.slane %v1267, 0
      %v1298 = vperm.slane %v1267, 1
      %v1299 = vperm.slane %v1269, 0
      %v1300 = vperm.slane %v1269, 1
      %v1301 = vperm.slane %v1271, 0
      %v1302 = vperm.slane %v1271, 1
      %v1303 = vperm.slane %v1272, 0
      %v1304 = vperm.slane %v1272, 1
      %v1305 = vperm.slane %v1274, 0
      %v1306 = vperm.slane %v1274, 1
      %v1307 = vperm.slane %v1276, 0
      %v1308 = vperm.slane %v1276, 1
      %v1309 = vperm.slane %v1278, 0
      %v1310 = vperm.slane %v1278, 1
      %v1311 = vperm.slane %v1280, 0
      %v1312 = vperm.slane %v1280, 1
      %v1313 = vperm.slane %v1282, 0
      %v1314 = vperm.slane %v1282, 1
      %v1315 = vperm.slane %v1284, 0
      %v1316 = vperm.slane %v1284, 1
      %v1317 = vperm.slane %v1286, 0
      %v1318 = vperm.slane %v1286, 1
      %v1351 = vmul.f32 %v1287, %v1247
      %v1352 = vmul.f32 %v1288, %v1248
      %v1353 = vmul.f32 %v1287, %v1249
      %v1354 = vmul.f32 %v1288, %v1250
      %v1355 = vmul.f32 %v1289, %v1247
      %v1356 = vmul.f32 %v1290, %v1248
      %v1357 = vmul.f32 %v1289, %v1249
      %v1358 = vmul.f32 %v1290, %v1250
      %v1359 = vmul.f32 %v1291, %v1247
      %v1360 = vmul.f32 %v1292, %v1248
      %v1361 = vmul.f32 %v1291, %v1249
      %v1362 = vmul.f32 %v1292, %v1250
      %v1363 = vmul.f32 %v1293, %v1247
      %v1364 = vmul.f32 %v1294, %v1248
      %v1365 = vmul.f32 %v1293, %v1249
      %v1366 = vmul.f32 %v1294, %v1250
      %v1367 = vmul.f32 %v1295, %v1247
      %v1368 = vmul.f32 %v1296, %v1248
      %v1369 = vmul.f32 %v1295, %v1249
      %v1370 = vmul.f32 %v1296, %v1250
      %v1371 = vmul.f32 %v1297, %v1247
      %v1372 = vmul.f32 %v1298, %v1248
      %v1373 = vmul.f32 %v1297, %v1249
      %v1374 = vmul.f32 %v1298, %v1250
      %v1375 = vmul.f32 %v1299, %v1247
      %v1376 = vmul.f32 %v1300, %v1248
      %v1377 = vmul.f32 %v1299, %v1249
      %v1378 = vmul.f32 %v1300, %v1250
      %v1379 = vmul.f32 %v1301, %v1247
      %v1380 = vmul.f32 %v1302, %v1248
      %v1381 = vmul.f32 %v1301, %v1249
      %v1382 = vmul.f32 %v1302, %v1250
      %v1383 = vmul.f32 %v1303, %v1247
      %v1384 = vmul.f32 %v1304, %v1248
      %v1385 = vmul.f32 %v1303, %v1249
      %v1386 = vmul.f32 %v1304, %v1250
      %v1387 = vmul.f32 %v1305, %v1247
      %v1388 = vmul.f32 %v1306, %v1248
      %v1389 = vmul.f32 %v1305, %v1249
      %v1390 = vmul.f32 %v1306, %v1250
      %v1391 = vmul.f32 %v1307, %v1247
      %v1392 = vmul.f32 %v1308, %v1248
      %v1393 = vmul.f32 %v1307, %v1249
      %v1394 = vmul.f32 %v1308, %v1250
      %v1395 = vmul.f32 %v1309, %v1247
      %v1396 = vmul.f32 %v1310, %v1248
      %v1397 = vmul.f32 %v1309, %v1249
      %v1398 = vmul.f32 %v1310, %v1250
      %v1399 = vmul.f32 %v1311, %v1247
      %v1400 = vmul.f32 %v1312, %v1248
      %v1401 = vmul.f32 %v1311, %v1249
      %v1402 = vmul.f32 %v1312, %v1250
      %v1403 = vmul.f32 %v1313, %v1247
      %v1404 = vmul.f32 %v1314, %v1248
      %v1405 = vmul.f32 %v1313, %v1249
      %v1406 = vmul.f32 %v1314, %v1250
      %v1407 = vmul.f32 %v1315, %v1247
      %v1408 = vmul.f32 %v1316, %v1248
      %v1409 = vmul.f32 %v1315, %v1249
      %v1410 = vmul.f32 %v1316, %v1250
      %v1411 = vmul.f32 %v1317, %v1247
      %v1412 = vmul.f32 %v1318, %v1248
      %v1413 = vmul.f32 %v1317, %v1249
      %v1414 = vmul.f32 %v1318, %v1250
      %v1415 = vpack.c.bf16 %v1353, %v1351
      %v1416 = vpack.c.bf16 %v1354, %v1352
      %v1417 = vpack.c.bf16 %v1357, %v1355
      %v1418 = vpack.c.bf16 %v1358, %v1356
      %v1419 = vpack.c.bf16 %v1361, %v1359
      %v1420 = vpack.c.bf16 %v1362, %v1360
      %v1421 = vpack.c.bf16 %v1365, %v1363
      %v1422 = vpack.c.bf16 %v1366, %v1364
      %v1423 = vpack.c.bf16 %v1369, %v1367
      %v1424 = vpack.c.bf16 %v1370, %v1368
      %v1425 = vpack.c.bf16 %v1373, %v1371
      %v1426 = vpack.c.bf16 %v1374, %v1372
      %v1427 = vpack.c.bf16 %v1377, %v1375
      %v1428 = vpack.c.bf16 %v1378, %v1376
      %v1429 = vpack.c.bf16 %v1381, %v1379
      %v1430 = vpack.c.bf16 %v1382, %v1380
      %v1431 = vpack.c.bf16 %v1385, %v1383
      %v1432 = vpack.c.bf16 %v1386, %v1384
      %v1433 = vpack.c.bf16 %v1389, %v1387
      %v1434 = vpack.c.bf16 %v1390, %v1388
      %v1435 = vpack.c.bf16 %v1393, %v1391
      %v1436 = vpack.c.bf16 %v1394, %v1392
      %v1437 = vpack.c.bf16 %v1397, %v1395
      %v1438 = vpack.c.bf16 %v1398, %v1396
      %v1439 = vpack.c.bf16 %v1401, %v1399
      %v1440 = vpack.c.bf16 %v1402, %v1400
      %v1441 = vpack.c.bf16 %v1405, %v1403
      %v1442 = vpack.c.bf16 %v1406, %v1404
      %v1443 = vpack.c.bf16 %v1409, %v1407
      %v1444 = vpack.c.bf16 %v1410, %v1408
      %v1445 = vpack.c.bf16 %v1413, %v1411
      %v1446 = vpack.c.bf16 %v1414, %v1412
      %1447 = vmatpush.bf16.msra.mxu0 %v1429
      %1448 = vmatpush.bf16.msra.mxu0 %v1427
      %1449 = vmatpush.bf16.msra.mxu0 %v1425
      %1450 = vmatpush.bf16.msra.mxu0 %v1423
      %1451 = vmatpush.bf16.msra.mxu0 %v1421
      %1452 = vmatpush.bf16.msra.mxu0 %v1419
      %1453 = vmatpush.bf16.msra.mxu0 %v1417
      %1454 = vmatpush.bf16.msra.mxu0 %v1415
      %1455 = vmatmul.bf16.gmra.mxu0 %v504
      %v1456 = vpop.f32.mrf.mxu0
      %v1457 = vadd.f32 0.0, %v1456
      %v1458 = vpop.f32.mrf.mxu0
      %v1459 = vadd.f32 0.0, %v1458
      %1460 = vdwg.mxu0
      %1461 = vmatpush.bf16.msra.mxu0 %v1445
      %1462 = vmatpush.bf16.msra.mxu0 %v1443
      %1463 = vmatpush.bf16.msra.mxu0 %v1441
      %1464 = vmatpush.bf16.msra.mxu0 %v1439
      %1465 = vmatpush.bf16.msra.mxu0 %v1437
      %1466 = vmatpush.bf16.msra.mxu0 %v1435
      %1467 = vmatpush.bf16.msra.mxu0 %v1433
      %1468 = vmatpush.bf16.msra.mxu0 %v1431
      %1469 = vmatmul.bf16.gmra.mxu0 %v505
      %v1470 = vpop.f32.mrf.mxu0
      %v1471 = vadd.f32 %v1457, %v1470
      %v1472 = vpop.f32.mrf.mxu0
      %v1473 = vadd.f32 %v1459, %v1472
      %1474 = vdwg.mxu0
      %1475 = vmatpush.bf16.msra.mxu0 %v1430
      %1476 = vmatpush.bf16.msra.mxu0 %v1428
      %1477 = vmatpush.bf16.msra.mxu0 %v1426
      %1478 = vmatpush.bf16.msra.mxu0 %v1424
      %1479 = vmatpush.bf16.msra.mxu0 %v1422
      %1480 = vmatpush.bf16.msra.mxu0 %v1420
      %1481 = vmatpush.bf16.msra.mxu0 %v1418
      %1482 = vmatpush.bf16.msra.mxu0 %v1416
      %1483 = vmatmul.bf16.gmra.mxu0 %v504
      %v1484 = vpop.f32.mrf.mxu0
      %v1485 = vadd.f32 0.0, %v1484
      %v1486 = vpop.f32.mrf.mxu0
      %v1487 = vadd.f32 0.0, %v1486
      %1488 = vdwg.mxu0
      %1489 = vmatpush.bf16.msra.mxu0 %v1446
      %1490 = vmatpush.bf16.msra.mxu0 %v1444
      %1491 = vmatpush.bf16.msra.mxu0 %v1442
      %1492 = vmatpush.bf16.msra.mxu0 %v1440
      %1493 = vmatpush.bf16.msra.mxu0 %v1438
      %1494 = vmatpush.bf16.msra.mxu0 %v1436
      %1495 = vmatpush.bf16.msra.mxu0 %v1434
      %1496 = vmatpush.bf16.msra.mxu0 %v1432
      %1497 = vmatmul.bf16.gmra.mxu0 %v505
      %v1498 = vpop.f32.mrf.mxu0
      %v1499 = vadd.f32 %v1485, %v1498
      %v1500 = vpop.f32.mrf.mxu0
      %v1501 = vadd.f32 %v1487, %v1500
      %1502 = vdwg.mxu0
      %v1503 = vpack.c.bf16 %v1499, %v1471
      %v1504 = vpack.c.bf16 %v1501, %v1473
      %1505 = vst [vmem:[#allocation2 + $0x30] sm:$0xff] %v1503
      %1506 = vst [vmem:[#allocation2 + $0x38] sm:$0xff] %v1504
      %s1507 = scalar_lea.vmem %s218, 4
      %v1508 = vld [vmem:[%s1507] ss:$8 sm:$0x3]
      %s1509 = scalar_lea.vmem %s218, 21
      %v1510 = vld [vmem:[%s1509] ss:$8 sm:$0x3]
      %s1511 = scalar_lea.vmem %s218, 38
      %v1512 = vld [vmem:[%s1511] ss:$8 sm:$0x3]
      %v1514 = vperm.slane %v1508, 0
      %v1515 = vperm.slane %v1508, 1
      %v1518 = vsub.f32 %v1514, %v236
      %v1519 = vsub.f32 %v1515, %v236
      %v1520 = vsub.f32 %v1514, %v237
      %v1521 = vsub.f32 %v1515, %v237
      %v1522 = vand.u32 2147483647, %v1518
      %v1523 = vand.u32 2147483647, %v1519
      %v1524 = vand.u32 2147483647, %v1520
      %v1525 = vand.u32 2147483647, %v1521
      %v1526 = vsub.f32 1.0, %v1522
      %v1527 = vsub.f32 1.0, %v1523
      %v1528 = vsub.f32 1.0, %v1524
      %v1529 = vsub.f32 1.0, %v1525
      %v1530 = vmax.f32 %v1526, 0.0
      %v1531 = vmax.f32 %v1527, 0.0
      %v1532 = vmax.f32 %v1528, 0.0
      %v1533 = vmax.f32 %v1529, 0.0
      %v1535 = vperm.slane %v1512, 0
      %v1536 = vperm.slane %v1512, 1
      %v1539 = vmul.f32 %v1530, %v1535
      %v1540 = vmul.f32 %v1531, %v1536
      %v1541 = vmul.f32 %v1532, %v1535
      %v1542 = vmul.f32 %v1533, %v1536
      %v1544 = vperm.slane %v1510, 0
      %v1545 = vperm.slane %v1510, 1
      %v1548 = vsub.f32 %v1544, %v236
      %v1549 = vsub.f32 %v1545, %v236
      %v1550 = vsub.f32 %v1544, %v237
      %v1551 = vsub.f32 %v1545, %v237
      %v1552 = vand.u32 2147483647, %v1548
      %v1553 = vand.u32 2147483647, %v1549
      %v1554 = vand.u32 2147483647, %v1550
      %v1555 = vand.u32 2147483647, %v1551
      %v1556 = vsub.f32 1.0, %v1552
      %v1557 = vsub.f32 1.0, %v1553
      %v1558 = vsub.f32 1.0, %v1554
      %v1559 = vsub.f32 1.0, %v1555
      %v1560 = vmax.f32 %v1556, 0.0
      %v1561 = vmax.f32 %v1557, 0.0
      %v1562 = vmax.f32 %v1558, 0.0
      %v1563 = vmax.f32 %v1559, 0.0
      %v1568 = vrot.slane %v1540, 7
      %v1569 = vrot.slane %v1542, 7
      %v1570 = vsel %vm300, %v1539, %v1568
      %v1571 = vsel %vm302, %v1539, %v1568
      %v1572 = vrot.slane %v1571, 1
      %v1573 = vsel %vm305, %v1539, %v1568
      %v1574 = vrot.slane %v1573, 2
      %v1575 = vsel %vm308, %v1539, %v1568
      %v1576 = vrot.slane %v1575, 3
      %v1577 = vsel %vm311, %v1539, %v1568
      %v1578 = vrot.slane %v1577, 4
      %v1579 = vsel %vm314, %v1539, %v1568
      %v1580 = vrot.slane %v1579, 5
      %v1581 = vsel %vm317, %v1539, %v1568
      %v1582 = vrot.slane %v1581, 6
      %v1583 = vsel %vm320, %v1568, %v1539
      %v1584 = vrot.slane %v1583, 7
      %v1585 = vsel %vm300, %v1541, %v1569
      %v1586 = vsel %vm302, %v1541, %v1569
      %v1587 = vrot.slane %v1586, 1
      %v1588 = vsel %vm305, %v1541, %v1569
      %v1589 = vrot.slane %v1588, 2
      %v1590 = vsel %vm308, %v1541, %v1569
      %v1591 = vrot.slane %v1590, 3
      %v1592 = vsel %vm311, %v1541, %v1569
      %v1593 = vrot.slane %v1592, 4
      %v1594 = vsel %vm314, %v1541, %v1569
      %v1595 = vrot.slane %v1594, 5
      %v1596 = vsel %vm317, %v1541, %v1569
      %v1597 = vrot.slane %v1596, 6
      %v1598 = vsel %vm320, %v1569, %v1541
      %v1599 = vrot.slane %v1598, 7
      %v1600 = vperm.slane %v1570, 0
      %v1601 = vperm.slane %v1570, 1
      %v1602 = vperm.slane %v1572, 0
      %v1603 = vperm.slane %v1572, 1
      %v1604 = vperm.slane %v1574, 0
      %v1605 = vperm.slane %v1574, 1
      %v1606 = vperm.slane %v1576, 0
      %v1607 = vperm.slane %v1576, 1
      %v1608 = vperm.slane %v1578, 0
      %v1609 = vperm.slane %v1578, 1
      %v1610 = vperm.slane %v1580, 0
      %v1611 = vperm.slane %v1580, 1
      %v1612 = vperm.slane %v1582, 0
      %v1613 = vperm.slane %v1582, 1
      %v1614 = vperm.slane %v1584, 0
      %v1615 = vperm.slane %v1584, 1
      %v1616 = vperm.slane %v1585, 0
      %v1617 = vperm.slane %v1585, 1
      %v1618 = vperm.slane %v1587, 0
      %v1619 = vperm.slane %v1587, 1
      %v1620 = vperm.slane %v1589, 0
      %v1621 = vperm.slane %v1589, 1
      %v1622 = vperm.slane %v1591, 0
      %v1623 = vperm.slane %v1591, 1
      %v1624 = vperm.slane %v1593, 0
      %v1625 = vperm.slane %v1593, 1
      %v1626 = vperm.slane %v1595, 0
      %v1627 = vperm.slane %v1595, 1
      %v1628 = vperm.slane %v1597, 0
      %v1629 = vperm.slane %v1597, 1
      %v1630 = vperm.slane %v1599, 0
      %v1631 = vperm.slane %v1599, 1
      %v1664 = vmul.f32 %v1600, %v1560
      %v1665 = vmul.f32 %v1601, %v1561
      %v1666 = vmul.f32 %v1600, %v1562
      %v1667 = vmul.f32 %v1601, %v1563
      %v1668 = vmul.f32 %v1602, %v1560
      %v1669 = vmul.f32 %v1603, %v1561
      %v1670 = vmul.f32 %v1602, %v1562
      %v1671 = vmul.f32 %v1603, %v1563
      %v1672 = vmul.f32 %v1604, %v1560
      %v1673 = vmul.f32 %v1605, %v1561
      %v1674 = vmul.f32 %v1604, %v1562
      %v1675 = vmul.f32 %v1605, %v1563
      %v1676 = vmul.f32 %v1606, %v1560
      %v1677 = vmul.f32 %v1607, %v1561
      %v1678 = vmul.f32 %v1606, %v1562
      %v1679 = vmul.f32 %v1607, %v1563
      %v1680 = vmul.f32 %v1608, %v1560
      %v1681 = vmul.f32 %v1609, %v1561
      %v1682 = vmul.f32 %v1608, %v1562
      %v1683 = vmul.f32 %v1609, %v1563
      %v1684 = vmul.f32 %v1610, %v1560
      %v1685 = vmul.f32 %v1611, %v1561
      %v1686 = vmul.f32 %v1610, %v1562
      %v1687 = vmul.f32 %v1611, %v1563
      %v1688 = vmul.f32 %v1612, %v1560
      %v1689 = vmul.f32 %v1613, %v1561
      %v1690 = vmul.f32 %v1612, %v1562
      %v1691 = vmul.f32 %v1613, %v1563
      %v1692 = vmul.f32 %v1614, %v1560
      %v1693 = vmul.f32 %v1615, %v1561
      %v1694 = vmul.f32 %v1614, %v1562
      %v1695 = vmul.f32 %v1615, %v1563
      %v1696 = vmul.f32 %v1616, %v1560
      %v1697 = vmul.f32 %v1617, %v1561
      %v1698 = vmul.f32 %v1616, %v1562
      %v1699 = vmul.f32 %v1617, %v1563
      %v1700 = vmul.f32 %v1618, %v1560
      %v1701 = vmul.f32 %v1619, %v1561
      %v1702 = vmul.f32 %v1618, %v1562
      %v1703 = vmul.f32 %v1619, %v1563
      %v1704 = vmul.f32 %v1620, %v1560
      %v1705 = vmul.f32 %v1621, %v1561
      %v1706 = vmul.f32 %v1620, %v1562
      %v1707 = vmul.f32 %v1621, %v1563
      %v1708 = vmul.f32 %v1622, %v1560
      %v1709 = vmul.f32 %v1623, %v1561
      %v1710 = vmul.f32 %v1622, %v1562
      %v1711 = vmul.f32 %v1623, %v1563
      %v1712 = vmul.f32 %v1624, %v1560
      %v1713 = vmul.f32 %v1625, %v1561
      %v1714 = vmul.f32 %v1624, %v1562
      %v1715 = vmul.f32 %v1625, %v1563
      %v1716 = vmul.f32 %v1626, %v1560
      %v1717 = vmul.f32 %v1627, %v1561
      %v1718 = vmul.f32 %v1626, %v1562
      %v1719 = vmul.f32 %v1627, %v1563
      %v1720 = vmul.f32 %v1628, %v1560
      %v1721 = vmul.f32 %v1629, %v1561
      %v1722 = vmul.f32 %v1628, %v1562
      %v1723 = vmul.f32 %v1629, %v1563
      %v1724 = vmul.f32 %v1630, %v1560
      %v1725 = vmul.f32 %v1631, %v1561
      %v1726 = vmul.f32 %v1630, %v1562
      %v1727 = vmul.f32 %v1631, %v1563
      %v1728 = vpack.c.bf16 %v1666, %v1664
      %v1729 = vpack.c.bf16 %v1667, %v1665
      %v1730 = vpack.c.bf16 %v1670, %v1668
      %v1731 = vpack.c.bf16 %v1671, %v1669
      %v1732 = vpack.c.bf16 %v1674, %v1672
      %v1733 = vpack.c.bf16 %v1675, %v1673
      %v1734 = vpack.c.bf16 %v1678, %v1676
      %v1735 = vpack.c.bf16 %v1679, %v1677
      %v1736 = vpack.c.bf16 %v1682, %v1680
      %v1737 = vpack.c.bf16 %v1683, %v1681
      %v1738 = vpack.c.bf16 %v1686, %v1684
      %v1739 = vpack.c.bf16 %v1687, %v1685
      %v1740 = vpack.c.bf16 %v1690, %v1688
      %v1741 = vpack.c.bf16 %v1691, %v1689
      %v1742 = vpack.c.bf16 %v1694, %v1692
      %v1743 = vpack.c.bf16 %v1695, %v1693
      %v1744 = vpack.c.bf16 %v1698, %v1696
      %v1745 = vpack.c.bf16 %v1699, %v1697
      %v1746 = vpack.c.bf16 %v1702, %v1700
      %v1747 = vpack.c.bf16 %v1703, %v1701
      %v1748 = vpack.c.bf16 %v1706, %v1704
      %v1749 = vpack.c.bf16 %v1707, %v1705
      %v1750 = vpack.c.bf16 %v1710, %v1708
      %v1751 = vpack.c.bf16 %v1711, %v1709
      %v1752 = vpack.c.bf16 %v1714, %v1712
      %v1753 = vpack.c.bf16 %v1715, %v1713
      %v1754 = vpack.c.bf16 %v1718, %v1716
      %v1755 = vpack.c.bf16 %v1719, %v1717
      %v1756 = vpack.c.bf16 %v1722, %v1720
      %v1757 = vpack.c.bf16 %v1723, %v1721
      %v1758 = vpack.c.bf16 %v1726, %v1724
      %v1759 = vpack.c.bf16 %v1727, %v1725
      %1760 = vmatpush.bf16.msra.mxu0 %v1742
      %1761 = vmatpush.bf16.msra.mxu0 %v1740
      %1762 = vmatpush.bf16.msra.mxu0 %v1738
      %1763 = vmatpush.bf16.msra.mxu0 %v1736
      %1764 = vmatpush.bf16.msra.mxu0 %v1734
      %1765 = vmatpush.bf16.msra.mxu0 %v1732
      %1766 = vmatpush.bf16.msra.mxu0 %v1730
      %1767 = vmatpush.bf16.msra.mxu0 %v1728
      %1768 = vmatmul.bf16.gmra.mxu0 %v504
      %v1769 = vpop.f32.mrf.mxu0
      %v1770 = vadd.f32 0.0, %v1769
      %v1771 = vpop.f32.mrf.mxu0
      %v1772 = vadd.f32 0.0, %v1771
      %1773 = vdwg.mxu0
      %1774 = vmatpush.bf16.msra.mxu0 %v1758
      %1775 = vmatpush.bf16.msra.mxu0 %v1756
      %1776 = vmatpush.bf16.msra.mxu0 %v1754
      %1777 = vmatpush.bf16.msra.mxu0 %v1752
      %1778 = vmatpush.bf16.msra.mxu0 %v1750
      %1779 = vmatpush.bf16.msra.mxu0 %v1748
      %1780 = vmatpush.bf16.msra.mxu0 %v1746
      %1781 = vmatpush.bf16.msra.mxu0 %v1744
      %1782 = vmatmul.bf16.gmra.mxu0 %v505
      %v1783 = vpop.f32.mrf.mxu0
      %v1784 = vadd.f32 %v1770, %v1783
      %v1785 = vpop.f32.mrf.mxu0
      %v1786 = vadd.f32 %v1772, %v1785
      %1787 = vdwg.mxu0
      %1788 = vmatpush.bf16.msra.mxu0 %v1743
      %1789 = vmatpush.bf16.msra.mxu0 %v1741
      %1790 = vmatpush.bf16.msra.mxu0 %v1739
      %1791 = vmatpush.bf16.msra.mxu0 %v1737
      %1792 = vmatpush.bf16.msra.mxu0 %v1735
      %1793 = vmatpush.bf16.msra.mxu0 %v1733
      %1794 = vmatpush.bf16.msra.mxu0 %v1731
      %1795 = vmatpush.bf16.msra.mxu0 %v1729
      %1796 = vmatmul.bf16.gmra.mxu0 %v504
      %v1797 = vpop.f32.mrf.mxu0
      %v1798 = vadd.f32 0.0, %v1797
      %v1799 = vpop.f32.mrf.mxu0
      %v1800 = vadd.f32 0.0, %v1799
      %1801 = vdwg.mxu0
      %1802 = vmatpush.bf16.msra.mxu0 %v1759
      %1803 = vmatpush.bf16.msra.mxu0 %v1757
      %1804 = vmatpush.bf16.msra.mxu0 %v1755
      %1805 = vmatpush.bf16.msra.mxu0 %v1753
      %1806 = vmatpush.bf16.msra.mxu0 %v1751
      %1807 = vmatpush.bf16.msra.mxu0 %v1749
      %1808 = vmatpush.bf16.msra.mxu0 %v1747
      %1809 = vmatpush.bf16.msra.mxu0 %v1745
      %1810 = vmatmul.bf16.gmra.mxu0 %v505
      %v1811 = vpop.f32.mrf.mxu0
      %v1812 = vadd.f32 %v1798, %v1811
      %v1813 = vpop.f32.mrf.mxu0
      %v1814 = vadd.f32 %v1800, %v1813
      %1815 = vdwg.mxu0
      %v1816 = vpack.c.bf16 %v1812, %v1784
      %v1817 = vpack.c.bf16 %v1814, %v1786
      %1818 = vst [vmem:[#allocation2 + $0x40] sm:$0xff] %v1816
      %1819 = vst [vmem:[#allocation2 + $0x48] sm:$0xff] %v1817
      %s1820 = scalar_lea.vmem %s218, 5
      %v1821 = vld [vmem:[%s1820] ss:$8 sm:$0x3]
      %s1822 = scalar_lea.vmem %s218, 22
      %v1823 = vld [vmem:[%s1822] ss:$8 sm:$0x3]
      %s1824 = scalar_lea.vmem %s218, 39
      %v1825 = vld [vmem:[%s1824] ss:$8 sm:$0x3]
      %v1827 = vperm.slane %v1821, 0
      %v1828 = vperm.slane %v1821, 1
      %v1831 = vsub.f32 %v1827, %v236
      %v1832 = vsub.f32 %v1828, %v236
      %v1833 = vsub.f32 %v1827, %v237
      %v1834 = vsub.f32 %v1828, %v237
      %v1835 = vand.u32 2147483647, %v1831
      %v1836 = vand.u32 2147483647, %v1832
      %v1837 = vand.u32 2147483647, %v1833
      %v1838 = vand.u32 2147483647, %v1834
      %v1839 = vsub.f32 1.0, %v1835
      %v1840 = vsub.f32 1.0, %v1836
      %v1841 = vsub.f32 1.0, %v1837
      %v1842 = vsub.f32 1.0, %v1838
      %v1843 = vmax.f32 %v1839, 0.0
      %v1844 = vmax.f32 %v1840, 0.0
      %v1845 = vmax.f32 %v1841, 0.0
      %v1846 = vmax.f32 %v1842, 0.0
      %v1848 = vperm.slane %v1825, 0
      %v1849 = vperm.slane %v1825, 1
      %v1852 = vmul.f32 %v1843, %v1848
      %v1853 = vmul.f32 %v1844, %v1849
      %v1854 = vmul.f32 %v1845, %v1848
      %v1855 = vmul.f32 %v1846, %v1849
      %v1857 = vperm.slane %v1823, 0
      %v1858 = vperm.slane %v1823, 1
      %v1861 = vsub.f32 %v1857, %v236
      %v1862 = vsub.f32 %v1858, %v236
      %v1863 = vsub.f32 %v1857, %v237
      %v1864 = vsub.f32 %v1858, %v237
      %v1865 = vand.u32 2147483647, %v1861
      %v1866 = vand.u32 2147483647, %v1862
      %v1867 = vand.u32 2147483647, %v1863
      %v1868 = vand.u32 2147483647, %v1864
      %v1869 = vsub.f32 1.0, %v1865
      %v1870 = vsub.f32 1.0, %v1866
      %v1871 = vsub.f32 1.0, %v1867
      %v1872 = vsub.f32 1.0, %v1868
      %v1873 = vmax.f32 %v1869, 0.0
      %v1874 = vmax.f32 %v1870, 0.0
      %v1875 = vmax.f32 %v1871, 0.0
      %v1876 = vmax.f32 %v1872, 0.0
      %v1881 = vrot.slane %v1853, 7
      %v1882 = vrot.slane %v1855, 7
      %v1883 = vsel %vm300, %v1852, %v1881
      %v1884 = vsel %vm302, %v1852, %v1881
      %v1885 = vrot.slane %v1884, 1
      %v1886 = vsel %vm305, %v1852, %v1881
      %v1887 = vrot.slane %v1886, 2
      %v1888 = vsel %vm308, %v1852, %v1881
      %v1889 = vrot.slane %v1888, 3
      %v1890 = vsel %vm311, %v1852, %v1881
      %v1891 = vrot.slane %v1890, 4
      %v1892 = vsel %vm314, %v1852, %v1881
      %v1893 = vrot.slane %v1892, 5
      %v1894 = vsel %vm317, %v1852, %v1881
      %v1895 = vrot.slane %v1894, 6
      %v1896 = vsel %vm320, %v1881, %v1852
      %v1897 = vrot.slane %v1896, 7
      %v1898 = vsel %vm300, %v1854, %v1882
      %v1899 = vsel %vm302, %v1854, %v1882
      %v1900 = vrot.slane %v1899, 1
      %v1901 = vsel %vm305, %v1854, %v1882
      %v1902 = vrot.slane %v1901, 2
      %v1903 = vsel %vm308, %v1854, %v1882
      %v1904 = vrot.slane %v1903, 3
      %v1905 = vsel %vm311, %v1854, %v1882
      %v1906 = vrot.slane %v1905, 4
      %v1907 = vsel %vm314, %v1854, %v1882
      %v1908 = vrot.slane %v1907, 5
      %v1909 = vsel %vm317, %v1854, %v1882
      %v1910 = vrot.slane %v1909, 6
      %v1911 = vsel %vm320, %v1882, %v1854
      %v1912 = vrot.slane %v1911, 7
      %v1913 = vperm.slane %v1883, 0
      %v1914 = vperm.slane %v1883, 1
      %v1915 = vperm.slane %v1885, 0
      %v1916 = vperm.slane %v1885, 1
      %v1917 = vperm.slane %v1887, 0
      %v1918 = vperm.slane %v1887, 1
      %v1919 = vperm.slane %v1889, 0
      %v1920 = vperm.slane %v1889, 1
      %v1921 = vperm.slane %v1891, 0
      %v1922 = vperm.slane %v1891, 1
      %v1923 = vperm.slane %v1893, 0
      %v1924 = vperm.slane %v1893, 1
      %v1925 = vperm.slane %v1895, 0
      %v1926 = vperm.slane %v1895, 1
      %v1927 = vperm.slane %v1897, 0
      %v1928 = vperm.slane %v1897, 1
      %v1929 = vperm.slane %v1898, 0
      %v1930 = vperm.slane %v1898, 1
      %v1931 = vperm.slane %v1900, 0
      %v1932 = vperm.slane %v1900, 1
      %v1933 = vperm.slane %v1902, 0
      %v1934 = vperm.slane %v1902, 1
      %v1935 = vperm.slane %v1904, 0
      %v1936 = vperm.slane %v1904, 1
      %v1937 = vperm.slane %v1906, 0
      %v1938 = vperm.slane %v1906, 1
      %v1939 = vperm.slane %v1908, 0
      %v1940 = vperm.slane %v1908, 1
      %v1941 = vperm.slane %v1910, 0
      %v1942 = vperm.slane %v1910, 1
      %v1943 = vperm.slane %v1912, 0
      %v1944 = vperm.slane %v1912, 1
      %v1977 = vmul.f32 %v1913, %v1873
      %v1978 = vmul.f32 %v1914, %v1874
      %v1979 = vmul.f32 %v1913, %v1875
      %v1980 = vmul.f32 %v1914, %v1876
      %v1981 = vmul.f32 %v1915, %v1873
      %v1982 = vmul.f32 %v1916, %v1874
      %v1983 = vmul.f32 %v1915, %v1875
      %v1984 = vmul.f32 %v1916, %v1876
      %v1985 = vmul.f32 %v1917, %v1873
      %v1986 = vmul.f32 %v1918, %v1874
      %v1987 = vmul.f32 %v1917, %v1875
      %v1988 = vmul.f32 %v1918, %v1876
      %v1989 = vmul.f32 %v1919, %v1873
      %v1990 = vmul.f32 %v1920, %v1874
      %v1991 = vmul.f32 %v1919, %v1875
      %v1992 = vmul.f32 %v1920, %v1876
      %v1993 = vmul.f32 %v1921, %v1873
      %v1994 = vmul.f32 %v1922, %v1874
      %v1995 = vmul.f32 %v1921, %v1875
      %v1996 = vmul.f32 %v1922, %v1876
      %v1997 = vmul.f32 %v1923, %v1873
      %v1998 = vmul.f32 %v1924, %v1874
      %v1999 = vmul.f32 %v1923, %v1875
      %v2000 = vmul.f32 %v1924, %v1876
      %v2001 = vmul.f32 %v1925, %v1873
      %v2002 = vmul.f32 %v1926, %v1874
      %v2003 = vmul.f32 %v1925, %v1875
      %v2004 = vmul.f32 %v1926, %v1876
      %v2005 = vmul.f32 %v1927, %v1873
      %v2006 = vmul.f32 %v1928, %v1874
      %v2007 = vmul.f32 %v1927, %v1875
      %v2008 = vmul.f32 %v1928, %v1876
      %v2009 = vmul.f32 %v1929, %v1873
      %v2010 = vmul.f32 %v1930, %v1874
      %v2011 = vmul.f32 %v1929, %v1875
      %v2012 = vmul.f32 %v1930, %v1876
      %v2013 = vmul.f32 %v1931, %v1873
      %v2014 = vmul.f32 %v1932, %v1874
      %v2015 = vmul.f32 %v1931, %v1875
      %v2016 = vmul.f32 %v1932, %v1876
      %v2017 = vmul.f32 %v1933, %v1873
      %v2018 = vmul.f32 %v1934, %v1874
      %v2019 = vmul.f32 %v1933, %v1875
      %v2020 = vmul.f32 %v1934, %v1876
      %v2021 = vmul.f32 %v1935, %v1873
      %v2022 = vmul.f32 %v1936, %v1874
      %v2023 = vmul.f32 %v1935, %v1875
      %v2024 = vmul.f32 %v1936, %v1876
      %v2025 = vmul.f32 %v1937, %v1873
      %v2026 = vmul.f32 %v1938, %v1874
      %v2027 = vmul.f32 %v1937, %v1875
      %v2028 = vmul.f32 %v1938, %v1876
      %v2029 = vmul.f32 %v1939, %v1873
      %v2030 = vmul.f32 %v1940, %v1874
      %v2031 = vmul.f32 %v1939, %v1875
      %v2032 = vmul.f32 %v1940, %v1876
      %v2033 = vmul.f32 %v1941, %v1873
      %v2034 = vmul.f32 %v1942, %v1874
      %v2035 = vmul.f32 %v1941, %v1875
      %v2036 = vmul.f32 %v1942, %v1876
      %v2037 = vmul.f32 %v1943, %v1873
      %v2038 = vmul.f32 %v1944, %v1874
      %v2039 = vmul.f32 %v1943, %v1875
      %v2040 = vmul.f32 %v1944, %v1876
      %v2041 = vpack.c.bf16 %v1979, %v1977
      %v2042 = vpack.c.bf16 %v1980, %v1978
      %v2043 = vpack.c.bf16 %v1983, %v1981
      %v2044 = vpack.c.bf16 %v1984, %v1982
      %v2045 = vpack.c.bf16 %v1987, %v1985
      %v2046 = vpack.c.bf16 %v1988, %v1986
      %v2047 = vpack.c.bf16 %v1991, %v1989
      %v2048 = vpack.c.bf16 %v1992, %v1990
      %v2049 = vpack.c.bf16 %v1995, %v1993
      %v2050 = vpack.c.bf16 %v1996, %v1994
      %v2051 = vpack.c.bf16 %v1999, %v1997
      %v2052 = vpack.c.bf16 %v2000, %v1998
      %v2053 = vpack.c.bf16 %v2003, %v2001
      %v2054 = vpack.c.bf16 %v2004, %v2002
      %v2055 = vpack.c.bf16 %v2007, %v2005
      %v2056 = vpack.c.bf16 %v2008, %v2006
      %v2057 = vpack.c.bf16 %v2011, %v2009
      %v2058 = vpack.c.bf16 %v2012, %v2010
      %v2059 = vpack.c.bf16 %v2015, %v2013
      %v2060 = vpack.c.bf16 %v2016, %v2014
      %v2061 = vpack.c.bf16 %v2019, %v2017
      %v2062 = vpack.c.bf16 %v2020, %v2018
      %v2063 = vpack.c.bf16 %v2023, %v2021
      %v2064 = vpack.c.bf16 %v2024, %v2022
      %v2065 = vpack.c.bf16 %v2027, %v2025
      %v2066 = vpack.c.bf16 %v2028, %v2026
      %v2067 = vpack.c.bf16 %v2031, %v2029
      %v2068 = vpack.c.bf16 %v2032, %v2030
      %v2069 = vpack.c.bf16 %v2035, %v2033
      %v2070 = vpack.c.bf16 %v2036, %v2034
      %v2071 = vpack.c.bf16 %v2039, %v2037
      %v2072 = vpack.c.bf16 %v2040, %v2038
      %2073 = vmatpush.bf16.msra.mxu0 %v2055
      %2074 = vmatpush.bf16.msra.mxu0 %v2053
      %2075 = vmatpush.bf16.msra.mxu0 %v2051
      %2076 = vmatpush.bf16.msra.mxu0 %v2049
      %2077 = vmatpush.bf16.msra.mxu0 %v2047
      %2078 = vmatpush.bf16.msra.mxu0 %v2045
      %2079 = vmatpush.bf16.msra.mxu0 %v2043
      %2080 = vmatpush.bf16.msra.mxu0 %v2041
      %2081 = vmatmul.bf16.gmra.mxu0 %v504
      %v2082 = vpop.f32.mrf.mxu0
      %v2083 = vadd.f32 0.0, %v2082
      %v2084 = vpop.f32.mrf.mxu0
      %v2085 = vadd.f32 0.0, %v2084
      %2086 = vdwg.mxu0
      %2087 = vmatpush.bf16.msra.mxu0 %v2071
      %2088 = vmatpush.bf16.msra.mxu0 %v2069
      %2089 = vmatpush.bf16.msra.mxu0 %v2067
      %2090 = vmatpush.bf16.msra.mxu0 %v2065
      %2091 = vmatpush.bf16.msra.mxu0 %v2063
      %2092 = vmatpush.bf16.msra.mxu0 %v2061
      %2093 = vmatpush.bf16.msra.mxu0 %v2059
      %2094 = vmatpush.bf16.msra.mxu0 %v2057
      %2095 = vmatmul.bf16.gmra.mxu0 %v505
      %v2096 = vpop.f32.mrf.mxu0
      %v2097 = vadd.f32 %v2083, %v2096
      %v2098 = vpop.f32.mrf.mxu0
      %v2099 = vadd.f32 %v2085, %v2098
      %2100 = vdwg.mxu0
      %2101 = vmatpush.bf16.msra.mxu0 %v2056
      %2102 = vmatpush.bf16.msra.mxu0 %v2054
      %2103 = vmatpush.bf16.msra.mxu0 %v2052
      %2104 = vmatpush.bf16.msra.mxu0 %v2050
      %2105 = vmatpush.bf16.msra.mxu0 %v2048
      %2106 = vmatpush.bf16.msra.mxu0 %v2046
      %2107 = vmatpush.bf16.msra.mxu0 %v2044
      %2108 = vmatpush.bf16.msra.mxu0 %v2042
      %2109 = vmatmul.bf16.gmra.mxu0 %v504
      %v2110 = vpop.f32.mrf.mxu0
      %v2111 = vadd.f32 0.0, %v2110
      %v2112 = vpop.f32.mrf.mxu0
      %v2113 = vadd.f32 0.0, %v2112
      %2114 = vdwg.mxu0
      %2115 = vmatpush.bf16.msra.mxu0 %v2072
      %2116 = vmatpush.bf16.msra.mxu0 %v2070
      %2117 = vmatpush.bf16.msra.mxu0 %v2068
      %2118 = vmatpush.bf16.msra.mxu0 %v2066
      %2119 = vmatpush.bf16.msra.mxu0 %v2064
      %2120 = vmatpush.bf16.msra.mxu0 %v2062
      %2121 = vmatpush.bf16.msra.mxu0 %v2060
      %2122 = vmatpush.bf16.msra.mxu0 %v2058
      %2123 = vmatmul.bf16.gmra.mxu0 %v505
      %v2124 = vpop.f32.mrf.mxu0
      %v2125 = vadd.f32 %v2111, %v2124
      %v2126 = vpop.f32.mrf.mxu0
      %v2127 = vadd.f32 %v2113, %v2126
      %2128 = vdwg.mxu0
      %v2129 = vpack.c.bf16 %v2125, %v2097
      %v2130 = vpack.c.bf16 %v2127, %v2099
      %2131 = vst [vmem:[#allocation2 + $0x50] sm:$0xff] %v2129
      %2132 = vst [vmem:[#allocation2 + $0x58] sm:$0xff] %v2130
      %s2133 = scalar_lea.vmem %s218, 6
      %v2134 = vld [vmem:[%s2133] ss:$8 sm:$0x3]
      %s2135 = scalar_lea.vmem %s218, 23
      %v2136 = vld [vmem:[%s2135] ss:$8 sm:$0x3]
      %s2137 = scalar_lea.vmem %s218, 48
      %v2138 = vld [vmem:[%s2137] ss:$8 sm:$0x3]
      %v2140 = vperm.slane %v2134, 0
      %v2141 = vperm.slane %v2134, 1
      %v2144 = vsub.f32 %v2140, %v236
      %v2145 = vsub.f32 %v2141, %v236
      %v2146 = vsub.f32 %v2140, %v237
      %v2147 = vsub.f32 %v2141, %v237
      %v2148 = vand.u32 2147483647, %v2144
      %v2149 = vand.u32 2147483647, %v2145
      %v2150 = vand.u32 2147483647, %v2146
      %v2151 = vand.u32 2147483647, %v2147
      %v2152 = vsub.f32 1.0, %v2148
      %v2153 = vsub.f32 1.0, %v2149
      %v2154 = vsub.f32 1.0, %v2150
      %v2155 = vsub.f32 1.0, %v2151
      %v2156 = vmax.f32 %v2152, 0.0
      %v2157 = vmax.f32 %v2153, 0.0
      %v2158 = vmax.f32 %v2154, 0.0
      %v2159 = vmax.f32 %v2155, 0.0
      %v2161 = vperm.slane %v2138, 0
      %v2162 = vperm.slane %v2138, 1
      %v2165 = vmul.f32 %v2156, %v2161
      %v2166 = vmul.f32 %v2157, %v2162
      %v2167 = vmul.f32 %v2158, %v2161
      %v2168 = vmul.f32 %v2159, %v2162
      %v2170 = vperm.slane %v2136, 0
      %v2171 = vperm.slane %v2136, 1
      %v2174 = vsub.f32 %v2170, %v236
      %v2175 = vsub.f32 %v2171, %v236
      %v2176 = vsub.f32 %v2170, %v237
      %v2177 = vsub.f32 %v2171, %v237
      %v2178 = vand.u32 2147483647, %v2174
      %v2179 = vand.u32 2147483647, %v2175
      %v2180 = vand.u32 2147483647, %v2176
      %v2181 = vand.u32 2147483647, %v2177
      %v2182 = vsub.f32 1.0, %v2178
      %v2183 = vsub.f32 1.0, %v2179
      %v2184 = vsub.f32 1.0, %v2180
      %v2185 = vsub.f32 1.0, %v2181
      %v2186 = vmax.f32 %v2182, 0.0
      %v2187 = vmax.f32 %v2183, 0.0
      %v2188 = vmax.f32 %v2184, 0.0
      %v2189 = vmax.f32 %v2185, 0.0
      %v2194 = vrot.slane %v2166, 7
      %v2195 = vrot.slane %v2168, 7
      %v2196 = vsel %vm300, %v2165, %v2194
      %v2197 = vsel %vm302, %v2165, %v2194
      %v2198 = vrot.slane %v2197, 1
      %v2199 = vsel %vm305, %v2165, %v2194
      %v2200 = vrot.slane %v2199, 2
      %v2201 = vsel %vm308, %v2165, %v2194
      %v2202 = vrot.slane %v2201, 3
      %v2203 = vsel %vm311, %v2165, %v2194
      %v2204 = vrot.slane %v2203, 4
      %v2205 = vsel %vm314, %v2165, %v2194
      %v2206 = vrot.slane %v2205, 5
      %v2207 = vsel %vm317, %v2165, %v2194
      %v2208 = vrot.slane %v2207, 6
      %v2209 = vsel %vm320, %v2194, %v2165
      %v2210 = vrot.slane %v2209, 7
      %v2211 = vsel %vm300, %v2167, %v2195
      %v2212 = vsel %vm302, %v2167, %v2195
      %v2213 = vrot.slane %v2212, 1
      %v2214 = vsel %vm305, %v2167, %v2195
      %v2215 = vrot.slane %v2214, 2
      %v2216 = vsel %vm308, %v2167, %v2195
      %v2217 = vrot.slane %v2216, 3
      %v2218 = vsel %vm311, %v2167, %v2195
      %v2219 = vrot.slane %v2218, 4
      %v2220 = vsel %vm314, %v2167, %v2195
      %v2221 = vrot.slane %v2220, 5
      %v2222 = vsel %vm317, %v2167, %v2195
      %v2223 = vrot.slane %v2222, 6
      %v2224 = vsel %vm320, %v2195, %v2167
      %v2225 = vrot.slane %v2224, 7
      %v2226 = vperm.slane %v2196, 0
      %v2227 = vperm.slane %v2196, 1
      %v2228 = vperm.slane %v2198, 0
      %v2229 = vperm.slane %v2198, 1
      %v2230 = vperm.slane %v2200, 0
      %v2231 = vperm.slane %v2200, 1
      %v2232 = vperm.slane %v2202, 0
      %v2233 = vperm.slane %v2202, 1
      %v2234 = vperm.slane %v2204, 0
      %v2235 = vperm.slane %v2204, 1
      %v2236 = vperm.slane %v2206, 0
      %v2237 = vperm.slane %v2206, 1
      %v2238 = vperm.slane %v2208, 0
      %v2239 = vperm.slane %v2208, 1
      %v2240 = vperm.slane %v2210, 0
      %v2241 = vperm.slane %v2210, 1
      %v2242 = vperm.slane %v2211, 0
      %v2243 = vperm.slane %v2211, 1
      %v2244 = vperm.slane %v2213, 0
      %v2245 = vperm.slane %v2213, 1
      %v2246 = vperm.slane %v2215, 0
      %v2247 = vperm.slane %v2215, 1
      %v2248 = vperm.slane %v2217, 0
      %v2249 = vperm.slane %v2217, 1
      %v2250 = vperm.slane %v2219, 0
      %v2251 = vperm.slane %v2219, 1
      %v2252 = vperm.slane %v2221, 0
      %v2253 = vperm.slane %v2221, 1
      %v2254 = vperm.slane %v2223, 0
      %v2255 = vperm.slane %v2223, 1
      %v2256 = vperm.slane %v2225, 0
      %v2257 = vperm.slane %v2225, 1
      %v2290 = vmul.f32 %v2226, %v2186
      %v2291 = vmul.f32 %v2227, %v2187
      %v2292 = vmul.f32 %v2226, %v2188
      %v2293 = vmul.f32 %v2227, %v2189
      %v2294 = vmul.f32 %v2228, %v2186
      %v2295 = vmul.f32 %v2229, %v2187
      %v2296 = vmul.f32 %v2228, %v2188
      %v2297 = vmul.f32 %v2229, %v2189
      %v2298 = vmul.f32 %v2230, %v2186
      %v2299 = vmul.f32 %v2231, %v2187
      %v2300 = vmul.f32 %v2230, %v2188
      %v2301 = vmul.f32 %v2231, %v2189
      %v2302 = vmul.f32 %v2232, %v2186
      %v2303 = vmul.f32 %v2233, %v2187
      %v2304 = vmul.f32 %v2232, %v2188
      %v2305 = vmul.f32 %v2233, %v2189
      %v2306 = vmul.f32 %v2234, %v2186
      %v2307 = vmul.f32 %v2235, %v2187
      %v2308 = vmul.f32 %v2234, %v2188
      %v2309 = vmul.f32 %v2235, %v2189
      %v2310 = vmul.f32 %v2236, %v2186
      %v2311 = vmul.f32 %v2237, %v2187
      %v2312 = vmul.f32 %v2236, %v2188
      %v2313 = vmul.f32 %v2237, %v2189
      %v2314 = vmul.f32 %v2238, %v2186
      %v2315 = vmul.f32 %v2239, %v2187
      %v2316 = vmul.f32 %v2238, %v2188
      %v2317 = vmul.f32 %v2239, %v2189
      %v2318 = vmul.f32 %v2240, %v2186
      %v2319 = vmul.f32 %v2241, %v2187
      %v2320 = vmul.f32 %v2240, %v2188
      %v2321 = vmul.f32 %v2241, %v2189
      %v2322 = vmul.f32 %v2242, %v2186
      %v2323 = vmul.f32 %v2243, %v2187
      %v2324 = vmul.f32 %v2242, %v2188
      %v2325 = vmul.f32 %v2243, %v2189
      %v2326 = vmul.f32 %v2244, %v2186
      %v2327 = vmul.f32 %v2245, %v2187
      %v2328 = vmul.f32 %v2244, %v2188
      %v2329 = vmul.f32 %v2245, %v2189
      %v2330 = vmul.f32 %v2246, %v2186
      %v2331 = vmul.f32 %v2247, %v2187
      %v2332 = vmul.f32 %v2246, %v2188
      %v2333 = vmul.f32 %v2247, %v2189
      %v2334 = vmul.f32 %v2248, %v2186
      %v2335 = vmul.f32 %v2249, %v2187
      %v2336 = vmul.f32 %v2248, %v2188
      %v2337 = vmul.f32 %v2249, %v2189
      %v2338 = vmul.f32 %v2250, %v2186
      %v2339 = vmul.f32 %v2251, %v2187
      %v2340 = vmul.f32 %v2250, %v2188
      %v2341 = vmul.f32 %v2251, %v2189
      %v2342 = vmul.f32 %v2252, %v2186
      %v2343 = vmul.f32 %v2253, %v2187
      %v2344 = vmul.f32 %v2252, %v2188
      %v2345 = vmul.f32 %v2253, %v2189
      %v2346 = vmul.f32 %v2254, %v2186
      %v2347 = vmul.f32 %v2255, %v2187
      %v2348 = vmul.f32 %v2254, %v2188
      %v2349 = vmul.f32 %v2255, %v2189
      %v2350 = vmul.f32 %v2256, %v2186
      %v2351 = vmul.f32 %v2257, %v2187
      %v2352 = vmul.f32 %v2256, %v2188
      %v2353 = vmul.f32 %v2257, %v2189
      %v2354 = vpack.c.bf16 %v2292, %v2290
      %v2355 = vpack.c.bf16 %v2293, %v2291
      %v2356 = vpack.c.bf16 %v2296, %v2294
      %v2357 = vpack.c.bf16 %v2297, %v2295
      %v2358 = vpack.c.bf16 %v2300, %v2298
      %v2359 = vpack.c.bf16 %v2301, %v2299
      %v2360 = vpack.c.bf16 %v2304, %v2302
      %v2361 = vpack.c.bf16 %v2305, %v2303
      %v2362 = vpack.c.bf16 %v2308, %v2306
      %v2363 = vpack.c.bf16 %v2309, %v2307
      %v2364 = vpack.c.bf16 %v2312, %v2310
      %v2365 = vpack.c.bf16 %v2313, %v2311
      %v2366 = vpack.c.bf16 %v2316, %v2314
      %v2367 = vpack.c.bf16 %v2317, %v2315
      %v2368 = vpack.c.bf16 %v2320, %v2318
      %v2369 = vpack.c.bf16 %v2321, %v2319
      %v2370 = vpack.c.bf16 %v2324, %v2322
      %v2371 = vpack.c.bf16 %v2325, %v2323
      %v2372 = vpack.c.bf16 %v2328, %v2326
      %v2373 = vpack.c.bf16 %v2329, %v2327
      %v2374 = vpack.c.bf16 %v2332, %v2330
      %v2375 = vpack.c.bf16 %v2333, %v2331
      %v2376 = vpack.c.bf16 %v2336, %v2334
      %v2377 = vpack.c.bf16 %v2337, %v2335
      %v2378 = vpack.c.bf16 %v2340, %v2338
      %v2379 = vpack.c.bf16 %v2341, %v2339
      %v2380 = vpack.c.bf16 %v2344, %v2342
      %v2381 = vpack.c.bf16 %v2345, %v2343
      %v2382 = vpack.c.bf16 %v2348, %v2346
      %v2383 = vpack.c.bf16 %v2349, %v2347
      %v2384 = vpack.c.bf16 %v2352, %v2350
      %v2385 = vpack.c.bf16 %v2353, %v2351
      %2386 = vmatpush.bf16.msra.mxu0 %v2368
      %2387 = vmatpush.bf16.msra.mxu0 %v2366
      %2388 = vmatpush.bf16.msra.mxu0 %v2364
      %2389 = vmatpush.bf16.msra.mxu0 %v2362
      %2390 = vmatpush.bf16.msra.mxu0 %v2360
      %2391 = vmatpush.bf16.msra.mxu0 %v2358
      %2392 = vmatpush.bf16.msra.mxu0 %v2356
      %2393 = vmatpush.bf16.msra.mxu0 %v2354
      %2394 = vmatmul.bf16.gmra.mxu0 %v504
      %v2395 = vpop.f32.mrf.mxu0
      %v2396 = vadd.f32 0.0, %v2395
      %v2397 = vpop.f32.mrf.mxu0
      %v2398 = vadd.f32 0.0, %v2397
      %2399 = vdwg.mxu0
      %2400 = vmatpush.bf16.msra.mxu0 %v2384
      %2401 = vmatpush.bf16.msra.mxu0 %v2382
      %2402 = vmatpush.bf16.msra.mxu0 %v2380
      %2403 = vmatpush.bf16.msra.mxu0 %v2378
      %2404 = vmatpush.bf16.msra.mxu0 %v2376
      %2405 = vmatpush.bf16.msra.mxu0 %v2374
      %2406 = vmatpush.bf16.msra.mxu0 %v2372
      %2407 = vmatpush.bf16.msra.mxu0 %v2370
      %2408 = vmatmul.bf16.gmra.mxu0 %v505
      %v2409 = vpop.f32.mrf.mxu0
      %v2410 = vadd.f32 %v2396, %v2409
      %v2411 = vpop.f32.mrf.mxu0
      %v2412 = vadd.f32 %v2398, %v2411
      %2413 = vdwg.mxu0
      %2414 = vmatpush.bf16.msra.mxu0 %v2369
      %2415 = vmatpush.bf16.msra.mxu0 %v2367
      %2416 = vmatpush.bf16.msra.mxu0 %v2365
      %2417 = vmatpush.bf16.msra.mxu0 %v2363
      %2418 = vmatpush.bf16.msra.mxu0 %v2361
      %2419 = vmatpush.bf16.msra.mxu0 %v2359
      %2420 = vmatpush.bf16.msra.mxu0 %v2357
      %2421 = vmatpush.bf16.msra.mxu0 %v2355
      %2422 = vmatmul.bf16.gmra.mxu0 %v504
      %v2423 = vpop.f32.mrf.mxu0
      %v2424 = vadd.f32 0.0, %v2423
      %v2425 = vpop.f32.mrf.mxu0
      %v2426 = vadd.f32 0.0, %v2425
      %2427 = vdwg.mxu0
      %2428 = vmatpush.bf16.msra.mxu0 %v2385
      %2429 = vmatpush.bf16.msra.mxu0 %v2383
      %2430 = vmatpush.bf16.msra.mxu0 %v2381
      %2431 = vmatpush.bf16.msra.mxu0 %v2379
      %2432 = vmatpush.bf16.msra.mxu0 %v2377
      %2433 = vmatpush.bf16.msra.mxu0 %v2375
      %2434 = vmatpush.bf16.msra.mxu0 %v2373
      %2435 = vmatpush.bf16.msra.mxu0 %v2371
      %2436 = vmatmul.bf16.gmra.mxu0 %v505
      %v2437 = vpop.f32.mrf.mxu0
      %v2438 = vadd.f32 %v2424, %v2437
      %v2439 = vpop.f32.mrf.mxu0
      %v2440 = vadd.f32 %v2426, %v2439
      %2441 = vdwg.mxu0
      %v2442 = vpack.c.bf16 %v2438, %v2410
      %v2443 = vpack.c.bf16 %v2440, %v2412
      %2444 = vst [vmem:[#allocation2 + $0x60] sm:$0xff] %v2442
      %2445 = vst [vmem:[#allocation2 + $0x68] sm:$0xff] %v2443
      %s2446 = scalar_lea.vmem %s218, 7
      %v2447 = vld [vmem:[%s2446] ss:$8 sm:$0x3]
      %s2448 = scalar_lea.vmem %s218, 32
      %v2449 = vld [vmem:[%s2448] ss:$8 sm:$0x3]
      %s2450 = scalar_lea.vmem %s218, 49
      %v2451 = vld [vmem:[%s2450] ss:$8 sm:$0x3]
      %v2453 = vperm.slane %v2447, 0
      %v2454 = vperm.slane %v2447, 1
      %v2457 = vsub.f32 %v2453, %v236
      %v2458 = vsub.f32 %v2454, %v236
      %v2459 = vsub.f32 %v2453, %v237
      %v2460 = vsub.f32 %v2454, %v237
      %v2461 = vand.u32 2147483647, %v2457
      %v2462 = vand.u32 2147483647, %v2458
      %v2463 = vand.u32 2147483647, %v2459
      %v2464 = vand.u32 2147483647, %v2460
      %v2465 = vsub.f32 1.0, %v2461
      %v2466 = vsub.f32 1.0, %v2462
      %v2467 = vsub.f32 1.0, %v2463
      %v2468 = vsub.f32 1.0, %v2464
      %v2469 = vmax.f32 %v2465, 0.0
      %v2470 = vmax.f32 %v2466, 0.0
      %v2471 = vmax.f32 %v2467, 0.0
      %v2472 = vmax.f32 %v2468, 0.0
      %v2474 = vperm.slane %v2451, 0
      %v2475 = vperm.slane %v2451, 1
      %v2478 = vmul.f32 %v2469, %v2474
      %v2479 = vmul.f32 %v2470, %v2475
      %v2480 = vmul.f32 %v2471, %v2474
      %v2481 = vmul.f32 %v2472, %v2475
      %v2483 = vperm.slane %v2449, 0
      %v2484 = vperm.slane %v2449, 1
      %v2487 = vsub.f32 %v2483, %v236
      %v2488 = vsub.f32 %v2484, %v236
      %v2489 = vsub.f32 %v2483, %v237
      %v2490 = vsub.f32 %v2484, %v237
      %v2491 = vand.u32 2147483647, %v2487
      %v2492 = vand.u32 2147483647, %v2488
      %v2493 = vand.u32 2147483647, %v2489
      %v2494 = vand.u32 2147483647, %v2490
      %v2495 = vsub.f32 1.0, %v2491
      %v2496 = vsub.f32 1.0, %v2492
      %v2497 = vsub.f32 1.0, %v2493
      %v2498 = vsub.f32 1.0, %v2494
      %v2499 = vmax.f32 %v2495, 0.0
      %v2500 = vmax.f32 %v2496, 0.0
      %v2501 = vmax.f32 %v2497, 0.0
      %v2502 = vmax.f32 %v2498, 0.0
      %v2507 = vrot.slane %v2479, 7
      %v2508 = vrot.slane %v2481, 7
      %v2509 = vsel %vm300, %v2478, %v2507
      %v2510 = vsel %vm302, %v2478, %v2507
      %v2511 = vrot.slane %v2510, 1
      %v2512 = vsel %vm305, %v2478, %v2507
      %v2513 = vrot.slane %v2512, 2
      %v2514 = vsel %vm308, %v2478, %v2507
      %v2515 = vrot.slane %v2514, 3
      %v2516 = vsel %vm311, %v2478, %v2507
      %v2517 = vrot.slane %v2516, 4
      %v2518 = vsel %vm314, %v2478, %v2507
      %v2519 = vrot.slane %v2518, 5
      %v2520 = vsel %vm317, %v2478, %v2507
      %v2521 = vrot.slane %v2520, 6
      %v2522 = vsel %vm320, %v2507, %v2478
      %v2523 = vrot.slane %v2522, 7
      %v2524 = vsel %vm300, %v2480, %v2508
      %v2525 = vsel %vm302, %v2480, %v2508
      %v2526 = vrot.slane %v2525, 1
      %v2527 = vsel %vm305, %v2480, %v2508
      %v2528 = vrot.slane %v2527, 2
      %v2529 = vsel %vm308, %v2480, %v2508
      %v2530 = vrot.slane %v2529, 3
      %v2531 = vsel %vm311, %v2480, %v2508
      %v2532 = vrot.slane %v2531, 4
      %v2533 = vsel %vm314, %v2480, %v2508
      %v2534 = vrot.slane %v2533, 5
      %v2535 = vsel %vm317, %v2480, %v2508
      %v2536 = vrot.slane %v2535, 6
      %v2537 = vsel %vm320, %v2508, %v2480
      %v2538 = vrot.slane %v2537, 7
      %v2539 = vperm.slane %v2509, 0
      %v2540 = vperm.slane %v2509, 1
      %v2541 = vperm.slane %v2511, 0
      %v2542 = vperm.slane %v2511, 1
      %v2543 = vperm.slane %v2513, 0
      %v2544 = vperm.slane %v2513, 1
      %v2545 = vperm.slane %v2515, 0
      %v2546 = vperm.slane %v2515, 1
      %v2547 = vperm.slane %v2517, 0
      %v2548 = vperm.slane %v2517, 1
      %v2549 = vperm.slane %v2519, 0
      %v2550 = vperm.slane %v2519, 1
      %v2551 = vperm.slane %v2521, 0
      %v2552 = vperm.slane %v2521, 1
      %v2553 = vperm.slane %v2523, 0
      %v2554 = vperm.slane %v2523, 1
      %v2555 = vperm.slane %v2524, 0
      %v2556 = vperm.slane %v2524, 1
      %v2557 = vperm.slane %v2526, 0
      %v2558 = vperm.slane %v2526, 1
      %v2559 = vperm.slane %v2528, 0
      %v2560 = vperm.slane %v2528, 1
      %v2561 = vperm.slane %v2530, 0
      %v2562 = vperm.slane %v2530, 1
      %v2563 = vperm.slane %v2532, 0
      %v2564 = vperm.slane %v2532, 1
      %v2565 = vperm.slane %v2534, 0
      %v2566 = vperm.slane %v2534, 1
      %v2567 = vperm.slane %v2536, 0
      %v2568 = vperm.slane %v2536, 1
      %v2569 = vperm.slane %v2538, 0
      %v2570 = vperm.slane %v2538, 1
      %v2603 = vmul.f32 %v2539, %v2499
      %v2604 = vmul.f32 %v2540, %v2500
      %v2605 = vmul.f32 %v2539, %v2501
      %v2606 = vmul.f32 %v2540, %v2502
      %v2607 = vmul.f32 %v2541, %v2499
      %v2608 = vmul.f32 %v2542, %v2500
      %v2609 = vmul.f32 %v2541, %v2501
      %v2610 = vmul.f32 %v2542, %v2502
      %v2611 = vmul.f32 %v2543, %v2499
      %v2612 = vmul.f32 %v2544, %v2500
      %v2613 = vmul.f32 %v2543, %v2501
      %v2614 = vmul.f32 %v2544, %v2502
      %v2615 = vmul.f32 %v2545, %v2499
      %v2616 = vmul.f32 %v2546, %v2500
      %v2617 = vmul.f32 %v2545, %v2501
      %v2618 = vmul.f32 %v2546, %v2502
      %v2619 = vmul.f32 %v2547, %v2499
      %v2620 = vmul.f32 %v2548, %v2500
      %v2621 = vmul.f32 %v2547, %v2501
      %v2622 = vmul.f32 %v2548, %v2502
      %v2623 = vmul.f32 %v2549, %v2499
      %v2624 = vmul.f32 %v2550, %v2500
      %v2625 = vmul.f32 %v2549, %v2501
      %v2626 = vmul.f32 %v2550, %v2502
      %v2627 = vmul.f32 %v2551, %v2499
      %v2628 = vmul.f32 %v2552, %v2500
      %v2629 = vmul.f32 %v2551, %v2501
      %v2630 = vmul.f32 %v2552, %v2502
      %v2631 = vmul.f32 %v2553, %v2499
      %v2632 = vmul.f32 %v2554, %v2500
      %v2633 = vmul.f32 %v2553, %v2501
      %v2634 = vmul.f32 %v2554, %v2502
      %v2635 = vmul.f32 %v2555, %v2499
      %v2636 = vmul.f32 %v2556, %v2500
      %v2637 = vmul.f32 %v2555, %v2501
      %v2638 = vmul.f32 %v2556, %v2502
      %v2639 = vmul.f32 %v2557, %v2499
      %v2640 = vmul.f32 %v2558, %v2500
      %v2641 = vmul.f32 %v2557, %v2501
      %v2642 = vmul.f32 %v2558, %v2502
      %v2643 = vmul.f32 %v2559, %v2499
      %v2644 = vmul.f32 %v2560, %v2500
      %v2645 = vmul.f32 %v2559, %v2501
      %v2646 = vmul.f32 %v2560, %v2502
      %v2647 = vmul.f32 %v2561, %v2499
      %v2648 = vmul.f32 %v2562, %v2500
      %v2649 = vmul.f32 %v2561, %v2501
      %v2650 = vmul.f32 %v2562, %v2502
      %v2651 = vmul.f32 %v2563, %v2499
      %v2652 = vmul.f32 %v2564, %v2500
      %v2653 = vmul.f32 %v2563, %v2501
      %v2654 = vmul.f32 %v2564, %v2502
      %v2655 = vmul.f32 %v2565, %v2499
      %v2656 = vmul.f32 %v2566, %v2500
      %v2657 = vmul.f32 %v2565, %v2501
      %v2658 = vmul.f32 %v2566, %v2502
      %v2659 = vmul.f32 %v2567, %v2499
      %v2660 = vmul.f32 %v2568, %v2500
      %v2661 = vmul.f32 %v2567, %v2501
      %v2662 = vmul.f32 %v2568, %v2502
      %v2663 = vmul.f32 %v2569, %v2499
      %v2664 = vmul.f32 %v2570, %v2500
      %v2665 = vmul.f32 %v2569, %v2501
      %v2666 = vmul.f32 %v2570, %v2502
      %v2667 = vpack.c.bf16 %v2605, %v2603
      %v2668 = vpack.c.bf16 %v2606, %v2604
      %v2669 = vpack.c.bf16 %v2609, %v2607
      %v2670 = vpack.c.bf16 %v2610, %v2608
      %v2671 = vpack.c.bf16 %v2613, %v2611
      %v2672 = vpack.c.bf16 %v2614, %v2612
      %v2673 = vpack.c.bf16 %v2617, %v2615
      %v2674 = vpack.c.bf16 %v2618, %v2616
      %v2675 = vpack.c.bf16 %v2621, %v2619
      %v2676 = vpack.c.bf16 %v2622, %v2620
      %v2677 = vpack.c.bf16 %v2625, %v2623
      %v2678 = vpack.c.bf16 %v2626, %v2624
      %v2679 = vpack.c.bf16 %v2629, %v2627
      %v2680 = vpack.c.bf16 %v2630, %v2628
      %v2681 = vpack.c.bf16 %v2633, %v2631
      %v2682 = vpack.c.bf16 %v2634, %v2632
      %v2683 = vpack.c.bf16 %v2637, %v2635
      %v2684 = vpack.c.bf16 %v2638, %v2636
      %v2685 = vpack.c.bf16 %v2641, %v2639
      %v2686 = vpack.c.bf16 %v2642, %v2640
      %v2687 = vpack.c.bf16 %v2645, %v2643
      %v2688 = vpack.c.bf16 %v2646, %v2644
      %v2689 = vpack.c.bf16 %v2649, %v2647
      %v2690 = vpack.c.bf16 %v2650, %v2648
      %v2691 = vpack.c.bf16 %v2653, %v2651
      %v2692 = vpack.c.bf16 %v2654, %v2652
      %v2693 = vpack.c.bf16 %v2657, %v2655
      %v2694 = vpack.c.bf16 %v2658, %v2656
      %v2695 = vpack.c.bf16 %v2661, %v2659
      %v2696 = vpack.c.bf16 %v2662, %v2660
      %v2697 = vpack.c.bf16 %v2665, %v2663
      %v2698 = vpack.c.bf16 %v2666, %v2664
      %2699 = vmatpush.bf16.msra.mxu0 %v2681
      %2700 = vmatpush.bf16.msra.mxu0 %v2679
      %2701 = vmatpush.bf16.msra.mxu0 %v2677
      %2702 = vmatpush.bf16.msra.mxu0 %v2675
      %2703 = vmatpush.bf16.msra.mxu0 %v2673
      %2704 = vmatpush.bf16.msra.mxu0 %v2671
      %2705 = vmatpush.bf16.msra.mxu0 %v2669
      %2706 = vmatpush.bf16.msra.mxu0 %v2667
      %2707 = vmatmul.bf16.gmra.mxu0 %v504
      %v2708 = vpop.f32.mrf.mxu0
      %v2709 = vadd.f32 0.0, %v2708
      %v2710 = vpop.f32.mrf.mxu0
      %v2711 = vadd.f32 0.0, %v2710
      %2712 = vdwg.mxu0
      %2713 = vmatpush.bf16.msra.mxu0 %v2697
      %2714 = vmatpush.bf16.msra.mxu0 %v2695
      %2715 = vmatpush.bf16.msra.mxu0 %v2693
      %2716 = vmatpush.bf16.msra.mxu0 %v2691
      %2717 = vmatpush.bf16.msra.mxu0 %v2689
      %2718 = vmatpush.bf16.msra.mxu0 %v2687
      %2719 = vmatpush.bf16.msra.mxu0 %v2685
      %2720 = vmatpush.bf16.msra.mxu0 %v2683
      %2721 = vmatmul.bf16.gmra.mxu0 %v505
      %v2722 = vpop.f32.mrf.mxu0
      %v2723 = vadd.f32 %v2709, %v2722
      %v2724 = vpop.f32.mrf.mxu0
      %v2725 = vadd.f32 %v2711, %v2724
      %2726 = vdwg.mxu0
      %2727 = vmatpush.bf16.msra.mxu0 %v2682
      %2728 = vmatpush.bf16.msra.mxu0 %v2680
      %2729 = vmatpush.bf16.msra.mxu0 %v2678
      %2730 = vmatpush.bf16.msra.mxu0 %v2676
      %2731 = vmatpush.bf16.msra.mxu0 %v2674
      %2732 = vmatpush.bf16.msra.mxu0 %v2672
      %2733 = vmatpush.bf16.msra.mxu0 %v2670
      %2734 = vmatpush.bf16.msra.mxu0 %v2668
      %2735 = vmatmul.bf16.gmra.mxu0 %v504
      %v2736 = vpop.f32.mrf.mxu0
      %v2737 = vadd.f32 0.0, %v2736
      %v2738 = vpop.f32.mrf.mxu0
      %v2739 = vadd.f32 0.0, %v2738
      %2740 = vdwg.mxu0
      %2741 = vmatpush.bf16.msra.mxu0 %v2698
      %2742 = vmatpush.bf16.msra.mxu0 %v2696
      %2743 = vmatpush.bf16.msra.mxu0 %v2694
      %2744 = vmatpush.bf16.msra.mxu0 %v2692
      %2745 = vmatpush.bf16.msra.mxu0 %v2690
      %2746 = vmatpush.bf16.msra.mxu0 %v2688
      %2747 = vmatpush.bf16.msra.mxu0 %v2686
      %2748 = vmatpush.bf16.msra.mxu0 %v2684
      %2749 = vmatmul.bf16.gmra.mxu0 %v505
      %v2750 = vpop.f32.mrf.mxu0
      %v2751 = vadd.f32 %v2737, %v2750
      %v2752 = vpop.f32.mrf.mxu0
      %v2753 = vadd.f32 %v2739, %v2752
      %2754 = vdwg.mxu0
      %v2755 = vpack.c.bf16 %v2751, %v2723
      %v2756 = vpack.c.bf16 %v2753, %v2725
      %2757 = vst [vmem:[#allocation2 + $0x70] sm:$0xff] %v2755
      %2758 = vst [vmem:[#allocation2 + $0x78] sm:$0xff] %v2756
      %s2759 = scalar_lea.vmem %s218, 16
      %v2760 = vld [vmem:[%s2759] ss:$8 sm:$0x3]
      %s2761 = scalar_lea.vmem %s218, 33
      %v2762 = vld [vmem:[%s2761] ss:$8 sm:$0x3]
      %s2763 = scalar_lea.vmem %s218, 50
      %v2764 = vld [vmem:[%s2763] ss:$8 sm:$0x3]
      %v2766 = vperm.slane %v2760, 0
      %v2767 = vperm.slane %v2760, 1
      %v2770 = vsub.f32 %v2766, %v236
      %v2771 = vsub.f32 %v2767, %v236
      %v2772 = vsub.f32 %v2766, %v237
      %v2773 = vsub.f32 %v2767, %v237
      %v2774 = vand.u32 2147483647, %v2770
      %v2775 = vand.u32 2147483647, %v2771
      %v2776 = vand.u32 2147483647, %v2772
      %v2777 = vand.u32 2147483647, %v2773
      %v2778 = vsub.f32 1.0, %v2774
      %v2779 = vsub.f32 1.0, %v2775
      %v2780 = vsub.f32 1.0, %v2776
      %v2781 = vsub.f32 1.0, %v2777
      %v2782 = vmax.f32 %v2778, 0.0
      %v2783 = vmax.f32 %v2779, 0.0
      %v2784 = vmax.f32 %v2780, 0.0
      %v2785 = vmax.f32 %v2781, 0.0
      %v2787 = vperm.slane %v2764, 0
      %v2788 = vperm.slane %v2764, 1
      %v2791 = vmul.f32 %v2782, %v2787
      %v2792 = vmul.f32 %v2783, %v2788
      %v2793 = vmul.f32 %v2784, %v2787
      %v2794 = vmul.f32 %v2785, %v2788
      %v2796 = vperm.slane %v2762, 0
      %v2797 = vperm.slane %v2762, 1
      %v2800 = vsub.f32 %v2796, %v236
      %v2801 = vsub.f32 %v2797, %v236
      %v2802 = vsub.f32 %v2796, %v237
      %v2803 = vsub.f32 %v2797, %v237
      %v2804 = vand.u32 2147483647, %v2800
      %v2805 = vand.u32 2147483647, %v2801
      %v2806 = vand.u32 2147483647, %v2802
      %v2807 = vand.u32 2147483647, %v2803
      %v2808 = vsub.f32 1.0, %v2804
      %v2809 = vsub.f32 1.0, %v2805
      %v2810 = vsub.f32 1.0, %v2806
      %v2811 = vsub.f32 1.0, %v2807
      %v2812 = vmax.f32 %v2808, 0.0
      %v2813 = vmax.f32 %v2809, 0.0
      %v2814 = vmax.f32 %v2810, 0.0
      %v2815 = vmax.f32 %v2811, 0.0
      %v2820 = vrot.slane %v2792, 7
      %v2821 = vrot.slane %v2794, 7
      %v2822 = vsel %vm300, %v2791, %v2820
      %v2823 = vsel %vm302, %v2791, %v2820
      %v2824 = vrot.slane %v2823, 1
      %v2825 = vsel %vm305, %v2791, %v2820
      %v2826 = vrot.slane %v2825, 2
      %v2827 = vsel %vm308, %v2791, %v2820
      %v2828 = vrot.slane %v2827, 3
      %v2829 = vsel %vm311, %v2791, %v2820
      %v2830 = vrot.slane %v2829, 4
      %v2831 = vsel %vm314, %v2791, %v2820
      %v2832 = vrot.slane %v2831, 5
      %v2833 = vsel %vm317, %v2791, %v2820
      %v2834 = vrot.slane %v2833, 6
      %v2835 = vsel %vm320, %v2820, %v2791
      %v2836 = vrot.slane %v2835, 7
      %v2837 = vsel %vm300, %v2793, %v2821
      %v2838 = vsel %vm302, %v2793, %v2821
      %v2839 = vrot.slane %v2838, 1
      %v2840 = vsel %vm305, %v2793, %v2821
      %v2841 = vrot.slane %v2840, 2
      %v2842 = vsel %vm308, %v2793, %v2821
      %v2843 = vrot.slane %v2842, 3
      %v2844 = vsel %vm311, %v2793, %v2821
      %v2845 = vrot.slane %v2844, 4
      %v2846 = vsel %vm314, %v2793, %v2821
      %v2847 = vrot.slane %v2846, 5
      %v2848 = vsel %vm317, %v2793, %v2821
      %v2849 = vrot.slane %v2848, 6
      %v2850 = vsel %vm320, %v2821, %v2793
      %v2851 = vrot.slane %v2850, 7
      %v2852 = vperm.slane %v2822, 0
      %v2853 = vperm.slane %v2822, 1
      %v2854 = vperm.slane %v2824, 0
      %v2855 = vperm.slane %v2824, 1
      %v2856 = vperm.slane %v2826, 0
      %v2857 = vperm.slane %v2826, 1
      %v2858 = vperm.slane %v2828, 0
      %v2859 = vperm.slane %v2828, 1
      %v2860 = vperm.slane %v2830, 0
      %v2861 = vperm.slane %v2830, 1
      %v2862 = vperm.slane %v2832, 0
      %v2863 = vperm.slane %v2832, 1
      %v2864 = vperm.slane %v2834, 0
      %v2865 = vperm.slane %v2834, 1
      %v2866 = vperm.slane %v2836, 0
      %v2867 = vperm.slane %v2836, 1
      %v2868 = vperm.slane %v2837, 0
      %v2869 = vperm.slane %v2837, 1
      %v2870 = vperm.slane %v2839, 0
      %v2871 = vperm.slane %v2839, 1
      %v2872 = vperm.slane %v2841, 0
      %v2873 = vperm.slane %v2841, 1
      %v2874 = vperm.slane %v2843, 0
      %v2875 = vperm.slane %v2843, 1
      %v2876 = vperm.slane %v2845, 0
      %v2877 = vperm.slane %v2845, 1
      %v2878 = vperm.slane %v2847, 0
      %v2879 = vperm.slane %v2847, 1
      %v2880 = vperm.slane %v2849, 0
      %v2881 = vperm.slane %v2849, 1
      %v2882 = vperm.slane %v2851, 0
      %v2883 = vperm.slane %v2851, 1
      %v2916 = vmul.f32 %v2852, %v2812
      %v2917 = vmul.f32 %v2853, %v2813
      %v2918 = vmul.f32 %v2852, %v2814
      %v2919 = vmul.f32 %v2853, %v2815
      %v2920 = vmul.f32 %v2854, %v2812
      %v2921 = vmul.f32 %v2855, %v2813
      %v2922 = vmul.f32 %v2854, %v2814
      %v2923 = vmul.f32 %v2855, %v2815
      %v2924 = vmul.f32 %v2856, %v2812
      %v2925 = vmul.f32 %v2857, %v2813
      %v2926 = vmul.f32 %v2856, %v2814
      %v2927 = vmul.f32 %v2857, %v2815
      %v2928 = vmul.f32 %v2858, %v2812
      %v2929 = vmul.f32 %v2859, %v2813
      %v2930 = vmul.f32 %v2858, %v2814
      %v2931 = vmul.f32 %v2859, %v2815
      %v2932 = vmul.f32 %v2860, %v2812
      %v2933 = vmul.f32 %v2861, %v2813
      %v2934 = vmul.f32 %v2860, %v2814
      %v2935 = vmul.f32 %v2861, %v2815
      %v2936 = vmul.f32 %v2862, %v2812
      %v2937 = vmul.f32 %v2863, %v2813
      %v2938 = vmul.f32 %v2862, %v2814
      %v2939 = vmul.f32 %v2863, %v2815
      %v2940 = vmul.f32 %v2864, %v2812
      %v2941 = vmul.f32 %v2865, %v2813
      %v2942 = vmul.f32 %v2864, %v2814
      %v2943 = vmul.f32 %v2865, %v2815
      %v2944 = vmul.f32 %v2866, %v2812
      %v2945 = vmul.f32 %v2867, %v2813
      %v2946 = vmul.f32 %v2866, %v2814
      %v2947 = vmul.f32 %v2867, %v2815
      %v2948 = vmul.f32 %v2868, %v2812
      %v2949 = vmul.f32 %v2869, %v2813
      %v2950 = vmul.f32 %v2868, %v2814
      %v2951 = vmul.f32 %v2869, %v2815
      %v2952 = vmul.f32 %v2870, %v2812
      %v2953 = vmul.f32 %v2871, %v2813
      %v2954 = vmul.f32 %v2870, %v2814
      %v2955 = vmul.f32 %v2871, %v2815
      %v2956 = vmul.f32 %v2872, %v2812
      %v2957 = vmul.f32 %v2873, %v2813
      %v2958 = vmul.f32 %v2872, %v2814
      %v2959 = vmul.f32 %v2873, %v2815
      %v2960 = vmul.f32 %v2874, %v2812
      %v2961 = vmul.f32 %v2875, %v2813
      %v2962 = vmul.f32 %v2874, %v2814
      %v2963 = vmul.f32 %v2875, %v2815
      %v2964 = vmul.f32 %v2876, %v2812
      %v2965 = vmul.f32 %v2877, %v2813
      %v2966 = vmul.f32 %v2876, %v2814
      %v2967 = vmul.f32 %v2877, %v2815
      %v2968 = vmul.f32 %v2878, %v2812
      %v2969 = vmul.f32 %v2879, %v2813
      %v2970 = vmul.f32 %v2878, %v2814
      %v2971 = vmul.f32 %v2879, %v2815
      %v2972 = vmul.f32 %v2880, %v2812
      %v2973 = vmul.f32 %v2881, %v2813
      %v2974 = vmul.f32 %v2880, %v2814
      %v2975 = vmul.f32 %v2881, %v2815
      %v2976 = vmul.f32 %v2882, %v2812
      %v2977 = vmul.f32 %v2883, %v2813
      %v2978 = vmul.f32 %v2882, %v2814
      %v2979 = vmul.f32 %v2883, %v2815
      %v2980 = vpack.c.bf16 %v2918, %v2916
      %v2981 = vpack.c.bf16 %v2919, %v2917
      %v2982 = vpack.c.bf16 %v2922, %v2920
      %v2983 = vpack.c.bf16 %v2923, %v2921
      %v2984 = vpack.c.bf16 %v2926, %v2924
      %v2985 = vpack.c.bf16 %v2927, %v2925
      %v2986 = vpack.c.bf16 %v2930, %v2928
      %v2987 = vpack.c.bf16 %v2931, %v2929
      %v2988 = vpack.c.bf16 %v2934, %v2932
      %v2989 = vpack.c.bf16 %v2935, %v2933
      %v2990 = vpack.c.bf16 %v2938, %v2936
      %v2991 = vpack.c.bf16 %v2939, %v2937
      %v2992 = vpack.c.bf16 %v2942, %v2940
      %v2993 = vpack.c.bf16 %v2943, %v2941
      %v2994 = vpack.c.bf16 %v2946, %v2944
      %v2995 = vpack.c.bf16 %v2947, %v2945
      %v2996 = vpack.c.bf16 %v2950, %v2948
      %v2997 = vpack.c.bf16 %v2951, %v2949
      %v2998 = vpack.c.bf16 %v2954, %v2952
      %v2999 = vpack.c.bf16 %v2955, %v2953
      %v3000 = vpack.c.bf16 %v2958, %v2956
      %v3001 = vpack.c.bf16 %v2959, %v2957
      %v3002 = vpack.c.bf16 %v2962, %v2960
      %v3003 = vpack.c.bf16 %v2963, %v2961
      %v3004 = vpack.c.bf16 %v2966, %v2964
      %v3005 = vpack.c.bf16 %v2967, %v2965
      %v3006 = vpack.c.bf16 %v2970, %v2968
      %v3007 = vpack.c.bf16 %v2971, %v2969
      %v3008 = vpack.c.bf16 %v2974, %v2972
      %v3009 = vpack.c.bf16 %v2975, %v2973
      %v3010 = vpack.c.bf16 %v2978, %v2976
      %v3011 = vpack.c.bf16 %v2979, %v2977
      %3012 = vmatpush.bf16.msra.mxu0 %v2994
      %3013 = vmatpush.bf16.msra.mxu0 %v2992
      %3014 = vmatpush.bf16.msra.mxu0 %v2990
      %3015 = vmatpush.bf16.msra.mxu0 %v2988
      %3016 = vmatpush.bf16.msra.mxu0 %v2986
      %3017 = vmatpush.bf16.msra.mxu0 %v2984
      %3018 = vmatpush.bf16.msra.mxu0 %v2982
      %3019 = vmatpush.bf16.msra.mxu0 %v2980
      %3020 = vmatmul.bf16.gmra.mxu0 %v504
      %v3021 = vpop.f32.mrf.mxu0
      %v3022 = vadd.f32 0.0, %v3021
      %v3023 = vpop.f32.mrf.mxu0
      %v3024 = vadd.f32 0.0, %v3023
      %3025 = vdwg.mxu0
      %3026 = vmatpush.bf16.msra.mxu0 %v3010
      %3027 = vmatpush.bf16.msra.mxu0 %v3008
      %3028 = vmatpush.bf16.msra.mxu0 %v3006
      %3029 = vmatpush.bf16.msra.mxu0 %v3004
      %3030 = vmatpush.bf16.msra.mxu0 %v3002
      %3031 = vmatpush.bf16.msra.mxu0 %v3000
      %3032 = vmatpush.bf16.msra.mxu0 %v2998
      %3033 = vmatpush.bf16.msra.mxu0 %v2996
      %3034 = vmatmul.bf16.gmra.mxu0 %v505
      %v3035 = vpop.f32.mrf.mxu0
      %v3036 = vadd.f32 %v3022, %v3035
      %v3037 = vpop.f32.mrf.mxu0
      %v3038 = vadd.f32 %v3024, %v3037
      %3039 = vdwg.mxu0
      %3040 = vmatpush.bf16.msra.mxu0 %v2995
      %3041 = vmatpush.bf16.msra.mxu0 %v2993
      %3042 = vmatpush.bf16.msra.mxu0 %v2991
      %3043 = vmatpush.bf16.msra.mxu0 %v2989
      %3044 = vmatpush.bf16.msra.mxu0 %v2987
      %3045 = vmatpush.bf16.msra.mxu0 %v2985
      %3046 = vmatpush.bf16.msra.mxu0 %v2983
      %3047 = vmatpush.bf16.msra.mxu0 %v2981
      %3048 = vmatmul.bf16.gmra.mxu0 %v504
      %v3049 = vpop.f32.mrf.mxu0
      %v3050 = vadd.f32 0.0, %v3049
      %v3051 = vpop.f32.mrf.mxu0
      %v3052 = vadd.f32 0.0, %v3051
      %3053 = vdwg.mxu0
      %3054 = vmatpush.bf16.msra.mxu0 %v3011
      %3055 = vmatpush.bf16.msra.mxu0 %v3009
      %3056 = vmatpush.bf16.msra.mxu0 %v3007
      %3057 = vmatpush.bf16.msra.mxu0 %v3005
      %3058 = vmatpush.bf16.msra.mxu0 %v3003
      %3059 = vmatpush.bf16.msra.mxu0 %v3001
      %3060 = vmatpush.bf16.msra.mxu0 %v2999
      %3061 = vmatpush.bf16.msra.mxu0 %v2997
      %3062 = vmatmul.bf16.gmra.mxu0 %v505
      %v3063 = vpop.f32.mrf.mxu0
      %v3064 = vadd.f32 %v3050, %v3063
      %v3065 = vpop.f32.mrf.mxu0
      %v3066 = vadd.f32 %v3052, %v3065
      %3067 = vdwg.mxu0
      %v3068 = vpack.c.bf16 %v3064, %v3036
      %v3069 = vpack.c.bf16 %v3066, %v3038
      %3070 = vst [vmem:[#allocation2 + $0x80] sm:$0xff] %v3068
      %3071 = vst [vmem:[#allocation2 + $0x88] sm:$0xff] %v3069
      %v3072 = vld [vmem:[%s2] sm:$0xff]
      %v3073 = vld [vmem:[#allocation2] sm:$0xff]
      %v3074 = vld [vmem:[#allocation2 + $0x8] sm:$0xff]
      %v3075 = vld [vmem:[#allocation2 + $0x10] sm:$0xff]
      %v3076 = vld [vmem:[#allocation2 + $0x18] sm:$0xff]
      %v3077 = vld [vmem:[#allocation2 + $0x20] sm:$0xff]
      %v3078 = vld [vmem:[#allocation2 + $0x28] sm:$0xff]
      %v3079 = vld [vmem:[#allocation2 + $0x30] sm:$0xff]
      %v3080 = vld [vmem:[#allocation2 + $0x38] sm:$0xff]
      %v3081 = vld [vmem:[#allocation2 + $0x40] sm:$0xff]
      %v3082 = vld [vmem:[#allocation2 + $0x48] sm:$0xff]
      %v3083 = vld [vmem:[#allocation2 + $0x50] sm:$0xff]
      %v3084 = vld [vmem:[#allocation2 + $0x58] sm:$0xff]
      %v3085 = vld [vmem:[#allocation2 + $0x60] sm:$0xff]
      %v3086 = vld [vmem:[#allocation2 + $0x68] sm:$0xff]
      %v3087 = vld [vmem:[#allocation2 + $0x70] sm:$0xff]
      %v3088 = vld [vmem:[#allocation2 + $0x78] sm:$0xff]
      %v3089 = vld [vmem:[#allocation2 + $0x80] sm:$0xff]
      %v3090 = vld [vmem:[#allocation2 + $0x88] sm:$0xff]
      %v3092 = vunpack.c.l.b16 %v3072
      %v3093 = vunpack.c.h.b16 %v3072
      %v3094 = vpack.c.b16 %v3092, %v3092
      %v3095 = vpack.c.b16 %v3093, %v3093
      %v3115 = vunpack.c.l.b16 %v3073
      %v3116 = vunpack.c.h.b16 %v3073
      %v3117 = vunpack.c.l.b16 %v3074
      %v3118 = vunpack.c.h.b16 %v3074
      %v3119 = vunpack.c.l.b16 %v3075
      %v3120 = vunpack.c.h.b16 %v3075
      %v3121 = vunpack.c.l.b16 %v3076
      %v3122 = vunpack.c.h.b16 %v3076
      %v3123 = vunpack.c.l.b16 %v3077
      %v3124 = vunpack.c.h.b16 %v3077
      %v3125 = vunpack.c.l.b16 %v3078
      %v3126 = vunpack.c.h.b16 %v3078
      %v3127 = vunpack.c.l.b16 %v3079
      %v3128 = vunpack.c.h.b16 %v3079
      %v3129 = vunpack.c.l.b16 %v3080
      %v3130 = vunpack.c.h.b16 %v3080
      %v3131 = vunpack.c.l.b16 %v3081
      %v3132 = vunpack.c.h.b16 %v3081
      %v3133 = vunpack.c.l.b16 %v3082
      %v3134 = vunpack.c.h.b16 %v3082
      %v3135 = vunpack.c.l.b16 %v3083
      %v3136 = vunpack.c.h.b16 %v3083
      %v3137 = vunpack.c.l.b16 %v3084
      %v3138 = vunpack.c.h.b16 %v3084
      %v3139 = vunpack.c.l.b16 %v3085
      %v3140 = vunpack.c.h.b16 %v3085
      %v3141 = vunpack.c.l.b16 %v3086
      %v3142 = vunpack.c.h.b16 %v3086
      %v3143 = vunpack.c.l.b16 %v3087
      %v3144 = vunpack.c.h.b16 %v3087
      %v3145 = vunpack.c.l.b16 %v3088
      %v3146 = vunpack.c.h.b16 %v3088
      %v3147 = vunpack.c.l.b16 %v3089
      %v3148 = vunpack.c.h.b16 %v3089
      %v3149 = vunpack.c.l.b16 %v3090
      %v3150 = vunpack.c.h.b16 %v3090
      %v3151 = vpack.c.b16 %v3117, %v3115
      %v3152 = vpack.c.b16 %v3118, %v3116
      %v3153 = vpack.c.b16 %v3121, %v3119
      %v3154 = vpack.c.b16 %v3122, %v3120
      %v3155 = vpack.c.b16 %v3125, %v3123
      %v3156 = vpack.c.b16 %v3126, %v3124
      %v3157 = vpack.c.b16 %v3129, %v3127
      %v3158 = vpack.c.b16 %v3130, %v3128
      %v3159 = vpack.c.b16 %v3133, %v3131
      %v3160 = vpack.c.b16 %v3134, %v3132
      %v3161 = vpack.c.b16 %v3137, %v3135
      %v3162 = vpack.c.b16 %v3138, %v3136
      %v3163 = vpack.c.b16 %v3141, %v3139
      %v3164 = vpack.c.b16 %v3142, %v3140
      %v3165 = vpack.c.b16 %v3145, %v3143
      %v3166 = vpack.c.b16 %v3146, %v3144
      %v3167 = vpack.c.b16 %v3149, %v3147
      %v3168 = vpack.c.b16 %v3150, %v3148
      %vm3187 = vcmask 130048
      %v3189 = vsel %vm3187, %v3095, 0
      %3191 = vmatpush.bf16.msra.mxu0 %v3165
      %3192 = vmatpush.bf16.msra.mxu0 %v3163
      %3193 = vmatpush.bf16.msra.mxu0 %v3161
      %3194 = vmatpush.bf16.msra.mxu0 %v3159
      %3195 = vmatpush.bf16.msra.mxu0 %v3157
      %3196 = vmatpush.bf16.msra.mxu0 %v3155
      %3197 = vmatpush.bf16.msra.mxu0 %v3153
      %3198 = vmatpush.bf16.msra.mxu0 %v3151
      %3199 = vmatmul.bf16.gmra.mxu0 %v3094
      %v3200 = vpop.f32.mrf.mxu0
      %v3201 = vadd.f32 0.0, %v3200
      %v3202 = vpop.f32.mrf.mxu0
      %3203 = vdwg.mxu0
      %3204 = vmatpush.bf16.msra.mxu0 0
      %3205 = vmatpush.bf16.msra.mxu0 0
      %3206 = vmatpush.bf16.msra.mxu0 0
      %3207 = vmatpush.bf16.msra.mxu0 0
      %3208 = vmatpush.bf16.msra.mxu0 0
      %3209 = vmatpush.bf16.msra.mxu0 0
      %3210 = vmatpush.bf16.msra.mxu0 0
      %3211 = vmatpush.bf16.msra.mxu0 %v3167
      %3212 = vmatmul.bf16.gmra.mxu0 %v3189
      %v3213 = vpop.f32.mrf.mxu0
      %v3214 = vadd.f32 %v3201, %v3213
      %v3215 = vpop.f32.mrf.mxu0
      %3216 = vdwg.mxu0
      %3217 = vmatpush.bf16.msra.mxu0 %v3166
      %3218 = vmatpush.bf16.msra.mxu0 %v3164
      %3219 = vmatpush.bf16.msra.mxu0 %v3162
      %3220 = vmatpush.bf16.msra.mxu0 %v3160
      %3221 = vmatpush.bf16.msra.mxu0 %v3158
      %3222 = vmatpush.bf16.msra.mxu0 %v3156
      %3223 = vmatpush.bf16.msra.mxu0 %v3154
      %3224 = vmatpush.bf16.msra.mxu0 %v3152
      %3225 = vmatmul.bf16.gmra.mxu0 %v3094
      %v3226 = vpop.f32.mrf.mxu0
      %v3227 = vadd.f32 0.0, %v3226
      %v3228 = vpop.f32.mrf.mxu0
      %3229 = vdwg.mxu0
      %3230 = vmatpush.bf16.msra.mxu0 0
      %3231 = vmatpush.bf16.msra.mxu0 0
      %3232 = vmatpush.bf16.msra.mxu0 0
      %3233 = vmatpush.bf16.msra.mxu0 0
      %3234 = vmatpush.bf16.msra.mxu0 0
      %3235 = vmatpush.bf16.msra.mxu0 0
      %3236 = vmatpush.bf16.msra.mxu0 0
      %3237 = vmatpush.bf16.msra.mxu0 %v3168
      %3238 = vmatmul.bf16.gmra.mxu0 %v3189
      %v3239 = vpop.f32.mrf.mxu0
      %v3240 = vadd.f32 %v3227, %v3239
      %v3241 = vpop.f32.mrf.mxu0
      %3242 = vdwg.mxu0
      %3243 = vst [vmem:[%s228] sm:$0xff] %v3214
      %3244 = vst [vmem:[%s228 + $0x8] sm:$0xff] %v3240
      %s3245 = smul.u32 2, %s19
      %p3246 = scmp.lt.s32.totalorder %s18, 1
      %s3247 = scalar_select %p3246, %s18, 1
      %p3248 = scmp.lt.s32.totalorder %s3245, 1
      %s3249 = scalar_select %p3248, %s3245, 1
      %s3250 = smul.addr %s3247, 2
      %s3251 = sadd.s32 %s3249, %s3250
      %s3252 = smul.addr %s3251, 8
      %s3253 = scalar_lea.vmem %s3, %s3252
      // Predicated region
      $region33: #{modulated_deform_conv_pack_forward.1} parent=31 // pred_check
        %p3254 = pneg %p121
      $region34: #{modulated_deform_conv_pack_forward.1} parent=31 // pred_check_branch
        %3256 = sbr.rel (%p3254) target = $region36
      $region35: #{modulated_deform_conv_pack_forward.1} parent=31 // pred_region
        %s3257 = smul.u32 2, %s19
      $region36: #{modulated_deform_conv_pack_forward.1} parent=31 // pred_fallthru
        _
    $region32: #{modulated_deform_conv_pack_forward.1} parent=5 // pred_fallthru
      _
    %p3258 = scmp.le.s32.totalorder 2, %s9
    // Predicated region
    $region37: #{modulated_deform_conv_pack_forward.1} parent=5 // pred_check
      %p3259 = pneg %p3258
    $region38: #{modulated_deform_conv_pack_forward.1} parent=5 // pred_check_branch
      %3261 = sbr.rel (%p3259) target = $region40
    $region39: #{modulated_deform_conv_pack_forward.1} parent=5 // pred_region
      %s3262 = ssub.s32 %s9, 2
      // Predicated region
      $region41: #{modulated_deform_conv_pack_forward.1} parent=39 // pred_check
        %p3263 = pneg %p127
      $region42: #{modulated_deform_conv_pack_forward.1} parent=39 // pred_check_branch
        %3265 = sbr.rel (%p3263) target = $region44
      $region43: #{modulated_deform_conv_pack_forward.1} parent=39 // pred_region
        %s3266 = smul.u32 2, %s21
        %p3267 = scmp.lt.s32.totalorder %s20, 1
        %s3268 = scalar_select %p3267, %s20, 1
        %p3269 = scmp.lt.s32.totalorder %s3266, 1
        %s3270 = scalar_select %p3269, %s3266, 1
        %s3271 = smul.addr %s3268, 2
        %s3272 = sadd.s32 %s3270, %s3271
        %s3273 = smul.addr %s3272, 8
        %s3274 = scalar_lea.vmem %s3, %s3273
      $region44: #{modulated_deform_conv_pack_forward.1} parent=39 // pred_fallthru
        _
    $region40: #{modulated_deform_conv_pack_forward.1} parent=5 // pred_fallthru
      _
  $region6: #{modulated_deform_conv_pack_forward.1} parent=0 // loop_footer
    %s13 = sadd.s32 1, %s9
  $region7: #{modulated_deform_conv_pack_forward.1} parent=0 // loop_footer_branch
    %8 = sbr.rel target = $region3
  $region8: #{modulated_deform_conv_pack_forward.1} parent=0 // loop_exit
    _

</llo_original>
